<compile_context>
chip_gen: v7x
topology: tpu7x:2x2x1
jax: 0.10.0
libtpu: 0.0.40
codegen_flags: <defaults>
</compile_context>

<pallas_src>
import math

import jax
import jax.numpy as jnp
from jax import lax
from jax.experimental import pallas as pl
from jax.experimental.pallas import tpu as pltpu

# ----- synthetic tiny-BERT config (AutoConfig/AutoModel replaced in-script) -----
VOCAB = 128
HIDDEN = 32
NUM_LAYERS = 2
NUM_HEADS = 4
HEAD_DIM = HIDDEN // NUM_HEADS
INTERMEDIATE = 64
MAX_POS = 16
LN_EPS = 1e-12
NEG_INF = -1e9


# ----------------------------- in-kernel helpers -----------------------------
def _layer_norm(x, g, b):
    mu = jnp.mean(x, axis=-1, keepdims=True)
    var = jnp.mean(jnp.square(x - mu), axis=-1, keepdims=True)
    return (x - mu) * lax.rsqrt(var + LN_EPS) * g + b


def _gelu(x):
    # TODO(synk): HF BERT default is the exact erf GELU; tanh approximation used
    # here (matches gelu_new / keeps the transcendental on the EUP).
    c = math.sqrt(2.0 / math.pi)
    return 0.5 * x * (1.0 + jnp.tanh(c * (x + 0.044715 * x * x * x)))


# ----------------------------- fused forward kernel ---------------------------
def fused_bert_kernel(
        emb_ref, maskb_ref, embg_ref, embb_ref,
        wqh_ref, bqh_ref, wkh_ref, bkh_ref, wvh_ref, bvh_ref,
        woh_ref, bo_ref, ln1g_ref, ln1b_ref,
        w1_ref, b1_ref, w2_ref, b2_ref, ln2g_ref, ln2b_ref,
        poolw_ref, poolb_ref,
        pooled_ref):
    B, S, H = emb_ref.shape
    T = B * S

    # embeddings LayerNorm (tokens flattened so hidden stays on the lane axis)
    x = emb_ref[...].astype(jnp.float32).reshape(T, H)
    x = _layer_norm(x, embg_ref[...], embb_ref[...])

    mask_bias = maskb_ref[...]                                   # [B, 1, S]
    scale = 1.0 / math.sqrt(HEAD_DIM)

    for l in range(NUM_LAYERS):                                  # unrolled (L=2)
        xb = x.astype(jnp.bfloat16)
        attn = jnp.zeros((T, H), jnp.float32)

        # per-head attention with pre-split weights: each contraction is the
        # exact per-head matmul (no masked full-width FLOP inflation).
        for h in range(NUM_HEADS):
            idx = l * NUM_HEADS + h
            qh = (jnp.dot(xb, wqh_ref[idx], preferred_element_type=jnp.float32)
                  + bqh_ref[idx]) * scale                        # scale folded into q
            kh = jnp.dot(xb, wkh_ref[idx], preferred_element_type=jnp.float32) + bkh_ref[idx]
            vh = jnp.dot(xb, wvh_ref[idx], preferred_element_type=jnp.float32) + bvh_ref[idx]

            qh3 = qh.reshape(B, S, HEAD_DIM).astype(jnp.bfloat16)
            kh3 = kh.reshape(B, S, HEAD_DIM).astype(jnp.bfloat16)
            vh3 = vh.reshape(B, S, HEAD_DIM).astype(jnp.bfloat16)

            s = jnp.einsum('bqd,bkd->bqk', qh3, kh3,
                           preferred_element_type=jnp.float32) + mask_bias
            s = s - jnp.max(s, axis=-1, keepdims=True)
            p = jnp.exp(s)
            p = p * pl.reciprocal(jnp.sum(p, axis=-1, keepdims=True), approx=True)

            ctx_h = jnp.einsum('bqk,bkd->bqd', p.astype(jnp.bfloat16), vh3,
                               preferred_element_type=jnp.float32)
            # per-head output projection (row-block of W_O) sums to concat@W_O
            attn = attn + jnp.dot(ctx_h.reshape(T, HEAD_DIM).astype(jnp.bfloat16),
                                  woh_ref[idx], preferred_element_type=jnp.float32)

        attn = attn + bo_ref[l]
        x1 = _layer_norm(x + attn, ln1g_ref[l], ln1b_ref[l])

        x1b = x1.astype(jnp.bfloat16)
        h1 = _gelu(jnp.dot(x1b, w1_ref[l], preferred_element_type=jnp.float32) + b1_ref[l])
        h2 = jnp.dot(h1.astype(jnp.bfloat16), w2_ref[l],
                     preferred_element_type=jnp.float32) + b2_ref[l]
        x = _layer_norm(x1 + h2, ln2g_ref[l], ln2b_ref[l])

    # fused pooler: CLS row per batch item, dense + tanh, single [B, H] store
    cls = x.reshape(B, S, H)[:, 0, :]                            # [B, H]
    pooled = jnp.tanh(jnp.dot(cls.astype(jnp.bfloat16), poolw_ref[...],
                              preferred_element_type=jnp.float32) + poolb_ref[...])
    pooled_ref[...] = pooled.astype(pooled_ref.dtype)


# ------------------------------ parameter init --------------------------------
def init_params(key):
    def nrm(k, shape):
        return jax.random.normal(k, shape, jnp.float32) * 0.02

    keys = jax.random.split(key, 8)
    params = {
        'word_emb': nrm(keys[0], (VOCAB, HIDDEN)),
        'pos_emb': nrm(keys[1], (MAX_POS, HIDDEN)),
        'type_emb': nrm(keys[2], (2, HIDDEN)),
        'emb_ln_g': jnp.ones((1, HIDDEN), jnp.float32),
        'emb_ln_b': jnp.zeros((1, HIDDEN), jnp.float32),
        'pool_w': nrm(keys[3], (HIDDEN, HIDDEN)),
        'pool_b': jnp.zeros((1, HIDDEN), jnp.float32),
    }
    layers = []
    lkey = keys[4]
    for _ in range(NUM_LAYERS):
        lkey, k0, k1, k2, k3, k4, k5 = jax.random.split(lkey, 7)
        layers.append(dict(
            wq=nrm(k0, (HIDDEN, HIDDEN)), bq=jnp.zeros((1, HIDDEN), jnp.float32),
            wk=nrm(k1, (HIDDEN, HIDDEN)), bk=jnp.zeros((1, HIDDEN), jnp.float32),
            wv=nrm(k2, (HIDDEN, HIDDEN)), bv=jnp.zeros((1, HIDDEN), jnp.float32),
            wo=nrm(k3, (HIDDEN, HIDDEN)), bo=jnp.zeros((1, HIDDEN), jnp.float32),
            ln1g=jnp.ones((1, HIDDEN), jnp.float32),
            ln1b=jnp.zeros((1, HIDDEN), jnp.float32),
            w1=nrm(k4, (HIDDEN, INTERMEDIATE)),
            b1=jnp.zeros((1, INTERMEDIATE), jnp.float32),
            w2=nrm(k5, (INTERMEDIATE, HIDDEN)),
            b2=jnp.zeros((1, HIDDEN), jnp.float32),
            ln2g=jnp.ones((1, HIDDEN), jnp.float32),
            ln2b=jnp.zeros((1, HIDDEN), jnp.float32),
        ))
    params['layers'] = layers
    return params


# -------------------------- weight prep (wrapper glue) -------------------------
def _prep_weights(params):
    L, H, NH, HD = NUM_LAYERS, HIDDEN, NUM_HEADS, HEAD_DIM
    layers = params['layers']

    def stack(name):
        return jnp.stack([lp[name] for lp in layers])            # [L, ...]

    def split_cols(w):                                           # [L,H,H] -> [L*NH,H,HD]
        return w.reshape(L, H, NH, HD).transpose(0, 2, 1, 3).reshape(L * NH, H, HD)

    def split_bias(b):                                           # [L,1,H] -> [L*NH,1,HD]
        return b.reshape(L, 1, NH, HD).transpose(0, 2, 1, 3).reshape(L * NH, 1, HD)

    wq, wk, wv, wo = (stack(n) for n in ('wq', 'wk', 'wv', 'wo'))
    return dict(
        wqh=split_cols(wq).astype(jnp.bfloat16),
        wkh=split_cols(wk).astype(jnp.bfloat16),
        wvh=split_cols(wv).astype(jnp.bfloat16),
        woh=wo.reshape(L, NH, HD, H).reshape(L * NH, HD, H).astype(jnp.bfloat16),
        bqh=split_bias(stack('bq')),
        bkh=split_bias(stack('bk')),
        bvh=split_bias(stack('bv')),
        bo=stack('bo'),
        ln1g=stack('ln1g'), ln1b=stack('ln1b'),
        w1=stack('w1').astype(jnp.bfloat16), b1=stack('b1'),
        w2=stack('w2').astype(jnp.bfloat16), b2=stack('b2'),
        ln2g=stack('ln2g'), ln2b=stack('ln2b'),
        pool_w=params['pool_w'].astype(jnp.bfloat16), pool_b=params['pool_b'],
        emb_ln_g=params['emb_ln_g'], emb_ln_b=params['emb_ln_b'],
    )


# --------------------------------- forward ------------------------------------
def bert_forward(params, input_ids, attention_mask,
                 aggregator_names=('bert_pooler',)):
    B, S = input_ids.shape
    H = HIDDEN
    w = _prep_weights(params)

    # embeddings (gather is JAX glue; everything downstream is inside the kernel)
    emb = (jnp.take(params['word_emb'], input_ids, axis=0)
           + params['pos_emb'][None, :S, :]
           + params['type_emb'][0][None, None, :])
    mask_bias = ((1.0 - attention_mask.astype(jnp.float32)) * NEG_INF).reshape(B, 1, S)

    inputs = (emb, mask_bias, w['emb_ln_g'], w['emb_ln_b'],
              w['wqh'], w['bqh'], w['wkh'], w['bkh'], w['wvh'], w['bvh'],
              w['woh'], w['bo'], w['ln1g'], w['ln1b'],
              w['w1'], w['b1'], w['w2'], w['b2'], w['ln2g'], w['ln2b'],
              w['pool_w'], w['pool_b'])

    def full_spec(a):
        nd = a.ndim
        return pl.BlockSpec(a.shape, lambda i, _nd=nd: (0,) * _nd)

    # Single pallas_call, single grid step: whole batch in one block, weights
    # and activations resident in VMEM for the entire forward pass.
    bert_pooled_output = pl.pallas_call(
        fused_bert_kernel,
        out_shape=jax.ShapeDtypeStruct((B, H), jnp.float32),
        grid=(1,),
        in_specs=[full_spec(a) for a in inputs],
        out_specs=pl.BlockSpec((B, H), lambda i: (0, 0)),
        compiler_params=pltpu.CompilerParams(dimension_semantics=("arbitrary",)),
    )(*inputs)

    list_pooled_outputs = []
    if 'bert_pooler' in aggregator_names:
        list_pooled_outputs.append(bert_pooled_output)
    # TODO(synk): AggregatorLayer is not defined in the reference source; only
    # the 'bert_pooler' aggregator is implemented.
    pooled_outputs = sum(list_pooled_outputs)
    return pooled_outputs


if __name__ == "__main__":
    key = jax.random.PRNGKey(0)
    pkey, ikey = jax.random.split(key)
    params = init_params(pkey)

    B, S = 2, 8
    input_ids = jax.random.randint(ikey, (B, S), 0, VOCAB, dtype=jnp.int32)
    attention_mask = jnp.array([[1] * S, [1] * 5 + [0] * 3], dtype=jnp.int32)

    out = bert_forward(params, input_ids, attention_mask,
                       aggregator_names=('bert_pooler',))
    out = jax.block_until_ready(out)
    assert out.shape == (B, HIDDEN) and out.dtype == jnp.float32
    assert bool(jnp.all(jnp.isfinite(out)))
    print("KERNEL_OK")
</pallas_src>

<mosaic_0001>
module attributes {stable_mosaic.version = 11 : i64} {
  func.func @fused_bert_kernel(%arg0: i32, %arg1: memref<2x8x32xf32, #tpu.memory_space<vmem>>, %arg2: memref<2x1x8xf32, #tpu.memory_space<vmem>>, %arg3: memref<1x32xf32, #tpu.memory_space<vmem>>, %arg4: memref<1x32xf32, #tpu.memory_space<vmem>>, %arg5: memref<8x32x8xbf16, #tpu.memory_space<vmem>>, %arg6: memref<8x1x8xf32, #tpu.memory_space<vmem>>, %arg7: memref<8x32x8xbf16, #tpu.memory_space<vmem>>, %arg8: memref<8x1x8xf32, #tpu.memory_space<vmem>>, %arg9: memref<8x32x8xbf16, #tpu.memory_space<vmem>>, %arg10: memref<8x1x8xf32, #tpu.memory_space<vmem>>, %arg11: memref<8x8x32xbf16, #tpu.memory_space<vmem>>, %arg12: memref<2x1x32xf32, #tpu.memory_space<vmem>>, %arg13: memref<2x1x32xf32, #tpu.memory_space<vmem>>, %arg14: memref<2x1x32xf32, #tpu.memory_space<vmem>>, %arg15: memref<2x32x64xbf16, #tpu.memory_space<vmem>>, %arg16: memref<2x1x64xf32, #tpu.memory_space<vmem>>, %arg17: memref<2x64x32xbf16, #tpu.memory_space<vmem>>, %arg18: memref<2x1x32xf32, #tpu.memory_space<vmem>>, %arg19: memref<2x1x32xf32, #tpu.memory_space<vmem>>, %arg20: memref<2x1x32xf32, #tpu.memory_space<vmem>>, %arg21: memref<32x32xbf16, #tpu.memory_space<vmem>>, %arg22: memref<1x32xf32, #tpu.memory_space<vmem>>, %arg23: memref<2x32xf32, #tpu.memory_space<vmem>>) attributes {dimension_semantics = [#tpu.dimension_semantics<arbitrary>], iteration_bounds = array<i64: 1>, scalar_prefetch = 0 : i64, scratch_operands = 0 : i64, tpu.core_type = #tpu.core_type<tc>, window_params = [{pipeline_mode = #tpu.pipeline_mode<synchronous>, transform_indices = @transform_0, window_bounds = array<i64: 2, 8, 32>}, {pipeline_mode = #tpu.pipeline_mode<synchronous>, transform_indices = @transform_1, window_bounds = array<i64: 2, 1, 8>}, {pipeline_mode = #tpu.pipeline_mode<synchronous>, transform_indices = @transform_2, window_bounds = array<i64: 1, 32>}, {pipeline_mode = #tpu.pipeline_mode<synchronous>, transform_indices = @transform_3, window_bounds = array<i64: 1, 32>}, {pipeline_mode = #tpu.pipeline_mode<synchronous>, transform_indices = @transform_4, window_bounds = array<i64: 8, 32, 8>}, {pipeline_mode = #tpu.pipeline_mode<synchronous>, transform_indices = @transform_5, window_bounds = array<i64: 8, 1, 8>}, {pipeline_mode = #tpu.pipeline_mode<synchronous>, transform_indices = @transform_6, window_bounds = array<i64: 8, 32, 8>}, {pipeline_mode = #tpu.pipeline_mode<synchronous>, transform_indices = @transform_7, window_bounds = array<i64: 8, 1, 8>}, {pipeline_mode = #tpu.pipeline_mode<synchronous>, transform_indices = @transform_8, window_bounds = array<i64: 8, 32, 8>}, {pipeline_mode = #tpu.pipeline_mode<synchronous>, transform_indices = @transform_9, window_bounds = array<i64: 8, 1, 8>}, {pipeline_mode = #tpu.pipeline_mode<synchronous>, transform_indices = @transform_10, window_bounds = array<i64: 8, 8, 32>}, {pipeline_mode = #tpu.pipeline_mode<synchronous>, transform_indices = @transform_11, window_bounds = array<i64: 2, 1, 32>}, {pipeline_mode = #tpu.pipeline_mode<synchronous>, transform_indices = @transform_12, window_bounds = array<i64: 2, 1, 32>}, {pipeline_mode = #tpu.pipeline_mode<synchronous>, transform_indices = @transform_13, window_bounds = array<i64: 2, 1, 32>}, {pipeline_mode = #tpu.pipeline_mode<synchronous>, transform_indices = @transform_14, window_bounds = array<i64: 2, 32, 64>}, {pipeline_mode = #tpu.pipeline_mode<synchronous>, transform_indices = @transform_15, window_bounds = array<i64: 2, 1, 64>}, {pipeline_mode = #tpu.pipeline_mode<synchronous>, transform_indices = @transform_16, window_bounds = array<i64: 2, 64, 32>}, {pipeline_mode = #tpu.pipeline_mode<synchronous>, transform_indices = @transform_17, window_bounds = array<i64: 2, 1, 32>}, {pipeline_mode = #tpu.pipeline_mode<synchronous>, transform_indices = @transform_18, window_bounds = array<i64: 2, 1, 32>}, {pipeline_mode = #tpu.pipeline_mode<synchronous>, transform_indices = @transform_19, window_bounds = array<i64: 2, 1, 32>}, {pipeline_mode = #tpu.pipeline_mode<synchronous>, transform_indices = @transform_20, window_bounds = array<i64: 32, 32>}, {pipeline_mode = #tpu.pipeline_mode<synchronous>, transform_indices = @transform_21, window_bounds = array<i64: 1, 32>}, {pipeline_mode = #tpu.pipeline_mode<synchronous>, transform_indices = @transform_22, window_bounds = array<i64: 2, 32>}]} {
    %c0 = arith.constant 0 : index
    %c0_0 = arith.constant 0 : index
    %c0_1 = arith.constant 0 : index
    %0 = vector.load %arg1[%c0, %c0_0, %c0_1] : memref<2x8x32xf32, #tpu.memory_space<vmem>>, vector<2x8x32xf32>
    %1 = vector.shape_cast %0 : vector<2x8x32xf32> to vector<16x32xf32>
    %c0_2 = arith.constant 0 : index
    %c0_3 = arith.constant 0 : index
    %2 = vector.load %arg3[%c0_2, %c0_3] : memref<1x32xf32, #tpu.memory_space<vmem>>, vector<1x32xf32>
    %c0_4 = arith.constant 0 : index
    %c0_5 = arith.constant 0 : index
    %3 = vector.load %arg4[%c0_4, %c0_5] : memref<1x32xf32, #tpu.memory_space<vmem>>, vector<1x32xf32>
    %cst = arith.constant dense<0.000000e+00> : vector<16xf32>
    %4 = vector.multi_reduction <add>, %1, %cst [1] : vector<16x32xf32> to vector<16xf32>
    %5 = vector.shape_cast %4 : vector<16xf32> to vector<16x1xf32>
    %cst_6 = arith.constant 3.200000e+01 : f32
    %6 = vector.broadcast %cst_6 : f32 to vector<16x1xf32>
    %7 = arith.divf %5, %6 : vector<16x1xf32>
    %8 = vector.broadcast %7 : vector<16x1xf32> to vector<16x32xf32>
    %9 = arith.subf %1, %8 : vector<16x32xf32>
    %10 = arith.mulf %9, %9 : vector<16x32xf32>
    %cst_7 = arith.constant dense<0.000000e+00> : vector<16xf32>
    %11 = vector.multi_reduction <add>, %10, %cst_7 [1] : vector<16x32xf32> to vector<16xf32>
    %12 = vector.shape_cast %11 : vector<16xf32> to vector<16x1xf32>
    %cst_8 = arith.constant 3.200000e+01 : f32
    %13 = vector.broadcast %cst_8 : f32 to vector<16x1xf32>
    %14 = arith.divf %12, %13 : vector<16x1xf32>
    %15 = vector.broadcast %7 : vector<16x1xf32> to vector<16x32xf32>
    %16 = arith.subf %1, %15 : vector<16x32xf32>
    %cst_9 = arith.constant 9.99999996E-13 : f32
    %17 = vector.broadcast %cst_9 : f32 to vector<16x1xf32>
    %18 = arith.addf %14, %17 : vector<16x1xf32>
    %19 = math.rsqrt %18 : vector<16x1xf32>
    %20 = vector.broadcast %19 : vector<16x1xf32> to vector<16x32xf32>
    %21 = arith.mulf %16, %20 : vector<16x32xf32>
    %22 = vector.broadcast %2 : vector<1x32xf32> to vector<16x32xf32>
    %23 = arith.mulf %21, %22 : vector<16x32xf32>
    %24 = vector.broadcast %3 : vector<1x32xf32> to vector<16x32xf32>
    %25 = arith.addf %23, %24 : vector<16x32xf32>
    %c0_10 = arith.constant 0 : index
    %c0_11 = arith.constant 0 : index
    %c0_12 = arith.constant 0 : index
    %26 = vector.load %arg2[%c0_10, %c0_11, %c0_12] : memref<2x1x8xf32, #tpu.memory_space<vmem>>, vector<2x1x8xf32>
    %27 = arith.truncf %25 : vector<16x32xf32> to vector<16x32xbf16>
    %cst_13 = arith.constant 0.000000e+00 : f32
    %28 = vector.broadcast %cst_13 : f32 to vector<16x32xf32>
    %c0_14 = arith.constant 0 : index
    %c0_15 = arith.constant 0 : index
    %c0_16 = arith.constant 0 : index
    %29 = vector.load %arg5[%c0_14, %c0_15, %c0_16] : memref<8x32x8xbf16, #tpu.memory_space<vmem>>, vector<1x32x8xbf16>
    %30 = vector.shape_cast %29 : vector<1x32x8xbf16> to vector<32x8xbf16>
    %cst_17 = arith.constant dense<0.000000e+00> : vector<16x8xf32>
    %31 = tpu.matmul %27, %30, %cst_17 {dimension_numbers = #tpu.dot_dimension_numbers<[1], [0], [0], [1], [0, 0, 1, 1], [], []>} : vector<16x32xbf16>, vector<32x8xbf16>, vector<16x8xf32> -> vector<16x8xf32>
    %c0_18 = arith.constant 0 : index
    %c0_19 = arith.constant 0 : index
    %c0_20 = arith.constant 0 : index
    %32 = vector.load %arg6[%c0_18, %c0_19, %c0_20] : memref<8x1x8xf32, #tpu.memory_space<vmem>>, vector<1x1x8xf32>
    %33 = vector.shape_cast %32 : vector<1x1x8xf32> to vector<1x8xf32>
    %34 = vector.broadcast %33 : vector<1x8xf32> to vector<16x8xf32>
    %35 = arith.addf %31, %34 : vector<16x8xf32>
    %cst_21 = arith.constant 0.353553385 : f32
    %36 = vector.broadcast %cst_21 : f32 to vector<16x8xf32>
    %37 = arith.mulf %35, %36 : vector<16x8xf32>
    %c0_22 = arith.constant 0 : index
    %c0_23 = arith.constant 0 : index
    %c0_24 = arith.constant 0 : index
    %38 = vector.load %arg7[%c0_22, %c0_23, %c0_24] : memref<8x32x8xbf16, #tpu.memory_space<vmem>>, vector<1x32x8xbf16>
    %39 = vector.shape_cast %38 : vector<1x32x8xbf16> to vector<32x8xbf16>
    %cst_25 = arith.constant dense<0.000000e+00> : vector<16x8xf32>
    %40 = tpu.matmul %27, %39, %cst_25 {dimension_numbers = #tpu.dot_dimension_numbers<[1], [0], [0], [1], [0, 0, 1, 1], [], []>} : vector<16x32xbf16>, vector<32x8xbf16>, vector<16x8xf32> -> vector<16x8xf32>
    %c0_26 = arith.constant 0 : index
    %c0_27 = arith.constant 0 : index
    %c0_28 = arith.constant 0 : index
    %41 = vector.load %arg8[%c0_26, %c0_27, %c0_28] : memref<8x1x8xf32, #tpu.memory_space<vmem>>, vector<1x1x8xf32>
    %42 = vector.shape_cast %41 : vector<1x1x8xf32> to vector<1x8xf32>
    %43 = vector.broadcast %42 : vector<1x8xf32> to vector<16x8xf32>
    %44 = arith.addf %40, %43 : vector<16x8xf32>
    %c0_29 = arith.constant 0 : index
    %c0_30 = arith.constant 0 : index
    %c0_31 = arith.constant 0 : index
    %45 = vector.load %arg9[%c0_29, %c0_30, %c0_31] : memref<8x32x8xbf16, #tpu.memory_space<vmem>>, vector<1x32x8xbf16>
    %46 = vector.shape_cast %45 : vector<1x32x8xbf16> to vector<32x8xbf16>
    %cst_32 = arith.constant dense<0.000000e+00> : vector<16x8xf32>
    %47 = tpu.matmul %27, %46, %cst_32 {dimension_numbers = #tpu.dot_dimension_numbers<[1], [0], [0], [1], [0, 0, 1, 1], [], []>} : vector<16x32xbf16>, vector<32x8xbf16>, vector<16x8xf32> -> vector<16x8xf32>
    %c0_33 = arith.constant 0 : index
    %c0_34 = arith.constant 0 : index
    %c0_35 = arith.constant 0 : index
    %48 = vector.load %arg10[%c0_33, %c0_34, %c0_35] : memref<8x1x8xf32, #tpu.memory_space<vmem>>, vector<1x1x8xf32>
    %49 = vector.shape_cast %48 : vector<1x1x8xf32> to vector<1x8xf32>
    %50 = vector.broadcast %49 : vector<1x8xf32> to vector<16x8xf32>
    %51 = arith.addf %47, %50 : vector<16x8xf32>
    %52 = vector.shape_cast %37 : vector<16x8xf32> to vector<2x8x8xf32>
    %53 = arith.truncf %52 : vector<2x8x8xf32> to vector<2x8x8xbf16>
    %54 = vector.shape_cast %44 : vector<16x8xf32> to vector<2x8x8xf32>
    %55 = arith.truncf %54 : vector<2x8x8xf32> to vector<2x8x8xbf16>
    %56 = vector.shape_cast %51 : vector<16x8xf32> to vector<2x8x8xf32>
    %57 = arith.truncf %56 : vector<2x8x8xf32> to vector<2x8x8xbf16>
    "tpu.trace_start"() <{level = 10 : i32, message = "bqd,bkd->bqk"}> : () -> ()
    %cst_36 = arith.constant dense<0.000000e+00> : vector<2x8x8xf32>
    %58 = tpu.matmul %53, %55, %cst_36 {dimension_numbers = #tpu.dot_dimension_numbers<[2], [2], [1], [1], [0, 0, 0, 1, 1, 1], [0], [0]>} : vector<2x8x8xbf16>, vector<2x8x8xbf16>, vector<2x8x8xf32> -> vector<2x8x8xf32>
    "tpu.trace_stop"() : () -> ()
    %59 = vector.broadcast %26 : vector<2x1x8xf32> to vector<2x8x8xf32>
    %60 = arith.addf %58, %59 : vector<2x8x8xf32>
    %cst_37 = arith.constant dense<0xFF800000> : vector<2x8xf32>
    %61 = vector.multi_reduction <maximumf>, %60, %cst_37 [2] : vector<2x8x8xf32> to vector<2x8xf32>
    %62 = vector.shape_cast %61 : vector<2x8xf32> to vector<2x8x1xf32>
    %63 = vector.broadcast %62 : vector<2x8x1xf32> to vector<2x8x8xf32>
    %64 = arith.subf %60, %63 : vector<2x8x8xf32>
    %65 = math.exp %64 : vector<2x8x8xf32>
    %cst_38 = arith.constant dense<0.000000e+00> : vector<2x8xf32>
    %66 = vector.multi_reduction <add>, %65, %cst_38 [2] : vector<2x8x8xf32> to vector<2x8xf32>
    %67 = vector.shape_cast %66 : vector<2x8xf32> to vector<2x8x1xf32>
    %68 = tpu.reciprocal %67 {approx = true} : vector<2x8x1xf32> -> vector<2x8x1xf32>
    %69 = vector.broadcast %68 : vector<2x8x1xf32> to vector<2x8x8xf32>
    %70 = arith.mulf %65, %69 : vector<2x8x8xf32>
    %71 = arith.truncf %70 : vector<2x8x8xf32> to vector<2x8x8xbf16>
    "tpu.trace_start"() <{level = 10 : i32, message = "bqk,bkd->bqd"}> : () -> ()
    %cst_39 = arith.constant dense<0.000000e+00> : vector<2x8x8xf32>
    %72 = tpu.matmul %71, %57, %cst_39 {dimension_numbers = #tpu.dot_dimension_numbers<[2], [1], [1], [2], [0, 0, 0, 1, 1, 2], [0], [0]>} : vector<2x8x8xbf16>, vector<2x8x8xbf16>, vector<2x8x8xf32> -> vector<2x8x8xf32>
    "tpu.trace_stop"() : () -> ()
    %73 = vector.shape_cast %72 : vector<2x8x8xf32> to vector<16x8xf32>
    %74 = arith.truncf %73 : vector<16x8xf32> to vector<16x8xbf16>
    %c0_40 = arith.constant 0 : index
    %c0_41 = arith.constant 0 : index
    %c0_42 = arith.constant 0 : index
    %75 = vector.load %arg11[%c0_40, %c0_41, %c0_42] : memref<8x8x32xbf16, #tpu.memory_space<vmem>>, vector<1x8x32xbf16>
    %76 = vector.shape_cast %75 : vector<1x8x32xbf16> to vector<8x32xbf16>
    %cst_43 = arith.constant dense<0.000000e+00> : vector<16x32xf32>
    %77 = tpu.matmul %74, %76, %cst_43 {dimension_numbers = #tpu.dot_dimension_numbers<[1], [0], [0], [1], [0, 0, 1, 1], [], []>} : vector<16x8xbf16>, vector<8x32xbf16>, vector<16x32xf32> -> vector<16x32xf32>
    %78 = arith.addf %28, %77 : vector<16x32xf32>
    %c1 = arith.constant 1 : index
    %c0_44 = arith.constant 0 : index
    %c0_45 = arith.constant 0 : index
    %79 = vector.load %arg5[%c1, %c0_44, %c0_45] : memref<8x32x8xbf16, #tpu.memory_space<vmem>>, vector<1x32x8xbf16>
    %80 = vector.shape_cast %79 : vector<1x32x8xbf16> to vector<32x8xbf16>
    %cst_46 = arith.constant dense<0.000000e+00> : vector<16x8xf32>
    %81 = tpu.matmul %27, %80, %cst_46 {dimension_numbers = #tpu.dot_dimension_numbers<[1], [0], [0], [1], [0, 0, 1, 1], [], []>} : vector<16x32xbf16>, vector<32x8xbf16>, vector<16x8xf32> -> vector<16x8xf32>
    %c1_47 = arith.constant 1 : index
    %c0_48 = arith.constant 0 : index
    %c0_49 = arith.constant 0 : index
    %82 = vector.load %arg6[%c1_47, %c0_48, %c0_49] : memref<8x1x8xf32, #tpu.memory_space<vmem>>, vector<1x1x8xf32>
    %83 = vector.shape_cast %82 : vector<1x1x8xf32> to vector<1x8xf32>
    %84 = vector.broadcast %83 : vector<1x8xf32> to vector<16x8xf32>
    %85 = arith.addf %81, %84 : vector<16x8xf32>
    %cst_50 = arith.constant 0.353553385 : f32
    %86 = vector.broadcast %cst_50 : f32 to vector<16x8xf32>
    %87 = arith.mulf %85, %86 : vector<16x8xf32>
    %c1_51 = arith.constant 1 : index
    %c0_52 = arith.constant 0 : index
    %c0_53 = arith.constant 0 : index
    %88 = vector.load %arg7[%c1_51, %c0_52, %c0_53] : memref<8x32x8xbf16, #tpu.memory_space<vmem>>, vector<1x32x8xbf16>
    %89 = vector.shape_cast %88 : vector<1x32x8xbf16> to vector<32x8xbf16>
    %cst_54 = arith.constant dense<0.000000e+00> : vector<16x8xf32>
    %90 = tpu.matmul %27, %89, %cst_54 {dimension_numbers = #tpu.dot_dimension_numbers<[1], [0], [0], [1], [0, 0, 1, 1], [], []>} : vector<16x32xbf16>, vector<32x8xbf16>, vector<16x8xf32> -> vector<16x8xf32>
    %c1_55 = arith.constant 1 : index
    %c0_56 = arith.constant 0 : index
    %c0_57 = arith.constant 0 : index
    %91 = vector.load %arg8[%c1_55, %c0_56, %c0_57] : memref<8x1x8xf32, #tpu.memory_space<vmem>>, vector<1x1x8xf32>
    %92 = vector.shape_cast %91 : vector<1x1x8xf32> to vector<1x8xf32>
    %93 = vector.broadcast %92 : vector<1x8xf32> to vector<16x8xf32>
    %94 = arith.addf %90, %93 : vector<16x8xf32>
    %c1_58 = arith.constant 1 : index
    %c0_59 = arith.constant 0 : index
    %c0_60 = arith.constant 0 : index
    %95 = vector.load %arg9[%c1_58, %c0_59, %c0_60] : memref<8x32x8xbf16, #tpu.memory_space<vmem>>, vector<1x32x8xbf16>
    %96 = vector.shape_cast %95 : vector<1x32x8xbf16> to vector<32x8xbf16>
    %cst_61 = arith.constant dense<0.000000e+00> : vector<16x8xf32>
    %97 = tpu.matmul %27, %96, %cst_61 {dimension_numbers = #tpu.dot_dimension_numbers<[1], [0], [0], [1], [0, 0, 1, 1], [], []>} : vector<16x32xbf16>, vector<32x8xbf16>, vector<16x8xf32> -> vector<16x8xf32>
    %c1_62 = arith.constant 1 : index
    %c0_63 = arith.constant 0 : index
    %c0_64 = arith.constant 0 : index
    %98 = vector.load %arg10[%c1_62, %c0_63, %c0_64] : memref<8x1x8xf32, #tpu.memory_space<vmem>>, vector<1x1x8xf32>
    %99 = vector.shape_cast %98 : vector<1x1x8xf32> to vector<1x8xf32>
    %100 = vector.broadcast %99 : vector<1x8xf32> to vector<16x8xf32>
    %101 = arith.addf %97, %100 : vector<16x8xf32>
    %102 = vector.shape_cast %87 : vector<16x8xf32> to vector<2x8x8xf32>
    %103 = arith.truncf %102 : vector<2x8x8xf32> to vector<2x8x8xbf16>
    %104 = vector.shape_cast %94 : vector<16x8xf32> to vector<2x8x8xf32>
    %105 = arith.truncf %104 : vector<2x8x8xf32> to vector<2x8x8xbf16>
    %106 = vector.shape_cast %101 : vector<16x8xf32> to vector<2x8x8xf32>
    %107 = arith.truncf %106 : vector<2x8x8xf32> to vector<2x8x8xbf16>
    "tpu.trace_start"() <{level = 10 : i32, message = "bqd,bkd->bqk"}> : () -> ()
    %cst_65 = arith.constant dense<0.000000e+00> : vector<2x8x8xf32>
    %108 = tpu.matmul %103, %105, %cst_65 {dimension_numbers = #tpu.dot_dimension_numbers<[2], [2], [1], [1], [0, 0, 0, 1, 1, 1], [0], [0]>} : vector<2x8x8xbf16>, vector<2x8x8xbf16>, vector<2x8x8xf32> -> vector<2x8x8xf32>
    "tpu.trace_stop"() : () -> ()
    %109 = vector.broadcast %26 : vector<2x1x8xf32> to vector<2x8x8xf32>
    %110 = arith.addf %108, %109 : vector<2x8x8xf32>
    %cst_66 = arith.constant dense<0xFF800000> : vector<2x8xf32>
    %111 = vector.multi_reduction <maximumf>, %110, %cst_66 [2] : vector<2x8x8xf32> to vector<2x8xf32>
    %112 = vector.shape_cast %111 : vector<2x8xf32> to vector<2x8x1xf32>
    %113 = vector.broadcast %112 : vector<2x8x1xf32> to vector<2x8x8xf32>
    %114 = arith.subf %110, %113 : vector<2x8x8xf32>
    %115 = math.exp %114 : vector<2x8x8xf32>
    %cst_67 = arith.constant dense<0.000000e+00> : vector<2x8xf32>
    %116 = vector.multi_reduction <add>, %115, %cst_67 [2] : vector<2x8x8xf32> to vector<2x8xf32>
    %117 = vector.shape_cast %116 : vector<2x8xf32> to vector<2x8x1xf32>
    %118 = tpu.reciprocal %117 {approx = true} : vector<2x8x1xf32> -> vector<2x8x1xf32>
    %119 = vector.broadcast %118 : vector<2x8x1xf32> to vector<2x8x8xf32>
    %120 = arith.mulf %115, %119 : vector<2x8x8xf32>
    %121 = arith.truncf %120 : vector<2x8x8xf32> to vector<2x8x8xbf16>
    "tpu.trace_start"() <{level = 10 : i32, message = "bqk,bkd->bqd"}> : () -> ()
    %cst_68 = arith.constant dense<0.000000e+00> : vector<2x8x8xf32>
    %122 = tpu.matmul %121, %107, %cst_68 {dimension_numbers = #tpu.dot_dimension_numbers<[2], [1], [1], [2], [0, 0, 0, 1, 1, 2], [0], [0]>} : vector<2x8x8xbf16>, vector<2x8x8xbf16>, vector<2x8x8xf32> -> vector<2x8x8xf32>
    "tpu.trace_stop"() : () -> ()
    %123 = vector.shape_cast %122 : vector<2x8x8xf32> to vector<16x8xf32>
    %124 = arith.truncf %123 : vector<16x8xf32> to vector<16x8xbf16>
    %c1_69 = arith.constant 1 : index
    %c0_70 = arith.constant 0 : index
    %c0_71 = arith.constant 0 : index
    %125 = vector.load %arg11[%c1_69, %c0_70, %c0_71] : memref<8x8x32xbf16, #tpu.memory_space<vmem>>, vector<1x8x32xbf16>
    %126 = vector.shape_cast %125 : vector<1x8x32xbf16> to vector<8x32xbf16>
    %cst_72 = arith.constant dense<0.000000e+00> : vector<16x32xf32>
    %127 = tpu.matmul %124, %126, %cst_72 {dimension_numbers = #tpu.dot_dimension_numbers<[1], [0], [0], [1], [0, 0, 1, 1], [], []>} : vector<16x8xbf16>, vector<8x32xbf16>, vector<16x32xf32> -> vector<16x32xf32>
    %128 = arith.addf %78, %127 : vector<16x32xf32>
    %c2 = arith.constant 2 : index
    %c0_73 = arith.constant 0 : index
    %c0_74 = arith.constant 0 : index
    %129 = vector.load %arg5[%c2, %c0_73, %c0_74] : memref<8x32x8xbf16, #tpu.memory_space<vmem>>, vector<1x32x8xbf16>
    %130 = vector.shape_cast %129 : vector<1x32x8xbf16> to vector<32x8xbf16>
    %cst_75 = arith.constant dense<0.000000e+00> : vector<16x8xf32>
    %131 = tpu.matmul %27, %130, %cst_75 {dimension_numbers = #tpu.dot_dimension_numbers<[1], [0], [0], [1], [0, 0, 1, 1], [], []>} : vector<16x32xbf16>, vector<32x8xbf16>, vector<16x8xf32> -> vector<16x8xf32>
    %c2_76 = arith.constant 2 : index
    %c0_77 = arith.constant 0 : index
    %c0_78 = arith.constant 0 : index
    %132 = vector.load %arg6[%c2_76, %c0_77, %c0_78] : memref<8x1x8xf32, #tpu.memory_space<vmem>>, vector<1x1x8xf32>
    %133 = vector.shape_cast %132 : vector<1x1x8xf32> to vector<1x8xf32>
    %134 = vector.broadcast %133 : vector<1x8xf32> to vector<16x8xf32>
    %135 = arith.addf %131, %134 : vector<16x8xf32>
    %cst_79 = arith.constant 0.353553385 : f32
    %136 = vector.broadcast %cst_79 : f32 to vector<16x8xf32>
    %137 = arith.mulf %135, %136 : vector<16x8xf32>
    %c2_80 = arith.constant 2 : index
    %c0_81 = arith.constant 0 : index
    %c0_82 = arith.constant 0 : index
    %138 = vector.load %arg7[%c2_80, %c0_81, %c0_82] : memref<8x32x8xbf16, #tpu.memory_space<vmem>>, vector<1x32x8xbf16>
    %139 = vector.shape_cast %138 : vector<1x32x8xbf16> to vector<32x8xbf16>
    %cst_83 = arith.constant dense<0.000000e+00> : vector<16x8xf32>
    %140 = tpu.matmul %27, %139, %cst_83 {dimension_numbers = #tpu.dot_dimension_numbers<[1], [0], [0], [1], [0, 0, 1, 1], [], []>} : vector<16x32xbf16>, vector<32x8xbf16>, vector<16x8xf32> -> vector<16x8xf32>
    %c2_84 = arith.constant 2 : index
    %c0_85 = arith.constant 0 : index
    %c0_86 = arith.constant 0 : index
    %141 = vector.load %arg8[%c2_84, %c0_85, %c0_86] : memref<8x1x8xf32, #tpu.memory_space<vmem>>, vector<1x1x8xf32>
    %142 = vector.shape_cast %141 : vector<1x1x8xf32> to vector<1x8xf32>
    %143 = vector.broadcast %142 : vector<1x8xf32> to vector<16x8xf32>
    %144 = arith.addf %140, %143 : vector<16x8xf32>
    %c2_87 = arith.constant 2 : index
    %c0_88 = arith.constant 0 : index
    %c0_89 = arith.constant 0 : index
    %145 = vector.load %arg9[%c2_87, %c0_88, %c0_89] : memref<8x32x8xbf16, #tpu.memory_space<vmem>>, vector<1x32x8xbf16>
    %146 = vector.shape_cast %145 : vector<1x32x8xbf16> to vector<32x8xbf16>
    %cst_90 = arith.constant dense<0.000000e+00> : vector<16x8xf32>
    %147 = tpu.matmul %27, %146, %cst_90 {dimension_numbers = #tpu.dot_dimension_numbers<[1], [0], [0], [1], [0, 0, 1, 1], [], []>} : vector<16x32xbf16>, vector<32x8xbf16>, vector<16x8xf32> -> vector<16x8xf32>
    %c2_91 = arith.constant 2 : index
    %c0_92 = arith.constant 0 : index
    %c0_93 = arith.constant 0 : index
    %148 = vector.load %arg10[%c2_91, %c0_92, %c0_93] : memref<8x1x8xf32, #tpu.memory_space<vmem>>, vector<1x1x8xf32>
    %149 = vector.shape_cast %148 : vector<1x1x8xf32> to vector<1x8xf32>
    %150 = vector.broadcast %149 : vector<1x8xf32> to vector<16x8xf32>
    %151 = arith.addf %147, %150 : vector<16x8xf32>
    %152 = vector.shape_cast %137 : vector<16x8xf32> to vector<2x8x8xf32>
    %153 = arith.truncf %152 : vector<2x8x8xf32> to vector<2x8x8xbf16>
    %154 = vector.shape_cast %144 : vector<16x8xf32> to vector<2x8x8xf32>
    %155 = arith.truncf %154 : vector<2x8x8xf32> to vector<2x8x8xbf16>
    %156 = vector.shape_cast %151 : vector<16x8xf32> to vector<2x8x8xf32>
    %157 = arith.truncf %156 : vector<2x8x8xf32> to vector<2x8x8xbf16>
    "tpu.trace_start"() <{level = 10 : i32, message = "bqd,bkd->bqk"}> : () -> ()
    %cst_94 = arith.constant dense<0.000000e+00> : vector<2x8x8xf32>
    %158 = tpu.matmul %153, %155, %cst_94 {dimension_numbers = #tpu.dot_dimension_numbers<[2], [2], [1], [1], [0, 0, 0, 1, 1, 1], [0], [0]>} : vector<2x8x8xbf16>, vector<2x8x8xbf16>, vector<2x8x8xf32> -> vector<2x8x8xf32>
    "tpu.trace_stop"() : () -> ()
    %159 = vector.broadcast %26 : vector<2x1x8xf32> to vector<2x8x8xf32>
    %160 = arith.addf %158, %159 : vector<2x8x8xf32>
    %cst_95 = arith.constant dense<0xFF800000> : vector<2x8xf32>
    %161 = vector.multi_reduction <maximumf>, %160, %cst_95 [2] : vector<2x8x8xf32> to vector<2x8xf32>
    %162 = vector.shape_cast %161 : vector<2x8xf32> to vector<2x8x1xf32>
    %163 = vector.broadcast %162 : vector<2x8x1xf32> to vector<2x8x8xf32>
    %164 = arith.subf %160, %163 : vector<2x8x8xf32>
    %165 = math.exp %164 : vector<2x8x8xf32>
    %cst_96 = arith.constant dense<0.000000e+00> : vector<2x8xf32>
    %166 = vector.multi_reduction <add>, %165, %cst_96 [2] : vector<2x8x8xf32> to vector<2x8xf32>
    %167 = vector.shape_cast %166 : vector<2x8xf32> to vector<2x8x1xf32>
    %168 = tpu.reciprocal %167 {approx = true} : vector<2x8x1xf32> -> vector<2x8x1xf32>
    %169 = vector.broadcast %168 : vector<2x8x1xf32> to vector<2x8x8xf32>
    %170 = arith.mulf %165, %169 : vector<2x8x8xf32>
    %171 = arith.truncf %170 : vector<2x8x8xf32> to vector<2x8x8xbf16>
    "tpu.trace_start"() <{level = 10 : i32, message = "bqk,bkd->bqd"}> : () -> ()
    %cst_97 = arith.constant dense<0.000000e+00> : vector<2x8x8xf32>
    %172 = tpu.matmul %171, %157, %cst_97 {dimension_numbers = #tpu.dot_dimension_numbers<[2], [1], [1], [2], [0, 0, 0, 1, 1, 2], [0], [0]>} : vector<2x8x8xbf16>, vector<2x8x8xbf16>, vector<2x8x8xf32> -> vector<2x8x8xf32>
    "tpu.trace_stop"() : () -> ()
    %173 = vector.shape_cast %172 : vector<2x8x8xf32> to vector<16x8xf32>
    %174 = arith.truncf %173 : vector<16x8xf32> to vector<16x8xbf16>
    %c2_98 = arith.constant 2 : index
    %c0_99 = arith.constant 0 : index
    %c0_100 = arith.constant 0 : index
    %175 = vector.load %arg11[%c2_98, %c0_99, %c0_100] : memref<8x8x32xbf16, #tpu.memory_space<vmem>>, vector<1x8x32xbf16>
    %176 = vector.shape_cast %175 : vector<1x8x32xbf16> to vector<8x32xbf16>
    %cst_101 = arith.constant dense<0.000000e+00> : vector<16x32xf32>
    %177 = tpu.matmul %174, %176, %cst_101 {dimension_numbers = #tpu.dot_dimension_numbers<[1], [0], [0], [1], [0, 0, 1, 1], [], []>} : vector<16x8xbf16>, vector<8x32xbf16>, vector<16x32xf32> -> vector<16x32xf32>
    %178 = arith.addf %128, %177 : vector<16x32xf32>
    %c3 = arith.constant 3 : index
    %c0_102 = arith.constant 0 : index
    %c0_103 = arith.constant 0 : index
    %179 = vector.load %arg5[%c3, %c0_102, %c0_103] : memref<8x32x8xbf16, #tpu.memory_space<vmem>>, vector<1x32x8xbf16>
    %180 = vector.shape_cast %179 : vector<1x32x8xbf16> to vector<32x8xbf16>
    %cst_104 = arith.constant dense<0.000000e+00> : vector<16x8xf32>
    %181 = tpu.matmul %27, %180, %cst_104 {dimension_numbers = #tpu.dot_dimension_numbers<[1], [0], [0], [1], [0, 0, 1, 1], [], []>} : vector<16x32xbf16>, vector<32x8xbf16>, vector<16x8xf32> -> vector<16x8xf32>
    %c3_105 = arith.constant 3 : index
    %c0_106 = arith.constant 0 : index
    %c0_107 = arith.constant 0 : index
    %182 = vector.load %arg6[%c3_105, %c0_106, %c0_107] : memref<8x1x8xf32, #tpu.memory_space<vmem>>, vector<1x1x8xf32>
    %183 = vector.shape_cast %182 : vector<1x1x8xf32> to vector<1x8xf32>
    %184 = vector.broadcast %183 : vector<1x8xf32> to vector<16x8xf32>
    %185 = arith.addf %181, %184 : vector<16x8xf32>
    %cst_108 = arith.constant 0.353553385 : f32
    %186 = vector.broadcast %cst_108 : f32 to vector<16x8xf32>
    %187 = arith.mulf %185, %186 : vector<16x8xf32>
    %c3_109 = arith.constant 3 : index
    %c0_110 = arith.constant 0 : index
    %c0_111 = arith.constant 0 : index
    %188 = vector.load %arg7[%c3_109, %c0_110, %c0_111] : memref<8x32x8xbf16, #tpu.memory_space<vmem>>, vector<1x32x8xbf16>
    %189 = vector.shape_cast %188 : vector<1x32x8xbf16> to vector<32x8xbf16>
    %cst_112 = arith.constant dense<0.000000e+00> : vector<16x8xf32>
    %190 = tpu.matmul %27, %189, %cst_112 {dimension_numbers = #tpu.dot_dimension_numbers<[1], [0], [0], [1], [0, 0, 1, 1], [], []>} : vector<16x32xbf16>, vector<32x8xbf16>, vector<16x8xf32> -> vector<16x8xf32>
    %c3_113 = arith.constant 3 : index
    %c0_114 = arith.constant 0 : index
    %c0_115 = arith.constant 0 : index
    %191 = vector.load %arg8[%c3_113, %c0_114, %c0_115] : memref<8x1x8xf32, #tpu.memory_space<vmem>>, vector<1x1x8xf32>
    %192 = vector.shape_cast %191 : vector<1x1x8xf32> to vector<1x8xf32>
    %193 = vector.broadcast %192 : vector<1x8xf32> to vector<16x8xf32>
    %194 = arith.addf %190, %193 : vector<16x8xf32>
    %c3_116 = arith.constant 3 : index
    %c0_117 = arith.constant 0 : index
    %c0_118 = arith.constant 0 : index
    %195 = vector.load %arg9[%c3_116, %c0_117, %c0_118] : memref<8x32x8xbf16, #tpu.memory_space<vmem>>, vector<1x32x8xbf16>
    %196 = vector.shape_cast %195 : vector<1x32x8xbf16> to vector<32x8xbf16>
    %cst_119 = arith.constant dense<0.000000e+00> : vector<16x8xf32>
    %197 = tpu.matmul %27, %196, %cst_119 {dimension_numbers = #tpu.dot_dimension_numbers<[1], [0], [0], [1], [0, 0, 1, 1], [], []>} : vector<16x32xbf16>, vector<32x8xbf16>, vector<16x8xf32> -> vector<16x8xf32>
    %c3_120 = arith.constant 3 : index
    %c0_121 = arith.constant 0 : index
    %c0_122 = arith.constant 0 : index
    %198 = vector.load %arg10[%c3_120, %c0_121, %c0_122] : memref<8x1x8xf32, #tpu.memory_space<vmem>>, vector<1x1x8xf32>
    %199 = vector.shape_cast %198 : vector<1x1x8xf32> to vector<1x8xf32>
    %200 = vector.broadcast %199 : vector<1x8xf32> to vector<16x8xf32>
    %201 = arith.addf %197, %200 : vector<16x8xf32>
    %202 = vector.shape_cast %187 : vector<16x8xf32> to vector<2x8x8xf32>
    %203 = arith.truncf %202 : vector<2x8x8xf32> to vector<2x8x8xbf16>
    %204 = vector.shape_cast %194 : vector<16x8xf32> to vector<2x8x8xf32>
    %205 = arith.truncf %204 : vector<2x8x8xf32> to vector<2x8x8xbf16>
    %206 = vector.shape_cast %201 : vector<16x8xf32> to vector<2x8x8xf32>
    %207 = arith.truncf %206 : vector<2x8x8xf32> to vector<2x8x8xbf16>
    "tpu.trace_start"() <{level = 10 : i32, message = "bqd,bkd->bqk"}> : () -> ()
    %cst_123 = arith.constant dense<0.000000e+00> : vector<2x8x8xf32>
    %208 = tpu.matmul %203, %205, %cst_123 {dimension_numbers = #tpu.dot_dimension_numbers<[2], [2], [1], [1], [0, 0, 0, 1, 1, 1], [0], [0]>} : vector<2x8x8xbf16>, vector<2x8x8xbf16>, vector<2x8x8xf32> -> vector<2x8x8xf32>
    "tpu.trace_stop"() : () -> ()
    %209 = vector.broadcast %26 : vector<2x1x8xf32> to vector<2x8x8xf32>
    %210 = arith.addf %208, %209 : vector<2x8x8xf32>
    %cst_124 = arith.constant dense<0xFF800000> : vector<2x8xf32>
    %211 = vector.multi_reduction <maximumf>, %210, %cst_124 [2] : vector<2x8x8xf32> to vector<2x8xf32>
    %212 = vector.shape_cast %211 : vector<2x8xf32> to vector<2x8x1xf32>
    %213 = vector.broadcast %212 : vector<2x8x1xf32> to vector<2x8x8xf32>
    %214 = arith.subf %210, %213 : vector<2x8x8xf32>
    %215 = math.exp %214 : vector<2x8x8xf32>
    %cst_125 = arith.constant dense<0.000000e+00> : vector<2x8xf32>
    %216 = vector.multi_reduction <add>, %215, %cst_125 [2] : vector<2x8x8xf32> to vector<2x8xf32>
    %217 = vector.shape_cast %216 : vector<2x8xf32> to vector<2x8x1xf32>
    %218 = tpu.reciprocal %217 {approx = true} : vector<2x8x1xf32> -> vector<2x8x1xf32>
    %219 = vector.broadcast %218 : vector<2x8x1xf32> to vector<2x8x8xf32>
    %220 = arith.mulf %215, %219 : vector<2x8x8xf32>
    %221 = arith.truncf %220 : vector<2x8x8xf32> to vector<2x8x8xbf16>
    "tpu.trace_start"() <{level = 10 : i32, message = "bqk,bkd->bqd"}> : () -> ()
    %cst_126 = arith.constant dense<0.000000e+00> : vector<2x8x8xf32>
    %222 = tpu.matmul %221, %207, %cst_126 {dimension_numbers = #tpu.dot_dimension_numbers<[2], [1], [1], [2], [0, 0, 0, 1, 1, 2], [0], [0]>} : vector<2x8x8xbf16>, vector<2x8x8xbf16>, vector<2x8x8xf32> -> vector<2x8x8xf32>
    "tpu.trace_stop"() : () -> ()
    %223 = vector.shape_cast %222 : vector<2x8x8xf32> to vector<16x8xf32>
    %224 = arith.truncf %223 : vector<16x8xf32> to vector<16x8xbf16>
    %c3_127 = arith.constant 3 : index
    %c0_128 = arith.constant 0 : index
    %c0_129 = arith.constant 0 : index
    %225 = vector.load %arg11[%c3_127, %c0_128, %c0_129] : memref<8x8x32xbf16, #tpu.memory_space<vmem>>, vector<1x8x32xbf16>
    %226 = vector.shape_cast %225 : vector<1x8x32xbf16> to vector<8x32xbf16>
    %cst_130 = arith.constant dense<0.000000e+00> : vector<16x32xf32>
    %227 = tpu.matmul %224, %226, %cst_130 {dimension_numbers = #tpu.dot_dimension_numbers<[1], [0], [0], [1], [0, 0, 1, 1], [], []>} : vector<16x8xbf16>, vector<8x32xbf16>, vector<16x32xf32> -> vector<16x32xf32>
    %228 = arith.addf %178, %227 : vector<16x32xf32>
    %c0_131 = arith.constant 0 : index
    %c0_132 = arith.constant 0 : index
    %c0_133 = arith.constant 0 : index
    %229 = vector.load %arg12[%c0_131, %c0_132, %c0_133] : memref<2x1x32xf32, #tpu.memory_space<vmem>>, vector<1x1x32xf32>
    %230 = vector.shape_cast %229 : vector<1x1x32xf32> to vector<1x32xf32>
    %231 = vector.broadcast %230 : vector<1x32xf32> to vector<16x32xf32>
    %232 = arith.addf %228, %231 : vector<16x32xf32>
    %233 = arith.addf %25, %232 : vector<16x32xf32>
    %c0_134 = arith.constant 0 : index
    %c0_135 = arith.constant 0 : index
    %c0_136 = arith.constant 0 : index
    %234 = vector.load %arg13[%c0_134, %c0_135, %c0_136] : memref<2x1x32xf32, #tpu.memory_space<vmem>>, vector<1x1x32xf32>
    %235 = vector.shape_cast %234 : vector<1x1x32xf32> to vector<1x32xf32>
    %c0_137 = arith.constant 0 : index
    %c0_138 = arith.constant 0 : index
    %c0_139 = arith.constant 0 : index
    %236 = vector.load %arg14[%c0_137, %c0_138, %c0_139] : memref<2x1x32xf32, #tpu.memory_space<vmem>>, vector<1x1x32xf32>
    %237 = vector.shape_cast %236 : vector<1x1x32xf32> to vector<1x32xf32>
    %cst_140 = arith.constant dense<0.000000e+00> : vector<16xf32>
    %238 = vector.multi_reduction <add>, %233, %cst_140 [1] : vector<16x32xf32> to vector<16xf32>
    %239 = vector.shape_cast %238 : vector<16xf32> to vector<16x1xf32>
    %cst_141 = arith.constant 3.200000e+01 : f32
    %240 = vector.broadcast %cst_141 : f32 to vector<16x1xf32>
    %241 = arith.divf %239, %240 : vector<16x1xf32>
    %242 = vector.broadcast %241 : vector<16x1xf32> to vector<16x32xf32>
    %243 = arith.subf %233, %242 : vector<16x32xf32>
    %244 = arith.mulf %243, %243 : vector<16x32xf32>
    %cst_142 = arith.constant dense<0.000000e+00> : vector<16xf32>
    %245 = vector.multi_reduction <add>, %244, %cst_142 [1] : vector<16x32xf32> to vector<16xf32>
    %246 = vector.shape_cast %245 : vector<16xf32> to vector<16x1xf32>
    %cst_143 = arith.constant 3.200000e+01 : f32
    %247 = vector.broadcast %cst_143 : f32 to vector<16x1xf32>
    %248 = arith.divf %246, %247 : vector<16x1xf32>
    %249 = vector.broadcast %241 : vector<16x1xf32> to vector<16x32xf32>
    %250 = arith.subf %233, %249 : vector<16x32xf32>
    %cst_144 = arith.constant 9.99999996E-13 : f32
    %251 = vector.broadcast %cst_144 : f32 to vector<16x1xf32>
    %252 = arith.addf %248, %251 : vector<16x1xf32>
    %253 = math.rsqrt %252 : vector<16x1xf32>
    %254 = vector.broadcast %253 : vector<16x1xf32> to vector<16x32xf32>
    %255 = arith.mulf %250, %254 : vector<16x32xf32>
    %256 = vector.broadcast %235 : vector<1x32xf32> to vector<16x32xf32>
    %257 = arith.mulf %255, %256 : vector<16x32xf32>
    %258 = vector.broadcast %237 : vector<1x32xf32> to vector<16x32xf32>
    %259 = arith.addf %257, %258 : vector<16x32xf32>
    %260 = arith.truncf %259 : vector<16x32xf32> to vector<16x32xbf16>
    %c0_145 = arith.constant 0 : index
    %c0_146 = arith.constant 0 : index
    %c0_147 = arith.constant 0 : index
    %261 = vector.load %arg15[%c0_145, %c0_146, %c0_147] : memref<2x32x64xbf16, #tpu.memory_space<vmem>>, vector<1x32x64xbf16>
    %262 = vector.shape_cast %261 : vector<1x32x64xbf16> to vector<32x64xbf16>
    %cst_148 = arith.constant dense<0.000000e+00> : vector<16x64xf32>
    %263 = tpu.matmul %260, %262, %cst_148 {dimension_numbers = #tpu.dot_dimension_numbers<[1], [0], [0], [1], [0, 0, 1, 1], [], []>} : vector<16x32xbf16>, vector<32x64xbf16>, vector<16x64xf32> -> vector<16x64xf32>
    %c0_149 = arith.constant 0 : index
    %c0_150 = arith.constant 0 : index
    %c0_151 = arith.constant 0 : index
    %264 = vector.load %arg16[%c0_149, %c0_150, %c0_151] : memref<2x1x64xf32, #tpu.memory_space<vmem>>, vector<1x1x64xf32>
    %265 = vector.shape_cast %264 : vector<1x1x64xf32> to vector<1x64xf32>
    %266 = vector.broadcast %265 : vector<1x64xf32> to vector<16x64xf32>
    %267 = arith.addf %263, %266 : vector<16x64xf32>
    %cst_152 = arith.constant 5.000000e-01 : f32
    %268 = vector.broadcast %cst_152 : f32 to vector<16x64xf32>
    %269 = arith.mulf %268, %267 : vector<16x64xf32>
    %cst_153 = arith.constant 4.471500e-02 : f32
    %270 = vector.broadcast %cst_153 : f32 to vector<16x64xf32>
    %271 = arith.mulf %270, %267 : vector<16x64xf32>
    %272 = arith.mulf %271, %267 : vector<16x64xf32>
    %273 = arith.mulf %272, %267 : vector<16x64xf32>
    %274 = arith.addf %267, %273 : vector<16x64xf32>
    %cst_154 = arith.constant 0.797884583 : f32
    %275 = vector.broadcast %cst_154 : f32 to vector<16x64xf32>
    %276 = arith.mulf %275, %274 : vector<16x64xf32>
    %277 = math.tanh %276 : vector<16x64xf32>
    %cst_155 = arith.constant 1.000000e+00 : f32
    %278 = vector.broadcast %cst_155 : f32 to vector<16x64xf32>
    %279 = arith.addf %278, %277 : vector<16x64xf32>
    %280 = arith.mulf %269, %279 : vector<16x64xf32>
    %281 = arith.truncf %280 : vector<16x64xf32> to vector<16x64xbf16>
    %c0_156 = arith.constant 0 : index
    %c0_157 = arith.constant 0 : index
    %c0_158 = arith.constant 0 : index
    %282 = vector.load %arg17[%c0_156, %c0_157, %c0_158] : memref<2x64x32xbf16, #tpu.memory_space<vmem>>, vector<1x64x32xbf16>
    %283 = vector.shape_cast %282 : vector<1x64x32xbf16> to vector<64x32xbf16>
    %cst_159 = arith.constant dense<0.000000e+00> : vector<16x32xf32>
    %284 = tpu.matmul %281, %283, %cst_159 {dimension_numbers = #tpu.dot_dimension_numbers<[1], [0], [0], [1], [0, 0, 1, 1], [], []>} : vector<16x64xbf16>, vector<64x32xbf16>, vector<16x32xf32> -> vector<16x32xf32>
    %c0_160 = arith.constant 0 : index
    %c0_161 = arith.constant 0 : index
    %c0_162 = arith.constant 0 : index
    %285 = vector.load %arg18[%c0_160, %c0_161, %c0_162] : memref<2x1x32xf32, #tpu.memory_space<vmem>>, vector<1x1x32xf32>
    %286 = vector.shape_cast %285 : vector<1x1x32xf32> to vector<1x32xf32>
    %287 = vector.broadcast %286 : vector<1x32xf32> to vector<16x32xf32>
    %288 = arith.addf %284, %287 : vector<16x32xf32>
    %289 = arith.addf %259, %288 : vector<16x32xf32>
    %c0_163 = arith.constant 0 : index
    %c0_164 = arith.constant 0 : index
    %c0_165 = arith.constant 0 : index
    %290 = vector.load %arg19[%c0_163, %c0_164, %c0_165] : memref<2x1x32xf32, #tpu.memory_space<vmem>>, vector<1x1x32xf32>
    %291 = vector.shape_cast %290 : vector<1x1x32xf32> to vector<1x32xf32>
    %c0_166 = arith.constant 0 : index
    %c0_167 = arith.constant 0 : index
    %c0_168 = arith.constant 0 : index
    %292 = vector.load %arg20[%c0_166, %c0_167, %c0_168] : memref<2x1x32xf32, #tpu.memory_space<vmem>>, vector<1x1x32xf32>
    %293 = vector.shape_cast %292 : vector<1x1x32xf32> to vector<1x32xf32>
    %cst_169 = arith.constant dense<0.000000e+00> : vector<16xf32>
    %294 = vector.multi_reduction <add>, %289, %cst_169 [1] : vector<16x32xf32> to vector<16xf32>
    %295 = vector.shape_cast %294 : vector<16xf32> to vector<16x1xf32>
    %cst_170 = arith.constant 3.200000e+01 : f32
    %296 = vector.broadcast %cst_170 : f32 to vector<16x1xf32>
    %297 = arith.divf %295, %296 : vector<16x1xf32>
    %298 = vector.broadcast %297 : vector<16x1xf32> to vector<16x32xf32>
    %299 = arith.subf %289, %298 : vector<16x32xf32>
    %300 = arith.mulf %299, %299 : vector<16x32xf32>
    %cst_171 = arith.constant dense<0.000000e+00> : vector<16xf32>
    %301 = vector.multi_reduction <add>, %300, %cst_171 [1] : vector<16x32xf32> to vector<16xf32>
    %302 = vector.shape_cast %301 : vector<16xf32> to vector<16x1xf32>
    %cst_172 = arith.constant 3.200000e+01 : f32
    %303 = vector.broadcast %cst_172 : f32 to vector<16x1xf32>
    %304 = arith.divf %302, %303 : vector<16x1xf32>
    %305 = vector.broadcast %297 : vector<16x1xf32> to vector<16x32xf32>
    %306 = arith.subf %289, %305 : vector<16x32xf32>
    %cst_173 = arith.constant 9.99999996E-13 : f32
    %307 = vector.broadcast %cst_173 : f32 to vector<16x1xf32>
    %308 = arith.addf %304, %307 : vector<16x1xf32>
    %309 = math.rsqrt %308 : vector<16x1xf32>
    %310 = vector.broadcast %309 : vector<16x1xf32> to vector<16x32xf32>
    %311 = arith.mulf %306, %310 : vector<16x32xf32>
    %312 = vector.broadcast %291 : vector<1x32xf32> to vector<16x32xf32>
    %313 = arith.mulf %311, %312 : vector<16x32xf32>
    %314 = vector.broadcast %293 : vector<1x32xf32> to vector<16x32xf32>
    %315 = arith.addf %313, %314 : vector<16x32xf32>
    %316 = arith.truncf %315 : vector<16x32xf32> to vector<16x32xbf16>
    %cst_174 = arith.constant 0.000000e+00 : f32
    %317 = vector.broadcast %cst_174 : f32 to vector<16x32xf32>
    %c4 = arith.constant 4 : index
    %c0_175 = arith.constant 0 : index
    %c0_176 = arith.constant 0 : index
    %318 = vector.load %arg5[%c4, %c0_175, %c0_176] : memref<8x32x8xbf16, #tpu.memory_space<vmem>>, vector<1x32x8xbf16>
    %319 = vector.shape_cast %318 : vector<1x32x8xbf16> to vector<32x8xbf16>
    %cst_177 = arith.constant dense<0.000000e+00> : vector<16x8xf32>
    %320 = tpu.matmul %316, %319, %cst_177 {dimension_numbers = #tpu.dot_dimension_numbers<[1], [0], [0], [1], [0, 0, 1, 1], [], []>} : vector<16x32xbf16>, vector<32x8xbf16>, vector<16x8xf32> -> vector<16x8xf32>
    %c4_178 = arith.constant 4 : index
    %c0_179 = arith.constant 0 : index
    %c0_180 = arith.constant 0 : index
    %321 = vector.load %arg6[%c4_178, %c0_179, %c0_180] : memref<8x1x8xf32, #tpu.memory_space<vmem>>, vector<1x1x8xf32>
    %322 = vector.shape_cast %321 : vector<1x1x8xf32> to vector<1x8xf32>
    %323 = vector.broadcast %322 : vector<1x8xf32> to vector<16x8xf32>
    %324 = arith.addf %320, %323 : vector<16x8xf32>
    %cst_181 = arith.constant 0.353553385 : f32
    %325 = vector.broadcast %cst_181 : f32 to vector<16x8xf32>
    %326 = arith.mulf %324, %325 : vector<16x8xf32>
    %c4_182 = arith.constant 4 : index
    %c0_183 = arith.constant 0 : index
    %c0_184 = arith.constant 0 : index
    %327 = vector.load %arg7[%c4_182, %c0_183, %c0_184] : memref<8x32x8xbf16, #tpu.memory_space<vmem>>, vector<1x32x8xbf16>
    %328 = vector.shape_cast %327 : vector<1x32x8xbf16> to vector<32x8xbf16>
    %cst_185 = arith.constant dense<0.000000e+00> : vector<16x8xf32>
    %329 = tpu.matmul %316, %328, %cst_185 {dimension_numbers = #tpu.dot_dimension_numbers<[1], [0], [0], [1], [0, 0, 1, 1], [], []>} : vector<16x32xbf16>, vector<32x8xbf16>, vector<16x8xf32> -> vector<16x8xf32>
    %c4_186 = arith.constant 4 : index
    %c0_187 = arith.constant 0 : index
    %c0_188 = arith.constant 0 : index
    %330 = vector.load %arg8[%c4_186, %c0_187, %c0_188] : memref<8x1x8xf32, #tpu.memory_space<vmem>>, vector<1x1x8xf32>
    %331 = vector.shape_cast %330 : vector<1x1x8xf32> to vector<1x8xf32>
    %332 = vector.broadcast %331 : vector<1x8xf32> to vector<16x8xf32>
    %333 = arith.addf %329, %332 : vector<16x8xf32>
    %c4_189 = arith.constant 4 : index
    %c0_190 = arith.constant 0 : index
    %c0_191 = arith.constant 0 : index
    %334 = vector.load %arg9[%c4_189, %c0_190, %c0_191] : memref<8x32x8xbf16, #tpu.memory_space<vmem>>, vector<1x32x8xbf16>
    %335 = vector.shape_cast %334 : vector<1x32x8xbf16> to vector<32x8xbf16>
    %cst_192 = arith.constant dense<0.000000e+00> : vector<16x8xf32>
    %336 = tpu.matmul %316, %335, %cst_192 {dimension_numbers = #tpu.dot_dimension_numbers<[1], [0], [0], [1], [0, 0, 1, 1], [], []>} : vector<16x32xbf16>, vector<32x8xbf16>, vector<16x8xf32> -> vector<16x8xf32>
    %c4_193 = arith.constant 4 : index
    %c0_194 = arith.constant 0 : index
    %c0_195 = arith.constant 0 : index
    %337 = vector.load %arg10[%c4_193, %c0_194, %c0_195] : memref<8x1x8xf32, #tpu.memory_space<vmem>>, vector<1x1x8xf32>
    %338 = vector.shape_cast %337 : vector<1x1x8xf32> to vector<1x8xf32>
    %339 = vector.broadcast %338 : vector<1x8xf32> to vector<16x8xf32>
    %340 = arith.addf %336, %339 : vector<16x8xf32>
    %341 = vector.shape_cast %326 : vector<16x8xf32> to vector<2x8x8xf32>
    %342 = arith.truncf %341 : vector<2x8x8xf32> to vector<2x8x8xbf16>
    %343 = vector.shape_cast %333 : vector<16x8xf32> to vector<2x8x8xf32>
    %344 = arith.truncf %343 : vector<2x8x8xf32> to vector<2x8x8xbf16>
    %345 = vector.shape_cast %340 : vector<16x8xf32> to vector<2x8x8xf32>
    %346 = arith.truncf %345 : vector<2x8x8xf32> to vector<2x8x8xbf16>
    "tpu.trace_start"() <{level = 10 : i32, message = "bqd,bkd->bqk"}> : () -> ()
    %cst_196 = arith.constant dense<0.000000e+00> : vector<2x8x8xf32>
    %347 = tpu.matmul %342, %344, %cst_196 {dimension_numbers = #tpu.dot_dimension_numbers<[2], [2], [1], [1], [0, 0, 0, 1, 1, 1], [0], [0]>} : vector<2x8x8xbf16>, vector<2x8x8xbf16>, vector<2x8x8xf32> -> vector<2x8x8xf32>
    "tpu.trace_stop"() : () -> ()
    %348 = vector.broadcast %26 : vector<2x1x8xf32> to vector<2x8x8xf32>
    %349 = arith.addf %347, %348 : vector<2x8x8xf32>
    %cst_197 = arith.constant dense<0xFF800000> : vector<2x8xf32>
    %350 = vector.multi_reduction <maximumf>, %349, %cst_197 [2] : vector<2x8x8xf32> to vector<2x8xf32>
    %351 = vector.shape_cast %350 : vector<2x8xf32> to vector<2x8x1xf32>
    %352 = vector.broadcast %351 : vector<2x8x1xf32> to vector<2x8x8xf32>
    %353 = arith.subf %349, %352 : vector<2x8x8xf32>
    %354 = math.exp %353 : vector<2x8x8xf32>
    %cst_198 = arith.constant dense<0.000000e+00> : vector<2x8xf32>
    %355 = vector.multi_reduction <add>, %354, %cst_198 [2] : vector<2x8x8xf32> to vector<2x8xf32>
    %356 = vector.shape_cast %355 : vector<2x8xf32> to vector<2x8x1xf32>
    %357 = tpu.reciprocal %356 {approx = true} : vector<2x8x1xf32> -> vector<2x8x1xf32>
    %358 = vector.broadcast %357 : vector<2x8x1xf32> to vector<2x8x8xf32>
    %359 = arith.mulf %354, %358 : vector<2x8x8xf32>
    %360 = arith.truncf %359 : vector<2x8x8xf32> to vector<2x8x8xbf16>
    "tpu.trace_start"() <{level = 10 : i32, message = "bqk,bkd->bqd"}> : () -> ()
    %cst_199 = arith.constant dense<0.000000e+00> : vector<2x8x8xf32>
    %361 = tpu.matmul %360, %346, %cst_199 {dimension_numbers = #tpu.dot_dimension_numbers<[2], [1], [1], [2], [0, 0, 0, 1, 1, 2], [0], [0]>} : vector<2x8x8xbf16>, vector<2x8x8xbf16>, vector<2x8x8xf32> -> vector<2x8x8xf32>
    "tpu.trace_stop"() : () -> ()
    %362 = vector.shape_cast %361 : vector<2x8x8xf32> to vector<16x8xf32>
    %363 = arith.truncf %362 : vector<16x8xf32> to vector<16x8xbf16>
    %c4_200 = arith.constant 4 : index
    %c0_201 = arith.constant 0 : index
    %c0_202 = arith.constant 0 : index
    %364 = vector.load %arg11[%c4_200, %c0_201, %c0_202] : memref<8x8x32xbf16, #tpu.memory_space<vmem>>, vector<1x8x32xbf16>
    %365 = vector.shape_cast %364 : vector<1x8x32xbf16> to vector<8x32xbf16>
    %cst_203 = arith.constant dense<0.000000e+00> : vector<16x32xf32>
    %366 = tpu.matmul %363, %365, %cst_203 {dimension_numbers = #tpu.dot_dimension_numbers<[1], [0], [0], [1], [0, 0, 1, 1], [], []>} : vector<16x8xbf16>, vector<8x32xbf16>, vector<16x32xf32> -> vector<16x32xf32>
    %367 = arith.addf %317, %366 : vector<16x32xf32>
    %c5 = arith.constant 5 : index
    %c0_204 = arith.constant 0 : index
    %c0_205 = arith.constant 0 : index
    %368 = vector.load %arg5[%c5, %c0_204, %c0_205] : memref<8x32x8xbf16, #tpu.memory_space<vmem>>, vector<1x32x8xbf16>
    %369 = vector.shape_cast %368 : vector<1x32x8xbf16> to vector<32x8xbf16>
    %cst_206 = arith.constant dense<0.000000e+00> : vector<16x8xf32>
    %370 = tpu.matmul %316, %369, %cst_206 {dimension_numbers = #tpu.dot_dimension_numbers<[1], [0], [0], [1], [0, 0, 1, 1], [], []>} : vector<16x32xbf16>, vector<32x8xbf16>, vector<16x8xf32> -> vector<16x8xf32>
    %c5_207 = arith.constant 5 : index
    %c0_208 = arith.constant 0 : index
    %c0_209 = arith.constant 0 : index
    %371 = vector.load %arg6[%c5_207, %c0_208, %c0_209] : memref<8x1x8xf32, #tpu.memory_space<vmem>>, vector<1x1x8xf32>
    %372 = vector.shape_cast %371 : vector<1x1x8xf32> to vector<1x8xf32>
    %373 = vector.broadcast %372 : vector<1x8xf32> to vector<16x8xf32>
    %374 = arith.addf %370, %373 : vector<16x8xf32>
    %cst_210 = arith.constant 0.353553385 : f32
    %375 = vector.broadcast %cst_210 : f32 to vector<16x8xf32>
    %376 = arith.mulf %374, %375 : vector<16x8xf32>
    %c5_211 = arith.constant 5 : index
    %c0_212 = arith.constant 0 : index
    %c0_213 = arith.constant 0 : index
    %377 = vector.load %arg7[%c5_211, %c0_212, %c0_213] : memref<8x32x8xbf16, #tpu.memory_space<vmem>>, vector<1x32x8xbf16>
    %378 = vector.shape_cast %377 : vector<1x32x8xbf16> to vector<32x8xbf16>
    %cst_214 = arith.constant dense<0.000000e+00> : vector<16x8xf32>
    %379 = tpu.matmul %316, %378, %cst_214 {dimension_numbers = #tpu.dot_dimension_numbers<[1], [0], [0], [1], [0, 0, 1, 1], [], []>} : vector<16x32xbf16>, vector<32x8xbf16>, vector<16x8xf32> -> vector<16x8xf32>
    %c5_215 = arith.constant 5 : index
    %c0_216 = arith.constant 0 : index
    %c0_217 = arith.constant 0 : index
    %380 = vector.load %arg8[%c5_215, %c0_216, %c0_217] : memref<8x1x8xf32, #tpu.memory_space<vmem>>, vector<1x1x8xf32>
    %381 = vector.shape_cast %380 : vector<1x1x8xf32> to vector<1x8xf32>
    %382 = vector.broadcast %381 : vector<1x8xf32> to vector<16x8xf32>
    %383 = arith.addf %379, %382 : vector<16x8xf32>
    %c5_218 = arith.constant 5 : index
    %c0_219 = arith.constant 0 : index
    %c0_220 = arith.constant 0 : index
    %384 = vector.load %arg9[%c5_218, %c0_219, %c0_220] : memref<8x32x8xbf16, #tpu.memory_space<vmem>>, vector<1x32x8xbf16>
    %385 = vector.shape_cast %384 : vector<1x32x8xbf16> to vector<32x8xbf16>
    %cst_221 = arith.constant dense<0.000000e+00> : vector<16x8xf32>
    %386 = tpu.matmul %316, %385, %cst_221 {dimension_numbers = #tpu.dot_dimension_numbers<[1], [0], [0], [1], [0, 0, 1, 1], [], []>} : vector<16x32xbf16>, vector<32x8xbf16>, vector<16x8xf32> -> vector<16x8xf32>
    %c5_222 = arith.constant 5 : index
    %c0_223 = arith.constant 0 : index
    %c0_224 = arith.constant 0 : index
    %387 = vector.load %arg10[%c5_222, %c0_223, %c0_224] : memref<8x1x8xf32, #tpu.memory_space<vmem>>, vector<1x1x8xf32>
    %388 = vector.shape_cast %387 : vector<1x1x8xf32> to vector<1x8xf32>
    %389 = vector.broadcast %388 : vector<1x8xf32> to vector<16x8xf32>
    %390 = arith.addf %386, %389 : vector<16x8xf32>
    %391 = vector.shape_cast %376 : vector<16x8xf32> to vector<2x8x8xf32>
    %392 = arith.truncf %391 : vector<2x8x8xf32> to vector<2x8x8xbf16>
    %393 = vector.shape_cast %383 : vector<16x8xf32> to vector<2x8x8xf32>
    %394 = arith.truncf %393 : vector<2x8x8xf32> to vector<2x8x8xbf16>
    %395 = vector.shape_cast %390 : vector<16x8xf32> to vector<2x8x8xf32>
    %396 = arith.truncf %395 : vector<2x8x8xf32> to vector<2x8x8xbf16>
    "tpu.trace_start"() <{level = 10 : i32, message = "bqd,bkd->bqk"}> : () -> ()
    %cst_225 = arith.constant dense<0.000000e+00> : vector<2x8x8xf32>
    %397 = tpu.matmul %392, %394, %cst_225 {dimension_numbers = #tpu.dot_dimension_numbers<[2], [2], [1], [1], [0, 0, 0, 1, 1, 1], [0], [0]>} : vector<2x8x8xbf16>, vector<2x8x8xbf16>, vector<2x8x8xf32> -> vector<2x8x8xf32>
    "tpu.trace_stop"() : () -> ()
    %398 = vector.broadcast %26 : vector<2x1x8xf32> to vector<2x8x8xf32>
    %399 = arith.addf %397, %398 : vector<2x8x8xf32>
    %cst_226 = arith.constant dense<0xFF800000> : vector<2x8xf32>
    %400 = vector.multi_reduction <maximumf>, %399, %cst_226 [2] : vector<2x8x8xf32> to vector<2x8xf32>
    %401 = vector.shape_cast %400 : vector<2x8xf32> to vector<2x8x1xf32>
    %402 = vector.broadcast %401 : vector<2x8x1xf32> to vector<2x8x8xf32>
    %403 = arith.subf %399, %402 : vector<2x8x8xf32>
    %404 = math.exp %403 : vector<2x8x8xf32>
    %cst_227 = arith.constant dense<0.000000e+00> : vector<2x8xf32>
    %405 = vector.multi_reduction <add>, %404, %cst_227 [2] : vector<2x8x8xf32> to vector<2x8xf32>
    %406 = vector.shape_cast %405 : vector<2x8xf32> to vector<2x8x1xf32>
    %407 = tpu.reciprocal %406 {approx = true} : vector<2x8x1xf32> -> vector<2x8x1xf32>
    %408 = vector.broadcast %407 : vector<2x8x1xf32> to vector<2x8x8xf32>
    %409 = arith.mulf %404, %408 : vector<2x8x8xf32>
    %410 = arith.truncf %409 : vector<2x8x8xf32> to vector<2x8x8xbf16>
    "tpu.trace_start"() <{level = 10 : i32, message = "bqk,bkd->bqd"}> : () -> ()
    %cst_228 = arith.constant dense<0.000000e+00> : vector<2x8x8xf32>
    %411 = tpu.matmul %410, %396, %cst_228 {dimension_numbers = #tpu.dot_dimension_numbers<[2], [1], [1], [2], [0, 0, 0, 1, 1, 2], [0], [0]>} : vector<2x8x8xbf16>, vector<2x8x8xbf16>, vector<2x8x8xf32> -> vector<2x8x8xf32>
    "tpu.trace_stop"() : () -> ()
    %412 = vector.shape_cast %411 : vector<2x8x8xf32> to vector<16x8xf32>
    %413 = arith.truncf %412 : vector<16x8xf32> to vector<16x8xbf16>
    %c5_229 = arith.constant 5 : index
    %c0_230 = arith.constant 0 : index
    %c0_231 = arith.constant 0 : index
    %414 = vector.load %arg11[%c5_229, %c0_230, %c0_231] : memref<8x8x32xbf16, #tpu.memory_space<vmem>>, vector<1x8x32xbf16>
    %415 = vector.shape_cast %414 : vector<1x8x32xbf16> to vector<8x32xbf16>
    %cst_232 = arith.constant dense<0.000000e+00> : vector<16x32xf32>
    %416 = tpu.matmul %413, %415, %cst_232 {dimension_numbers = #tpu.dot_dimension_numbers<[1], [0], [0], [1], [0, 0, 1, 1], [], []>} : vector<16x8xbf16>, vector<8x32xbf16>, vector<16x32xf32> -> vector<16x32xf32>
    %417 = arith.addf %367, %416 : vector<16x32xf32>
    %c6 = arith.constant 6 : index
    %c0_233 = arith.constant 0 : index
    %c0_234 = arith.constant 0 : index
    %418 = vector.load %arg5[%c6, %c0_233, %c0_234] : memref<8x32x8xbf16, #tpu.memory_space<vmem>>, vector<1x32x8xbf16>
    %419 = vector.shape_cast %418 : vector<1x32x8xbf16> to vector<32x8xbf16>
    %cst_235 = arith.constant dense<0.000000e+00> : vector<16x8xf32>
    %420 = tpu.matmul %316, %419, %cst_235 {dimension_numbers = #tpu.dot_dimension_numbers<[1], [0], [0], [1], [0, 0, 1, 1], [], []>} : vector<16x32xbf16>, vector<32x8xbf16>, vector<16x8xf32> -> vector<16x8xf32>
    %c6_236 = arith.constant 6 : index
    %c0_237 = arith.constant 0 : index
    %c0_238 = arith.constant 0 : index
    %421 = vector.load %arg6[%c6_236, %c0_237, %c0_238] : memref<8x1x8xf32, #tpu.memory_space<vmem>>, vector<1x1x8xf32>
    %422 = vector.shape_cast %421 : vector<1x1x8xf32> to vector<1x8xf32>
    %423 = vector.broadcast %422 : vector<1x8xf32> to vector<16x8xf32>
    %424 = arith.addf %420, %423 : vector<16x8xf32>
    %cst_239 = arith.constant 0.353553385 : f32
    %425 = vector.broadcast %cst_239 : f32 to vector<16x8xf32>
    %426 = arith.mulf %424, %425 : vector<16x8xf32>
    %c6_240 = arith.constant 6 : index
    %c0_241 = arith.constant 0 : index
    %c0_242 = arith.constant 0 : index
    %427 = vector.load %arg7[%c6_240, %c0_241, %c0_242] : memref<8x32x8xbf16, #tpu.memory_space<vmem>>, vector<1x32x8xbf16>
    %428 = vector.shape_cast %427 : vector<1x32x8xbf16> to vector<32x8xbf16>
    %cst_243 = arith.constant dense<0.000000e+00> : vector<16x8xf32>
    %429 = tpu.matmul %316, %428, %cst_243 {dimension_numbers = #tpu.dot_dimension_numbers<[1], [0], [0], [1], [0, 0, 1, 1], [], []>} : vector<16x32xbf16>, vector<32x8xbf16>, vector<16x8xf32> -> vector<16x8xf32>
    %c6_244 = arith.constant 6 : index
    %c0_245 = arith.constant 0 : index
    %c0_246 = arith.constant 0 : index
    %430 = vector.load %arg8[%c6_244, %c0_245, %c0_246] : memref<8x1x8xf32, #tpu.memory_space<vmem>>, vector<1x1x8xf32>
    %431 = vector.shape_cast %430 : vector<1x1x8xf32> to vector<1x8xf32>
    %432 = vector.broadcast %431 : vector<1x8xf32> to vector<16x8xf32>
    %433 = arith.addf %429, %432 : vector<16x8xf32>
    %c6_247 = arith.constant 6 : index
    %c0_248 = arith.constant 0 : index
    %c0_249 = arith.constant 0 : index
    %434 = vector.load %arg9[%c6_247, %c0_248, %c0_249] : memref<8x32x8xbf16, #tpu.memory_space<vmem>>, vector<1x32x8xbf16>
    %435 = vector.shape_cast %434 : vector<1x32x8xbf16> to vector<32x8xbf16>
    %cst_250 = arith.constant dense<0.000000e+00> : vector<16x8xf32>
    %436 = tpu.matmul %316, %435, %cst_250 {dimension_numbers = #tpu.dot_dimension_numbers<[1], [0], [0], [1], [0, 0, 1, 1], [], []>} : vector<16x32xbf16>, vector<32x8xbf16>, vector<16x8xf32> -> vector<16x8xf32>
    %c6_251 = arith.constant 6 : index
    %c0_252 = arith.constant 0 : index
    %c0_253 = arith.constant 0 : index
    %437 = vector.load %arg10[%c6_251, %c0_252, %c0_253] : memref<8x1x8xf32, #tpu.memory_space<vmem>>, vector<1x1x8xf32>
    %438 = vector.shape_cast %437 : vector<1x1x8xf32> to vector<1x8xf32>
    %439 = vector.broadcast %438 : vector<1x8xf32> to vector<16x8xf32>
    %440 = arith.addf %436, %439 : vector<16x8xf32>
    %441 = vector.shape_cast %426 : vector<16x8xf32> to vector<2x8x8xf32>
    %442 = arith.truncf %441 : vector<2x8x8xf32> to vector<2x8x8xbf16>
    %443 = vector.shape_cast %433 : vector<16x8xf32> to vector<2x8x8xf32>
    %444 = arith.truncf %443 : vector<2x8x8xf32> to vector<2x8x8xbf16>
    %445 = vector.shape_cast %440 : vector<16x8xf32> to vector<2x8x8xf32>
    %446 = arith.truncf %445 : vector<2x8x8xf32> to vector<2x8x8xbf16>
    "tpu.trace_start"() <{level = 10 : i32, message = "bqd,bkd->bqk"}> : () -> ()
    %cst_254 = arith.constant dense<0.000000e+00> : vector<2x8x8xf32>
    %447 = tpu.matmul %442, %444, %cst_254 {dimension_numbers = #tpu.dot_dimension_numbers<[2], [2], [1], [1], [0, 0, 0, 1, 1, 1], [0], [0]>} : vector<2x8x8xbf16>, vector<2x8x8xbf16>, vector<2x8x8xf32> -> vector<2x8x8xf32>
    "tpu.trace_stop"() : () -> ()
    %448 = vector.broadcast %26 : vector<2x1x8xf32> to vector<2x8x8xf32>
    %449 = arith.addf %447, %448 : vector<2x8x8xf32>
    %cst_255 = arith.constant dense<0xFF800000> : vector<2x8xf32>
    %450 = vector.multi_reduction <maximumf>, %449, %cst_255 [2] : vector<2x8x8xf32> to vector<2x8xf32>
    %451 = vector.shape_cast %450 : vector<2x8xf32> to vector<2x8x1xf32>
    %452 = vector.broadcast %451 : vector<2x8x1xf32> to vector<2x8x8xf32>
    %453 = arith.subf %449, %452 : vector<2x8x8xf32>
    %454 = math.exp %453 : vector<2x8x8xf32>
    %cst_256 = arith.constant dense<0.000000e+00> : vector<2x8xf32>
    %455 = vector.multi_reduction <add>, %454, %cst_256 [2] : vector<2x8x8xf32> to vector<2x8xf32>
    %456 = vector.shape_cast %455 : vector<2x8xf32> to vector<2x8x1xf32>
    %457 = tpu.reciprocal %456 {approx = true} : vector<2x8x1xf32> -> vector<2x8x1xf32>
    %458 = vector.broadcast %457 : vector<2x8x1xf32> to vector<2x8x8xf32>
    %459 = arith.mulf %454, %458 : vector<2x8x8xf32>
    %460 = arith.truncf %459 : vector<2x8x8xf32> to vector<2x8x8xbf16>
    "tpu.trace_start"() <{level = 10 : i32, message = "bqk,bkd->bqd"}> : () -> ()
    %cst_257 = arith.constant dense<0.000000e+00> : vector<2x8x8xf32>
    %461 = tpu.matmul %460, %446, %cst_257 {dimension_numbers = #tpu.dot_dimension_numbers<[2], [1], [1], [2], [0, 0, 0, 1, 1, 2], [0], [0]>} : vector<2x8x8xbf16>, vector<2x8x8xbf16>, vector<2x8x8xf32> -> vector<2x8x8xf32>
    "tpu.trace_stop"() : () -> ()
    %462 = vector.shape_cast %461 : vector<2x8x8xf32> to vector<16x8xf32>
    %463 = arith.truncf %462 : vector<16x8xf32> to vector<16x8xbf16>
    %c6_258 = arith.constant 6 : index
    %c0_259 = arith.constant 0 : index
    %c0_260 = arith.constant 0 : index
    %464 = vector.load %arg11[%c6_258, %c0_259, %c0_260] : memref<8x8x32xbf16, #tpu.memory_space<vmem>>, vector<1x8x32xbf16>
    %465 = vector.shape_cast %464 : vector<1x8x32xbf16> to vector<8x32xbf16>
    %cst_261 = arith.constant dense<0.000000e+00> : vector<16x32xf32>
    %466 = tpu.matmul %463, %465, %cst_261 {dimension_numbers = #tpu.dot_dimension_numbers<[1], [0], [0], [1], [0, 0, 1, 1], [], []>} : vector<16x8xbf16>, vector<8x32xbf16>, vector<16x32xf32> -> vector<16x32xf32>
    %467 = arith.addf %417, %466 : vector<16x32xf32>
    %c7 = arith.constant 7 : index
    %c0_262 = arith.constant 0 : index
    %c0_263 = arith.constant 0 : index
    %468 = vector.load %arg5[%c7, %c0_262, %c0_263] : memref<8x32x8xbf16, #tpu.memory_space<vmem>>, vector<1x32x8xbf16>
    %469 = vector.shape_cast %468 : vector<1x32x8xbf16> to vector<32x8xbf16>
    %cst_264 = arith.constant dense<0.000000e+00> : vector<16x8xf32>
    %470 = tpu.matmul %316, %469, %cst_264 {dimension_numbers = #tpu.dot_dimension_numbers<[1], [0], [0], [1], [0, 0, 1, 1], [], []>} : vector<16x32xbf16>, vector<32x8xbf16>, vector<16x8xf32> -> vector<16x8xf32>
    %c7_265 = arith.constant 7 : index
    %c0_266 = arith.constant 0 : index
    %c0_267 = arith.constant 0 : index
    %471 = vector.load %arg6[%c7_265, %c0_266, %c0_267] : memref<8x1x8xf32, #tpu.memory_space<vmem>>, vector<1x1x8xf32>
    %472 = vector.shape_cast %471 : vector<1x1x8xf32> to vector<1x8xf32>
    %473 = vector.broadcast %472 : vector<1x8xf32> to vector<16x8xf32>
    %474 = arith.addf %470, %473 : vector<16x8xf32>
    %cst_268 = arith.constant 0.353553385 : f32
    %475 = vector.broadcast %cst_268 : f32 to vector<16x8xf32>
    %476 = arith.mulf %474, %475 : vector<16x8xf32>
    %c7_269 = arith.constant 7 : index
    %c0_270 = arith.constant 0 : index
    %c0_271 = arith.constant 0 : index
    %477 = vector.load %arg7[%c7_269, %c0_270, %c0_271] : memref<8x32x8xbf16, #tpu.memory_space<vmem>>, vector<1x32x8xbf16>
    %478 = vector.shape_cast %477 : vector<1x32x8xbf16> to vector<32x8xbf16>
    %cst_272 = arith.constant dense<0.000000e+00> : vector<16x8xf32>
    %479 = tpu.matmul %316, %478, %cst_272 {dimension_numbers = #tpu.dot_dimension_numbers<[1], [0], [0], [1], [0, 0, 1, 1], [], []>} : vector<16x32xbf16>, vector<32x8xbf16>, vector<16x8xf32> -> vector<16x8xf32>
    %c7_273 = arith.constant 7 : index
    %c0_274 = arith.constant 0 : index
    %c0_275 = arith.constant 0 : index
    %480 = vector.load %arg8[%c7_273, %c0_274, %c0_275] : memref<8x1x8xf32, #tpu.memory_space<vmem>>, vector<1x1x8xf32>
    %481 = vector.shape_cast %480 : vector<1x1x8xf32> to vector<1x8xf32>
    %482 = vector.broadcast %481 : vector<1x8xf32> to vector<16x8xf32>
    %483 = arith.addf %479, %482 : vector<16x8xf32>
    %c7_276 = arith.constant 7 : index
    %c0_277 = arith.constant 0 : index
    %c0_278 = arith.constant 0 : index
    %484 = vector.load %arg9[%c7_276, %c0_277, %c0_278] : memref<8x32x8xbf16, #tpu.memory_space<vmem>>, vector<1x32x8xbf16>
    %485 = vector.shape_cast %484 : vector<1x32x8xbf16> to vector<32x8xbf16>
    %cst_279 = arith.constant dense<0.000000e+00> : vector<16x8xf32>
    %486 = tpu.matmul %316, %485, %cst_279 {dimension_numbers = #tpu.dot_dimension_numbers<[1], [0], [0], [1], [0, 0, 1, 1], [], []>} : vector<16x32xbf16>, vector<32x8xbf16>, vector<16x8xf32> -> vector<16x8xf32>
    %c7_280 = arith.constant 7 : index
    %c0_281 = arith.constant 0 : index
    %c0_282 = arith.constant 0 : index
    %487 = vector.load %arg10[%c7_280, %c0_281, %c0_282] : memref<8x1x8xf32, #tpu.memory_space<vmem>>, vector<1x1x8xf32>
    %488 = vector.shape_cast %487 : vector<1x1x8xf32> to vector<1x8xf32>
    %489 = vector.broadcast %488 : vector<1x8xf32> to vector<16x8xf32>
    %490 = arith.addf %486, %489 : vector<16x8xf32>
    %491 = vector.shape_cast %476 : vector<16x8xf32> to vector<2x8x8xf32>
    %492 = arith.truncf %491 : vector<2x8x8xf32> to vector<2x8x8xbf16>
    %493 = vector.shape_cast %483 : vector<16x8xf32> to vector<2x8x8xf32>
    %494 = arith.truncf %493 : vector<2x8x8xf32> to vector<2x8x8xbf16>
    %495 = vector.shape_cast %490 : vector<16x8xf32> to vector<2x8x8xf32>
    %496 = arith.truncf %495 : vector<2x8x8xf32> to vector<2x8x8xbf16>
    "tpu.trace_start"() <{level = 10 : i32, message = "bqd,bkd->bqk"}> : () -> ()
    %cst_283 = arith.constant dense<0.000000e+00> : vector<2x8x8xf32>
    %497 = tpu.matmul %492, %494, %cst_283 {dimension_numbers = #tpu.dot_dimension_numbers<[2], [2], [1], [1], [0, 0, 0, 1, 1, 1], [0], [0]>} : vector<2x8x8xbf16>, vector<2x8x8xbf16>, vector<2x8x8xf32> -> vector<2x8x8xf32>
    "tpu.trace_stop"() : () -> ()
    %498 = vector.broadcast %26 : vector<2x1x8xf32> to vector<2x8x8xf32>
    %499 = arith.addf %497, %498 : vector<2x8x8xf32>
    %cst_284 = arith.constant dense<0xFF800000> : vector<2x8xf32>
    %500 = vector.multi_reduction <maximumf>, %499, %cst_284 [2] : vector<2x8x8xf32> to vector<2x8xf32>
    %501 = vector.shape_cast %500 : vector<2x8xf32> to vector<2x8x1xf32>
    %502 = vector.broadcast %501 : vector<2x8x1xf32> to vector<2x8x8xf32>
    %503 = arith.subf %499, %502 : vector<2x8x8xf32>
    %504 = math.exp %503 : vector<2x8x8xf32>
    %cst_285 = arith.constant dense<0.000000e+00> : vector<2x8xf32>
    %505 = vector.multi_reduction <add>, %504, %cst_285 [2] : vector<2x8x8xf32> to vector<2x8xf32>
    %506 = vector.shape_cast %505 : vector<2x8xf32> to vector<2x8x1xf32>
    %507 = tpu.reciprocal %506 {approx = true} : vector<2x8x1xf32> -> vector<2x8x1xf32>
    %508 = vector.broadcast %507 : vector<2x8x1xf32> to vector<2x8x8xf32>
    %509 = arith.mulf %504, %508 : vector<2x8x8xf32>
    %510 = arith.truncf %509 : vector<2x8x8xf32> to vector<2x8x8xbf16>
    "tpu.trace_start"() <{level = 10 : i32, message = "bqk,bkd->bqd"}> : () -> ()
    %cst_286 = arith.constant dense<0.000000e+00> : vector<2x8x8xf32>
    %511 = tpu.matmul %510, %496, %cst_286 {dimension_numbers = #tpu.dot_dimension_numbers<[2], [1], [1], [2], [0, 0, 0, 1, 1, 2], [0], [0]>} : vector<2x8x8xbf16>, vector<2x8x8xbf16>, vector<2x8x8xf32> -> vector<2x8x8xf32>
    "tpu.trace_stop"() : () -> ()
    %512 = vector.shape_cast %511 : vector<2x8x8xf32> to vector<16x8xf32>
    %513 = arith.truncf %512 : vector<16x8xf32> to vector<16x8xbf16>
    %c7_287 = arith.constant 7 : index
    %c0_288 = arith.constant 0 : index
    %c0_289 = arith.constant 0 : index
    %514 = vector.load %arg11[%c7_287, %c0_288, %c0_289] : memref<8x8x32xbf16, #tpu.memory_space<vmem>>, vector<1x8x32xbf16>
    %515 = vector.shape_cast %514 : vector<1x8x32xbf16> to vector<8x32xbf16>
    %cst_290 = arith.constant dense<0.000000e+00> : vector<16x32xf32>
    %516 = tpu.matmul %513, %515, %cst_290 {dimension_numbers = #tpu.dot_dimension_numbers<[1], [0], [0], [1], [0, 0, 1, 1], [], []>} : vector<16x8xbf16>, vector<8x32xbf16>, vector<16x32xf32> -> vector<16x32xf32>
    %517 = arith.addf %467, %516 : vector<16x32xf32>
    %c1_291 = arith.constant 1 : index
    %c0_292 = arith.constant 0 : index
    %c0_293 = arith.constant 0 : index
    %518 = vector.load %arg12[%c1_291, %c0_292, %c0_293] : memref<2x1x32xf32, #tpu.memory_space<vmem>>, vector<1x1x32xf32>
    %519 = vector.shape_cast %518 : vector<1x1x32xf32> to vector<1x32xf32>
    %520 = vector.broadcast %519 : vector<1x32xf32> to vector<16x32xf32>
    %521 = arith.addf %517, %520 : vector<16x32xf32>
    %522 = arith.addf %315, %521 : vector<16x32xf32>
    %c1_294 = arith.constant 1 : index
    %c0_295 = arith.constant 0 : index
    %c0_296 = arith.constant 0 : index
    %523 = vector.load %arg13[%c1_294, %c0_295, %c0_296] : memref<2x1x32xf32, #tpu.memory_space<vmem>>, vector<1x1x32xf32>
    %524 = vector.shape_cast %523 : vector<1x1x32xf32> to vector<1x32xf32>
    %c1_297 = arith.constant 1 : index
    %c0_298 = arith.constant 0 : index
    %c0_299 = arith.constant 0 : index
    %525 = vector.load %arg14[%c1_297, %c0_298, %c0_299] : memref<2x1x32xf32, #tpu.memory_space<vmem>>, vector<1x1x32xf32>
    %526 = vector.shape_cast %525 : vector<1x1x32xf32> to vector<1x32xf32>
    %cst_300 = arith.constant dense<0.000000e+00> : vector<16xf32>
    %527 = vector.multi_reduction <add>, %522, %cst_300 [1] : vector<16x32xf32> to vector<16xf32>
    %528 = vector.shape_cast %527 : vector<16xf32> to vector<16x1xf32>
    %cst_301 = arith.constant 3.200000e+01 : f32
    %529 = vector.broadcast %cst_301 : f32 to vector<16x1xf32>
    %530 = arith.divf %528, %529 : vector<16x1xf32>
    %531 = vector.broadcast %530 : vector<16x1xf32> to vector<16x32xf32>
    %532 = arith.subf %522, %531 : vector<16x32xf32>
    %533 = arith.mulf %532, %532 : vector<16x32xf32>
    %cst_302 = arith.constant dense<0.000000e+00> : vector<16xf32>
    %534 = vector.multi_reduction <add>, %533, %cst_302 [1] : vector<16x32xf32> to vector<16xf32>
    %535 = vector.shape_cast %534 : vector<16xf32> to vector<16x1xf32>
    %cst_303 = arith.constant 3.200000e+01 : f32
    %536 = vector.broadcast %cst_303 : f32 to vector<16x1xf32>
    %537 = arith.divf %535, %536 : vector<16x1xf32>
    %538 = vector.broadcast %530 : vector<16x1xf32> to vector<16x32xf32>
    %539 = arith.subf %522, %538 : vector<16x32xf32>
    %cst_304 = arith.constant 9.99999996E-13 : f32
    %540 = vector.broadcast %cst_304 : f32 to vector<16x1xf32>
    %541 = arith.addf %537, %540 : vector<16x1xf32>
    %542 = math.rsqrt %541 : vector<16x1xf32>
    %543 = vector.broadcast %542 : vector<16x1xf32> to vector<16x32xf32>
    %544 = arith.mulf %539, %543 : vector<16x32xf32>
    %545 = vector.broadcast %524 : vector<1x32xf32> to vector<16x32xf32>
    %546 = arith.mulf %544, %545 : vector<16x32xf32>
    %547 = vector.broadcast %526 : vector<1x32xf32> to vector<16x32xf32>
    %548 = arith.addf %546, %547 : vector<16x32xf32>
    %549 = arith.truncf %548 : vector<16x32xf32> to vector<16x32xbf16>
    %c1_305 = arith.constant 1 : index
    %c0_306 = arith.constant 0 : index
    %c0_307 = arith.constant 0 : index
    %550 = vector.load %arg15[%c1_305, %c0_306, %c0_307] : memref<2x32x64xbf16, #tpu.memory_space<vmem>>, vector<1x32x64xbf16>
    %551 = vector.shape_cast %550 : vector<1x32x64xbf16> to vector<32x64xbf16>
    %cst_308 = arith.constant dense<0.000000e+00> : vector<16x64xf32>
    %552 = tpu.matmul %549, %551, %cst_308 {dimension_numbers = #tpu.dot_dimension_numbers<[1], [0], [0], [1], [0, 0, 1, 1], [], []>} : vector<16x32xbf16>, vector<32x64xbf16>, vector<16x64xf32> -> vector<16x64xf32>
    %c1_309 = arith.constant 1 : index
    %c0_310 = arith.constant 0 : index
    %c0_311 = arith.constant 0 : index
    %553 = vector.load %arg16[%c1_309, %c0_310, %c0_311] : memref<2x1x64xf32, #tpu.memory_space<vmem>>, vector<1x1x64xf32>
    %554 = vector.shape_cast %553 : vector<1x1x64xf32> to vector<1x64xf32>
    %555 = vector.broadcast %554 : vector<1x64xf32> to vector<16x64xf32>
    %556 = arith.addf %552, %555 : vector<16x64xf32>
    %cst_312 = arith.constant 5.000000e-01 : f32
    %557 = vector.broadcast %cst_312 : f32 to vector<16x64xf32>
    %558 = arith.mulf %557, %556 : vector<16x64xf32>
    %cst_313 = arith.constant 4.471500e-02 : f32
    %559 = vector.broadcast %cst_313 : f32 to vector<16x64xf32>
    %560 = arith.mulf %559, %556 : vector<16x64xf32>
    %561 = arith.mulf %560, %556 : vector<16x64xf32>
    %562 = arith.mulf %561, %556 : vector<16x64xf32>
    %563 = arith.addf %556, %562 : vector<16x64xf32>
    %cst_314 = arith.constant 0.797884583 : f32
    %564 = vector.broadcast %cst_314 : f32 to vector<16x64xf32>
    %565 = arith.mulf %564, %563 : vector<16x64xf32>
    %566 = math.tanh %565 : vector<16x64xf32>
    %cst_315 = arith.constant 1.000000e+00 : f32
    %567 = vector.broadcast %cst_315 : f32 to vector<16x64xf32>
    %568 = arith.addf %567, %566 : vector<16x64xf32>
    %569 = arith.mulf %558, %568 : vector<16x64xf32>
    %570 = arith.truncf %569 : vector<16x64xf32> to vector<16x64xbf16>
    %c1_316 = arith.constant 1 : index
    %c0_317 = arith.constant 0 : index
    %c0_318 = arith.constant 0 : index
    %571 = vector.load %arg17[%c1_316, %c0_317, %c0_318] : memref<2x64x32xbf16, #tpu.memory_space<vmem>>, vector<1x64x32xbf16>
    %572 = vector.shape_cast %571 : vector<1x64x32xbf16> to vector<64x32xbf16>
    %cst_319 = arith.constant dense<0.000000e+00> : vector<16x32xf32>
    %573 = tpu.matmul %570, %572, %cst_319 {dimension_numbers = #tpu.dot_dimension_numbers<[1], [0], [0], [1], [0, 0, 1, 1], [], []>} : vector<16x64xbf16>, vector<64x32xbf16>, vector<16x32xf32> -> vector<16x32xf32>
    %c1_320 = arith.constant 1 : index
    %c0_321 = arith.constant 0 : index
    %c0_322 = arith.constant 0 : index
    %574 = vector.load %arg18[%c1_320, %c0_321, %c0_322] : memref<2x1x32xf32, #tpu.memory_space<vmem>>, vector<1x1x32xf32>
    %575 = vector.shape_cast %574 : vector<1x1x32xf32> to vector<1x32xf32>
    %576 = vector.broadcast %575 : vector<1x32xf32> to vector<16x32xf32>
    %577 = arith.addf %573, %576 : vector<16x32xf32>
    %578 = arith.addf %548, %577 : vector<16x32xf32>
    %c1_323 = arith.constant 1 : index
    %c0_324 = arith.constant 0 : index
    %c0_325 = arith.constant 0 : index
    %579 = vector.load %arg19[%c1_323, %c0_324, %c0_325] : memref<2x1x32xf32, #tpu.memory_space<vmem>>, vector<1x1x32xf32>
    %580 = vector.shape_cast %579 : vector<1x1x32xf32> to vector<1x32xf32>
    %c1_326 = arith.constant 1 : index
    %c0_327 = arith.constant 0 : index
    %c0_328 = arith.constant 0 : index
    %581 = vector.load %arg20[%c1_326, %c0_327, %c0_328] : memref<2x1x32xf32, #tpu.memory_space<vmem>>, vector<1x1x32xf32>
    %582 = vector.shape_cast %581 : vector<1x1x32xf32> to vector<1x32xf32>
    %cst_329 = arith.constant dense<0.000000e+00> : vector<16xf32>
    %583 = vector.multi_reduction <add>, %578, %cst_329 [1] : vector<16x32xf32> to vector<16xf32>
    %584 = vector.shape_cast %583 : vector<16xf32> to vector<16x1xf32>
    %cst_330 = arith.constant 3.200000e+01 : f32
    %585 = vector.broadcast %cst_330 : f32 to vector<16x1xf32>
    %586 = arith.divf %584, %585 : vector<16x1xf32>
    %587 = vector.broadcast %586 : vector<16x1xf32> to vector<16x32xf32>
    %588 = arith.subf %578, %587 : vector<16x32xf32>
    %589 = arith.mulf %588, %588 : vector<16x32xf32>
    %cst_331 = arith.constant dense<0.000000e+00> : vector<16xf32>
    %590 = vector.multi_reduction <add>, %589, %cst_331 [1] : vector<16x32xf32> to vector<16xf32>
    %591 = vector.shape_cast %590 : vector<16xf32> to vector<16x1xf32>
    %cst_332 = arith.constant 3.200000e+01 : f32
    %592 = vector.broadcast %cst_332 : f32 to vector<16x1xf32>
    %593 = arith.divf %591, %592 : vector<16x1xf32>
    %594 = vector.broadcast %586 : vector<16x1xf32> to vector<16x32xf32>
    %595 = arith.subf %578, %594 : vector<16x32xf32>
    %cst_333 = arith.constant 9.99999996E-13 : f32
    %596 = vector.broadcast %cst_333 : f32 to vector<16x1xf32>
    %597 = arith.addf %593, %596 : vector<16x1xf32>
    %598 = math.rsqrt %597 : vector<16x1xf32>
    %599 = vector.broadcast %598 : vector<16x1xf32> to vector<16x32xf32>
    %600 = arith.mulf %595, %599 : vector<16x32xf32>
    %601 = vector.broadcast %580 : vector<1x32xf32> to vector<16x32xf32>
    %602 = arith.mulf %600, %601 : vector<16x32xf32>
    %603 = vector.broadcast %582 : vector<1x32xf32> to vector<16x32xf32>
    %604 = arith.addf %602, %603 : vector<16x32xf32>
    %605 = vector.shape_cast %604 : vector<16x32xf32> to vector<2x8x32xf32>
    %606 = vector.extract_strided_slice %605 {offsets = [0, 0, 0], sizes = [2, 1, 32], strides = [1, 1, 1]} : vector<2x8x32xf32> to vector<2x1x32xf32>
    %607 = vector.shape_cast %606 : vector<2x1x32xf32> to vector<2x32xf32>
    %608 = arith.truncf %607 : vector<2x32xf32> to vector<2x32xbf16>
    %c0_334 = arith.constant 0 : index
    %c0_335 = arith.constant 0 : index
    %609 = vector.load %arg21[%c0_334, %c0_335] : memref<32x32xbf16, #tpu.memory_space<vmem>>, vector<32x32xbf16>
    %cst_336 = arith.constant dense<0.000000e+00> : vector<2x32xf32>
    %610 = tpu.matmul %608, %609, %cst_336 {dimension_numbers = #tpu.dot_dimension_numbers<[1], [0], [0], [1], [0, 0, 1, 1], [], []>} : vector<2x32xbf16>, vector<32x32xbf16>, vector<2x32xf32> -> vector<2x32xf32>
    %c0_337 = arith.constant 0 : index
    %c0_338 = arith.constant 0 : index
    %611 = vector.load %arg22[%c0_337, %c0_338] : memref<1x32xf32, #tpu.memory_space<vmem>>, vector<1x32xf32>
    %612 = vector.broadcast %611 : vector<1x32xf32> to vector<2x32xf32>
    %613 = arith.addf %610, %612 : vector<2x32xf32>
    %614 = math.tanh %613 : vector<2x32xf32>
    %c0_339 = arith.constant 0 : index
    %c0_340 = arith.constant 0 : index
    %615 = vector.load %arg23[%c0_339, %c0_340] : memref<2x32xf32, #tpu.memory_space<vmem>>, vector<2x32xf32>
    tpu.vector_store %arg23[%c0_339, %c0_340], %614 {strides = array<i32>} : memref<2x32xf32, #tpu.memory_space<vmem>>, vector<2x32xf32>,
    return
  }
  func.func @transform_0(%arg0: i32) -> (i32, i32, i32) {
    %c0_i32 = arith.constant 0 : i32
    %c0_i32_0 = arith.constant 0 : i32
    %c0_i32_1 = arith.constant 0 : i32
    %c0_i32_2 = arith.constant 0 : i32
    return %c0_i32, %c0_i32_0, %c0_i32_1 : i32, i32, i32
  }
  func.func @transform_1(%arg0: i32) -> (i32, i32, i32) {
    %c0_i32 = arith.constant 0 : i32
    %c0_i32_0 = arith.constant 0 : i32
    %c0_i32_1 = arith.constant 0 : i32
    %c0_i32_2 = arith.constant 0 : i32
    return %c0_i32, %c0_i32_0, %c0_i32_1 : i32, i32, i32
  }
  func.func @transform_2(%arg0: i32) -> (i32, i32) {
    %c0_i32 = arith.constant 0 : i32
    %c0_i32_0 = arith.constant 0 : i32
    %c0_i32_1 = arith.constant 0 : i32
    return %c0_i32, %c0_i32_0 : i32, i32
  }
  func.func @transform_3(%arg0: i32) -> (i32, i32) {
    %c0_i32 = arith.constant 0 : i32
    %c0_i32_0 = arith.constant 0 : i32
    %c0_i32_1 = arith.constant 0 : i32
    return %c0_i32, %c0_i32_0 : i32, i32
  }
  func.func @transform_4(%arg0: i32) -> (i32, i32, i32) {
    %c0_i32 = arith.constant 0 : i32
    %c0_i32_0 = arith.constant 0 : i32
    %c0_i32_1 = arith.constant 0 : i32
    %c0_i32_2 = arith.constant 0 : i32
    return %c0_i32, %c0_i32_0, %c0_i32_1 : i32, i32, i32
  }
  func.func @transform_5(%arg0: i32) -> (i32, i32, i32) {
    %c0_i32 = arith.constant 0 : i32
    %c0_i32_0 = arith.constant 0 : i32
    %c0_i32_1 = arith.constant 0 : i32
    %c0_i32_2 = arith.constant 0 : i32
    return %c0_i32, %c0_i32_0, %c0_i32_1 : i32, i32, i32
  }
  func.func @transform_6(%arg0: i32) -> (i32, i32, i32) {
    %c0_i32 = arith.constant 0 : i32
    %c0_i32_0 = arith.constant 0 : i32
    %c0_i32_1 = arith.constant 0 : i32
    %c0_i32_2 = arith.constant 0 : i32
    return %c0_i32, %c0_i32_0, %c0_i32_1 : i32, i32, i32
  }
  func.func @transform_7(%arg0: i32) -> (i32, i32, i32) {
    %c0_i32 = arith.constant 0 : i32
    %c0_i32_0 = arith.constant 0 : i32
    %c0_i32_1 = arith.constant 0 : i32
    %c0_i32_2 = arith.constant 0 : i32
    return %c0_i32, %c0_i32_0, %c0_i32_1 : i32, i32, i32
  }
  func.func @transform_8(%arg0: i32) -> (i32, i32, i32) {
    %c0_i32 = arith.constant 0 : i32
    %c0_i32_0 = arith.constant 0 : i32
    %c0_i32_1 = arith.constant 0 : i32
    %c0_i32_2 = arith.constant 0 : i32
    return %c0_i32, %c0_i32_0, %c0_i32_1 : i32, i32, i32
  }
  func.func @transform_9(%arg0: i32) -> (i32, i32, i32) {
    %c0_i32 = arith.constant 0 : i32
    %c0_i32_0 = arith.constant 0 : i32
    %c0_i32_1 = arith.constant 0 : i32
    %c0_i32_2 = arith.constant 0 : i32
    return %c0_i32, %c0_i32_0, %c0_i32_1 : i32, i32, i32
  }
  func.func @transform_10(%arg0: i32) -> (i32, i32, i32) {
    %c0_i32 = arith.constant 0 : i32
    %c0_i32_0 = arith.constant 0 : i32
    %c0_i32_1 = arith.constant 0 : i32
    %c0_i32_2 = arith.constant 0 : i32
    return %c0_i32, %c0_i32_0, %c0_i32_1 : i32, i32, i32
  }
  func.func @transform_11(%arg0: i32) -> (i32, i32, i32) {
    %c0_i32 = arith.constant 0 : i32
    %c0_i32_0 = arith.constant 0 : i32
    %c0_i32_1 = arith.constant 0 : i32
    %c0_i32_2 = arith.constant 0 : i32
    return %c0_i32, %c0_i32_0, %c0_i32_1 : i32, i32, i32
  }
  func.func @transform_12(%arg0: i32) -> (i32, i32, i32) {
    %c0_i32 = arith.constant 0 : i32
    %c0_i32_0 = arith.constant 0 : i32
    %c0_i32_1 = arith.constant 0 : i32
    %c0_i32_2 = arith.constant 0 : i32
    return %c0_i32, %c0_i32_0, %c0_i32_1 : i32, i32, i32
  }
  func.func @transform_13(%arg0: i32) -> (i32, i32, i32) {
    %c0_i32 = arith.constant 0 : i32
    %c0_i32_0 = arith.constant 0 : i32
    %c0_i32_1 = arith.constant 0 : i32
    %c0_i32_2 = arith.constant 0 : i32
    return %c0_i32, %c0_i32_0, %c0_i32_1 : i32, i32, i32
  }
  func.func @transform_14(%arg0: i32) -> (i32, i32, i32) {
    %c0_i32 = arith.constant 0 : i32
    %c0_i32_0 = arith.constant 0 : i32
    %c0_i32_1 = arith.constant 0 : i32
    %c0_i32_2 = arith.constant 0 : i32
    return %c0_i32, %c0_i32_0, %c0_i32_1 : i32, i32, i32
  }
  func.func @transform_15(%arg0: i32) -> (i32, i32, i32) {
    %c0_i32 = arith.constant 0 : i32
    %c0_i32_0 = arith.constant 0 : i32
    %c0_i32_1 = arith.constant 0 : i32
    %c0_i32_2 = arith.constant 0 : i32
    return %c0_i32, %c0_i32_0, %c0_i32_1 : i32, i32, i32
  }
  func.func @transform_16(%arg0: i32) -> (i32, i32, i32) {
    %c0_i32 = arith.constant 0 : i32
    %c0_i32_0 = arith.constant 0 : i32
    %c0_i32_1 = arith.constant 0 : i32
    %c0_i32_2 = arith.constant 0 : i32
    return %c0_i32, %c0_i32_0, %c0_i32_1 : i32, i32, i32
  }
  func.func @transform_17(%arg0: i32) -> (i32, i32, i32) {
    %c0_i32 = arith.constant 0 : i32
    %c0_i32_0 = arith.constant 0 : i32
    %c0_i32_1 = arith.constant 0 : i32
    %c0_i32_2 = arith.constant 0 : i32
    return %c0_i32, %c0_i32_0, %c0_i32_1 : i32, i32, i32
  }
  func.func @transform_18(%arg0: i32) -> (i32, i32, i32) {
    %c0_i32 = arith.constant 0 : i32
    %c0_i32_0 = arith.constant 0 : i32
    %c0_i32_1 = arith.constant 0 : i32
    %c0_i32_2 = arith.constant 0 : i32
    return %c0_i32, %c0_i32_0, %c0_i32_1 : i32, i32, i32
  }
  func.func @transform_19(%arg0: i32) -> (i32, i32, i32) {
    %c0_i32 = arith.constant 0 : i32
    %c0_i32_0 = arith.constant 0 : i32
    %c0_i32_1 = arith.constant 0 : i32
    %c0_i32_2 = arith.constant 0 : i32
    return %c0_i32, %c0_i32_0, %c0_i32_1 : i32, i32, i32
  }
  func.func @transform_20(%arg0: i32) -> (i32, i32) {
    %c0_i32 = arith.constant 0 : i32
    %c0_i32_0 = arith.constant 0 : i32
    %c0_i32_1 = arith.constant 0 : i32
    return %c0_i32, %c0_i32_0 : i32, i32
  }
  func.func @transform_21(%arg0: i32) -> (i32, i32) {
    %c0_i32 = arith.constant 0 : i32
    %c0_i32_0 = arith.constant 0 : i32
    %c0_i32_1 = arith.constant 0 : i32
    return %c0_i32, %c0_i32_0 : i32, i32
  }
  func.func @transform_22(%arg0: i32) -> (i32, i32) {
    %c0_i32 = arith.constant 0 : i32
    %c0_i32_0 = arith.constant 0 : i32
    %c0_i32_1 = arith.constant 0 : i32
    return %c0_i32, %c0_i32_0 : i32, i32
  }
}

</mosaic_0001>

<llo_original>
// kernel: tpu_custom_call.1
$region0: #{tpu_custom_call.1}
  #allocation0 [shape = 'u32[]', space=smem, size = 0x4, offset = 0x4, fixed_abs, tag = 'smem constant byte address 0x4 - core index']
  #allocation1 [shape = 'u32[144,128]{1,0:T(1,128)}', space=vmem, size = 0x12000, scoped, tag = 'internal scratch']
  %s0 = inlined_call_operand.vmem [shape: f32[2,8,32], index: 0, kind: input, shape index: {}]
  %s1 = inlined_call_operand.vmem [shape: f32[2,1,8], index: 1, kind: input, shape index: {}]
  %s2 = inlined_call_operand.vmem [shape: f32[1,32], index: 2, kind: input, shape index: {}]
  %s3 = inlined_call_operand.vmem [shape: f32[1,32], index: 3, kind: input, shape index: {}]
  %s4 = inlined_call_operand.vmem [shape: bf16[8,32,8], index: 4, kind: input, shape index: {}]
  %s5 = inlined_call_operand.vmem [shape: f32[8,1,8], index: 5, kind: input, shape index: {}]
  %s6 = inlined_call_operand.vmem [shape: bf16[8,32,8], index: 6, kind: input, shape index: {}]
  %s7 = inlined_call_operand.vmem [shape: f32[8,1,8], index: 7, kind: input, shape index: {}]
  %s8 = inlined_call_operand.vmem [shape: bf16[8,32,8], index: 8, kind: input, shape index: {}]
  %s9 = inlined_call_operand.vmem [shape: f32[8,1,8], index: 9, kind: input, shape index: {}]
  %s10 = inlined_call_operand.vmem [shape: bf16[8,8,32], index: 10, kind: input, shape index: {}]
  %s11 = inlined_call_operand.vmem [shape: f32[2,1,32], index: 11, kind: input, shape index: {}]
  %s12 = inlined_call_operand.vmem [shape: f32[2,1,32], index: 12, kind: input, shape index: {}]
  %s13 = inlined_call_operand.vmem [shape: f32[2,1,32], index: 13, kind: input, shape index: {}]
  %s14 = inlined_call_operand.vmem [shape: bf16[2,32,64], index: 14, kind: input, shape index: {}]
  %s15 = inlined_call_operand.vmem [shape: f32[2,1,64], index: 15, kind: input, shape index: {}]
  %s16 = inlined_call_operand.vmem [shape: bf16[2,64,32], index: 16, kind: input, shape index: {}]
  %s17 = inlined_call_operand.vmem [shape: f32[2,1,32], index: 17, kind: input, shape index: {}]
  %s18 = inlined_call_operand.vmem [shape: f32[2,1,32], index: 18, kind: input, shape index: {}]
  %s19 = inlined_call_operand.vmem [shape: f32[2,1,32], index: 19, kind: input, shape index: {}]
  %s20 = inlined_call_operand.vmem [shape: bf16[32,32], index: 20, kind: input, shape index: {}]
  %s21 = inlined_call_operand.vmem [shape: f32[1,32], index: 21, kind: input, shape index: {}]
  %s22 = inlined_call_operand.hbm [shape: f32[2,32], index: 22, kind: output, shape index: {}]
  %s23 = sld [smem:[#allocation0]]
  $region98: #{tpu_custom_call.1} parent=0
    _
  %s25 = ssub.s32 1, %s23
  %s26 = scalar_select 0, %s25, %s23
  $region1: #{tpu_custom_call.1} parent=0
    #allocation2 [shape = 'u8[1024]{0}', space=vmem, size = 0x400, scoped, tag = 'output window, operand 0, single buffered']
    #allocation3 [shape = 's32[1]{0}', space=sflag, size = 0x4, scoped, tag = 'scoped memory for tpu_custom_call.1']
    %27 = vsyncpa [#allocation3], 0
    // Predicated region
    $region2: #{tpu_custom_call.1} parent=1 // pred_check
      _
    $region3: #{tpu_custom_call.1} parent=1 // pred_check_branch
      %29 = sbr.rel (0) target = $region5
    $region4: #{tpu_custom_call.1} parent=1 // pred_region
      _
    $region5: #{tpu_custom_call.1} parent=1 // pred_fallthru
      _
    // Predicated region
    $region6: #{tpu_custom_call.1} parent=1 // pred_check
      _
    $region7: #{tpu_custom_call.1} parent=1 // pred_check_branch
      %31 = sbr.rel (0) target = $region9
    $region8: #{tpu_custom_call.1} parent=1 // pred_region
      _
    $region9: #{tpu_custom_call.1} parent=1 // pred_fallthru
      _
    // Predicated region
    $region10: #{tpu_custom_call.1} parent=1 // pred_check
      _
    $region11: #{tpu_custom_call.1} parent=1 // pred_check_branch
      %33 = sbr.rel (0) target = $region13
    $region12: #{tpu_custom_call.1} parent=1 // pred_region
      _
    $region13: #{tpu_custom_call.1} parent=1 // pred_fallthru
      _
    // Predicated region
    $region14: #{tpu_custom_call.1} parent=1 // pred_check
      _
    $region15: #{tpu_custom_call.1} parent=1 // pred_check_branch
      %35 = sbr.rel (0) target = $region17
    $region16: #{tpu_custom_call.1} parent=1 // pred_region
      _
    $region17: #{tpu_custom_call.1} parent=1 // pred_fallthru
      _
    // Predicated region
    $region18: #{tpu_custom_call.1} parent=1 // pred_check
      _
    $region19: #{tpu_custom_call.1} parent=1 // pred_check_branch
      %37 = sbr.rel (0) target = $region21
    $region20: #{tpu_custom_call.1} parent=1 // pred_region
      _
    $region21: #{tpu_custom_call.1} parent=1 // pred_fallthru
      _
    // Predicated region
    $region22: #{tpu_custom_call.1} parent=1 // pred_check
      _
    $region23: #{tpu_custom_call.1} parent=1 // pred_check_branch
      %39 = sbr.rel (0) target = $region25
    $region24: #{tpu_custom_call.1} parent=1 // pred_region
      _
    $region25: #{tpu_custom_call.1} parent=1 // pred_fallthru
      _
    // Predicated region
    $region26: #{tpu_custom_call.1} parent=1 // pred_check
      _
    $region27: #{tpu_custom_call.1} parent=1 // pred_check_branch
      %41 = sbr.rel (0) target = $region29
    $region28: #{tpu_custom_call.1} parent=1 // pred_region
      _
    $region29: #{tpu_custom_call.1} parent=1 // pred_fallthru
      _
    // Predicated region
    $region30: #{tpu_custom_call.1} parent=1 // pred_check
      _
    $region31: #{tpu_custom_call.1} parent=1 // pred_check_branch
      %43 = sbr.rel (0) target = $region33
    $region32: #{tpu_custom_call.1} parent=1 // pred_region
      _
    $region33: #{tpu_custom_call.1} parent=1 // pred_fallthru
      _
    // Predicated region
    $region34: #{tpu_custom_call.1} parent=1 // pred_check
      _
    $region35: #{tpu_custom_call.1} parent=1 // pred_check_branch
      %45 = sbr.rel (0) target = $region37
    $region36: #{tpu_custom_call.1} parent=1 // pred_region
      _
    $region37: #{tpu_custom_call.1} parent=1 // pred_fallthru
      _
    // Predicated region
    $region38: #{tpu_custom_call.1} parent=1 // pred_check
      _
    $region39: #{tpu_custom_call.1} parent=1 // pred_check_branch
      %47 = sbr.rel (0) target = $region41
    $region40: #{tpu_custom_call.1} parent=1 // pred_region
      _
    $region41: #{tpu_custom_call.1} parent=1 // pred_fallthru
      _
    // Predicated region
    $region42: #{tpu_custom_call.1} parent=1 // pred_check
      _
    $region43: #{tpu_custom_call.1} parent=1 // pred_check_branch
      %49 = sbr.rel (0) target = $region45
    $region44: #{tpu_custom_call.1} parent=1 // pred_region
      _
    $region45: #{tpu_custom_call.1} parent=1 // pred_fallthru
      _
    // Predicated region
    $region46: #{tpu_custom_call.1} parent=1 // pred_check
      _
    $region47: #{tpu_custom_call.1} parent=1 // pred_check_branch
      %51 = sbr.rel (0) target = $region49
    $region48: #{tpu_custom_call.1} parent=1 // pred_region
      _
    $region49: #{tpu_custom_call.1} parent=1 // pred_fallthru
      _
    // Predicated region
    $region50: #{tpu_custom_call.1} parent=1 // pred_check
      _
    $region51: #{tpu_custom_call.1} parent=1 // pred_check_branch
      %53 = sbr.rel (0) target = $region53
    $region52: #{tpu_custom_call.1} parent=1 // pred_region
      _
    $region53: #{tpu_custom_call.1} parent=1 // pred_fallthru
      _
    // Predicated region
    $region54: #{tpu_custom_call.1} parent=1 // pred_check
      _
    $region55: #{tpu_custom_call.1} parent=1 // pred_check_branch
      %55 = sbr.rel (0) target = $region57
    $region56: #{tpu_custom_call.1} parent=1 // pred_region
      _
    $region57: #{tpu_custom_call.1} parent=1 // pred_fallthru
      _
    // Predicated region
    $region58: #{tpu_custom_call.1} parent=1 // pred_check
      _
    $region59: #{tpu_custom_call.1} parent=1 // pred_check_branch
      %57 = sbr.rel (0) target = $region61
    $region60: #{tpu_custom_call.1} parent=1 // pred_region
      _
    $region61: #{tpu_custom_call.1} parent=1 // pred_fallthru
      _
    // Predicated region
    $region62: #{tpu_custom_call.1} parent=1 // pred_check
      _
    $region63: #{tpu_custom_call.1} parent=1 // pred_check_branch
      %59 = sbr.rel (0) target = $region65
    $region64: #{tpu_custom_call.1} parent=1 // pred_region
      _
    $region65: #{tpu_custom_call.1} parent=1 // pred_fallthru
      _
    // Predicated region
    $region66: #{tpu_custom_call.1} parent=1 // pred_check
      _
    $region67: #{tpu_custom_call.1} parent=1 // pred_check_branch
      %61 = sbr.rel (0) target = $region69
    $region68: #{tpu_custom_call.1} parent=1 // pred_region
      _
    $region69: #{tpu_custom_call.1} parent=1 // pred_fallthru
      _
    // Predicated region
    $region70: #{tpu_custom_call.1} parent=1 // pred_check
      _
    $region71: #{tpu_custom_call.1} parent=1 // pred_check_branch
      %63 = sbr.rel (0) target = $region73
    $region72: #{tpu_custom_call.1} parent=1 // pred_region
      _
    $region73: #{tpu_custom_call.1} parent=1 // pred_fallthru
      _
    // Predicated region
    $region74: #{tpu_custom_call.1} parent=1 // pred_check
      _
    $region75: #{tpu_custom_call.1} parent=1 // pred_check_branch
      %65 = sbr.rel (0) target = $region77
    $region76: #{tpu_custom_call.1} parent=1 // pred_region
      _
    $region77: #{tpu_custom_call.1} parent=1 // pred_fallthru
      _
    // Predicated region
    $region78: #{tpu_custom_call.1} parent=1 // pred_check
      _
    $region79: #{tpu_custom_call.1} parent=1 // pred_check_branch
      %67 = sbr.rel (0) target = $region81
    $region80: #{tpu_custom_call.1} parent=1 // pred_region
      _
    $region81: #{tpu_custom_call.1} parent=1 // pred_fallthru
      _
    // Predicated region
    $region82: #{tpu_custom_call.1} parent=1 // pred_check
      _
    $region83: #{tpu_custom_call.1} parent=1 // pred_check_branch
      %69 = sbr.rel (0) target = $region85
    $region84: #{tpu_custom_call.1} parent=1 // pred_region
      _
    $region85: #{tpu_custom_call.1} parent=1 // pred_fallthru
      _
    // Predicated region
    $region86: #{tpu_custom_call.1} parent=1 // pred_check
      _
    $region87: #{tpu_custom_call.1} parent=1 // pred_check_branch
      %71 = sbr.rel (0) target = $region89
    $region88: #{tpu_custom_call.1} parent=1 // pred_region
      _
    $region89: #{tpu_custom_call.1} parent=1 // pred_fallthru
      _
    %v73 = vld [vmem:[%s0] sm:$0xff]
    %v74 = vld [vmem:[%s0 + $0x8] sm:$0xff]
    %v75 = vld [vmem:[%s2] sm:$0x1]
    %v76 = vld [vmem:[%s3] sm:$0x1]
    %vm77 = vcmask 261120
    %v78 = vsel %vm77, %v73, 0.0
    %79 = vadd.xlane.f32.xlu0 %v78
    %v80 = vpop.xlane.xlu0 %79
    %v81 = vsel %vm77, %v74, 0.0
    %82 = vadd.xlane.f32.xlu0 %v81
    %v83 = vpop.xlane.xlu0 %82
    %v84 = vrcp.pop 32.0
    %v85 = vmul.f32 %v80, %v84
    %v86 = vmul.f32 %v83, %v84
    %v87 = vsub.f32 %v73, %v85
    %v88 = vsub.f32 %v74, %v86
    %v89 = vmul.f32 %v87, %v87
    %v90 = vmul.f32 %v88, %v88
    %v91 = vsel %vm77, %v89, 0.0
    %92 = vadd.xlane.f32.xlu0 %v91
    %v93 = vpop.xlane.xlu0 %92
    %v94 = vsel %vm77, %v90, 0.0
    %95 = vadd.xlane.f32.xlu0 %v94
    %v96 = vpop.xlane.xlu0 %95
    %v97 = vmul.f32 %v93, %v84
    %v98 = vmul.f32 %v96, %v84
    %v99 = vadd.f32 %v97, 1e-12
    %v100 = vadd.f32 %v98, 1e-12
    %v101 = vrsqrt.pop %v99
    %v102 = vrsqrt.pop %v100
    %v103 = vmul.f32 %v87, %v101
    %v104 = vmul.f32 %v88, %v102
    %v106 = vlaneseq
    %v107 = vshrl.u32 %v106, 7
    %v108 = vsub.s32 0, %v107
    %v109 = vrot.slane %v75, %v108
    %v111 = vmul.f32 %v103, %v109
    %v112 = vmul.f32 %v104, %v109
    %v114 = vlaneseq
    %v115 = vshrl.u32 %v114, 7
    %v116 = vsub.s32 0, %v115
    %v117 = vrot.slane %v76, %v116
    %v119 = vadd.f32 %v111, %v117
    %v120 = vadd.f32 %v112, %v117
    %v121 = vld [vmem:[%s1] sm:$0x1]
    %v122 = vld [vmem:[%s1 + $0x1] sm:$0x1]
    %v123 = vpack.c.bf16 %v120, %v119
    %v124 = vld [vmem:[%s4] sm:$0xf]
    %v125 = vld [vmem:[%s4 + $0x4] sm:$0xf]
    %v126 = vld [vmem:[%s4 + $0x8] sm:$0xf]
    %v127 = vld [vmem:[%s4 + $0xc] sm:$0xf]
    %v128 = vld [vmem:[%s5] sm:$0x1]
    %v130 = vlaneseq
    %v131 = vshrl.u32 %v130, 7
    %v132 = vsub.s32 0, %v131
    %v133 = vrot.slane %v128, %v132
    %v139 = vunpack.c.l.b16 %v124
    %v140 = vunpack.c.l.b16 %v125
    %v141 = vunpack.c.l.b16 %v126
    %v142 = vunpack.c.l.b16 %v127
    %v143 = vpack.c.b16 %v140, %v139
    %v144 = vpack.c.b16 %v142, %v141
    %v148 = vsel %vm77, %v123, 0
    %150 = vmatprep.subr.bf16.mxu0 0
    %151 = vmatpush1.bf16.msra.mxu0 %v143
    %152 = vmatprep.subr.bf16.mxu0 0
    %153 = vmatpush1.bf16.msra.mxu0 %v144
    %154 = vmatprep.subr.bf16.mxu0 0
    %155 = vmatpush1.bf16.msra.mxu0 0
    %156 = vmatprep.subr.bf16.mxu0 0
    %157 = vmatpush1.bf16.msra.mxu0 0
    %158 = vmatprep.subr.bf16.mxu0 0
    %159 = vmatpush1.bf16.msra.mxu0 0
    %160 = vmatprep.subr.bf16.mxu0 0
    %161 = vmatpush1.bf16.msra.mxu0 0
    %162 = vmatprep.subr.bf16.mxu0 0
    %163 = vmatpush1.bf16.msra.mxu0 0
    %164 = vmatprep.subr.bf16.mxu0 0
    %165 = vmatpush1.bf16.msra.mxu0 0
    %166 = vmatprep.subr.bf16.mxu0 0
    %167 = vmatpush1.bf16.msra.mxu0 0
    %168 = vmatprep.subr.bf16.mxu0 0
    %169 = vmatpush1.bf16.msra.mxu0 0
    %170 = vmatprep.subr.bf16.mxu0 0
    %171 = vmatpush1.bf16.msra.mxu0 0
    %172 = vmatprep.subr.bf16.mxu0 0
    %173 = vmatpush1.bf16.msra.mxu0 0
    %174 = vmatprep.subr.bf16.mxu0 0
    %175 = vmatpush1.bf16.msra.mxu0 0
    %176 = vmatprep.subr.bf16.mxu0 0
    %177 = vmatpush1.bf16.msra.mxu0 0
    %178 = vmatprep.subr.bf16.mxu0 0
    %179 = vmatpush1.bf16.msra.mxu0 0
    %180 = vmatprep.subr.bf16.mxu0 0
    %181 = vmatpush1.bf16.msra.mxu0 0
    %182 = vmatprep.mubr.bf16.mxu0 0
    %183 = vmatmul.mubr.bf16.gmra.mrb[0].mxu0 %v148
    %v184 = vpop.f32.mrb[0].mxu0
    %v185 = vadd.f32 %v133, %v184
    %v186 = vpop.f32.mrb[0].mxu0
    %v187 = vpop.f32.mrb[0].mxu0
    %v188 = vadd.f32 %v133, %v187
    %v189 = vpop.f32.mrb[0].mxu0
    %190 = vdwg.mxu0
    %v191 = vmul.f32 %v185, 0.35355338
    %v192 = vmul.f32 %v188, 0.35355338
    %v193 = vld [vmem:[%s6] sm:$0xf]
    %v194 = vld [vmem:[%s6 + $0x4] sm:$0xf]
    %v195 = vld [vmem:[%s6 + $0x8] sm:$0xf]
    %v196 = vld [vmem:[%s6 + $0xc] sm:$0xf]
    %v197 = vld [vmem:[%s7] sm:$0x1]
    %v199 = vlaneseq
    %v200 = vshrl.u32 %v199, 7
    %v201 = vsub.s32 0, %v200
    %v202 = vrot.slane %v197, %v201
    %v208 = vunpack.c.l.b16 %v193
    %v209 = vunpack.c.l.b16 %v194
    %v210 = vunpack.c.l.b16 %v195
    %v211 = vunpack.c.l.b16 %v196
    %v212 = vpack.c.b16 %v209, %v208
    %v213 = vpack.c.b16 %v211, %v210
    %216 = vmatprep.subr.bf16.mxu0 0
    %217 = vmatpush1.bf16.msra.mxu0 %v212
    %218 = vmatprep.subr.bf16.mxu0 0
    %219 = vmatpush1.bf16.msra.mxu0 %v213
    %220 = vmatprep.subr.bf16.mxu0 0
    %221 = vmatpush1.bf16.msra.mxu0 0
    %222 = vmatprep.subr.bf16.mxu0 0
    %223 = vmatpush1.bf16.msra.mxu0 0
    %224 = vmatprep.subr.bf16.mxu0 0
    %225 = vmatpush1.bf16.msra.mxu0 0
    %226 = vmatprep.subr.bf16.mxu0 0
    %227 = vmatpush1.bf16.msra.mxu0 0
    %228 = vmatprep.subr.bf16.mxu0 0
    %229 = vmatpush1.bf16.msra.mxu0 0
    %230 = vmatprep.subr.bf16.mxu0 0
    %231 = vmatpush1.bf16.msra.mxu0 0
    %232 = vmatprep.subr.bf16.mxu0 0
    %233 = vmatpush1.bf16.msra.mxu0 0
    %234 = vmatprep.subr.bf16.mxu0 0
    %235 = vmatpush1.bf16.msra.mxu0 0
    %236 = vmatprep.subr.bf16.mxu0 0
    %237 = vmatpush1.bf16.msra.mxu0 0
    %238 = vmatprep.subr.bf16.mxu0 0
    %239 = vmatpush1.bf16.msra.mxu0 0
    %240 = vmatprep.subr.bf16.mxu0 0
    %241 = vmatpush1.bf16.msra.mxu0 0
    %242 = vmatprep.subr.bf16.mxu0 0
    %243 = vmatpush1.bf16.msra.mxu0 0
    %244 = vmatprep.subr.bf16.mxu0 0
    %245 = vmatpush1.bf16.msra.mxu0 0
    %246 = vmatprep.subr.bf16.mxu0 0
    %247 = vmatpush1.bf16.msra.mxu0 0
    %248 = vmatprep.mubr.bf16.mxu0 0
    %249 = vmatmul.mubr.bf16.gmra.mrb[0].mxu0 %v148
    %v250 = vpop.f32.mrb[0].mxu0
    %v251 = vadd.f32 %v202, %v250
    %v252 = vpop.f32.mrb[0].mxu0
    %v253 = vpop.f32.mrb[0].mxu0
    %v254 = vadd.f32 %v202, %v253
    %v255 = vpop.f32.mrb[0].mxu0
    %256 = vdwg.mxu0
    %v257 = vld [vmem:[%s8] sm:$0xf]
    %v258 = vld [vmem:[%s8 + $0x4] sm:$0xf]
    %v259 = vld [vmem:[%s8 + $0x8] sm:$0xf]
    %v260 = vld [vmem:[%s8 + $0xc] sm:$0xf]
    %v261 = vld [vmem:[%s9] sm:$0x1]
    %v263 = vlaneseq
    %v264 = vshrl.u32 %v263, 7
    %v265 = vsub.s32 0, %v264
    %v266 = vrot.slane %v261, %v265
    %v272 = vunpack.c.l.b16 %v257
    %v273 = vunpack.c.l.b16 %v258
    %v274 = vunpack.c.l.b16 %v259
    %v275 = vunpack.c.l.b16 %v260
    %v276 = vpack.c.b16 %v273, %v272
    %v277 = vpack.c.b16 %v275, %v274
    %280 = vmatprep.subr.bf16.mxu0 0
    %281 = vmatpush1.bf16.msra.mxu0 %v276
    %282 = vmatprep.subr.bf16.mxu0 0
    %283 = vmatpush1.bf16.msra.mxu0 %v277
    %284 = vmatprep.subr.bf16.mxu0 0
    %285 = vmatpush1.bf16.msra.mxu0 0
    %286 = vmatprep.subr.bf16.mxu0 0
    %287 = vmatpush1.bf16.msra.mxu0 0
    %288 = vmatprep.subr.bf16.mxu0 0
    %289 = vmatpush1.bf16.msra.mxu0 0
    %290 = vmatprep.subr.bf16.mxu0 0
    %291 = vmatpush1.bf16.msra.mxu0 0
    %292 = vmatprep.subr.bf16.mxu0 0
    %293 = vmatpush1.bf16.msra.mxu0 0
    %294 = vmatprep.subr.bf16.mxu0 0
    %295 = vmatpush1.bf16.msra.mxu0 0
    %296 = vmatprep.subr.bf16.mxu0 0
    %297 = vmatpush1.bf16.msra.mxu0 0
    %298 = vmatprep.subr.bf16.mxu0 0
    %299 = vmatpush1.bf16.msra.mxu0 0
    %300 = vmatprep.subr.bf16.mxu0 0
    %301 = vmatpush1.bf16.msra.mxu0 0
    %302 = vmatprep.subr.bf16.mxu0 0
    %303 = vmatpush1.bf16.msra.mxu0 0
    %304 = vmatprep.subr.bf16.mxu0 0
    %305 = vmatpush1.bf16.msra.mxu0 0
    %306 = vmatprep.subr.bf16.mxu0 0
    %307 = vmatpush1.bf16.msra.mxu0 0
    %308 = vmatprep.subr.bf16.mxu0 0
    %309 = vmatpush1.bf16.msra.mxu0 0
    %310 = vmatprep.subr.bf16.mxu0 0
    %311 = vmatpush1.bf16.msra.mxu0 0
    %312 = vmatprep.mubr.bf16.mxu0 0
    %313 = vmatmul.mubr.bf16.gmra.mrb[0].mxu0 %v148
    %v314 = vpop.f32.mrb[0].mxu0
    %v315 = vadd.f32 %v266, %v314
    %v316 = vpop.f32.mrb[0].mxu0
    %v317 = vpop.f32.mrb[0].mxu0
    %v318 = vadd.f32 %v266, %v317
    %v319 = vpop.f32.mrb[0].mxu0
    %320 = vdwg.mxu0
    %v321 = vpack.c.bf16 %v191, %v191
    %v322 = vpack.c.bf16 %v192, %v192
    %v323 = vpack.c.bf16 %v251, %v251
    %v324 = vpack.c.bf16 %v254, %v254
    %v325 = vpack.c.bf16 %v315, %v315
    %v326 = vpack.c.bf16 %v318, %v318
    %v329 = vlaneseq
    %v330 = vshrl.u32 %v329, 7
    %v331 = vsub.s32 0, %v330
    %v332 = vrot.slane %v121, %v331
    %v333 = vlaneseq
    %v334 = vshrl.u32 %v333, 7
    %v335 = vsub.s32 0, %v334
    %v336 = vrot.slane %v122, %v335
    %vm339 = vcmask 64512
    %v341 = vsel %vm339, %v321, 0
    %v344 = vsel %vm339, %v323, 0
    %346 = vmatprep.subr.bf16.mxu0 0
    %347 = vmatpush1.bf16.xpose.msra.mxu0 %v344
    %348 = vmatprep.subr.bf16.mxu0 0
    %349 = vmatpush1.bf16.xpose.msra.mxu0 0
    %350 = vmatprep.subr.bf16.mxu0 0
    %351 = vmatpush1.bf16.xpose.msra.mxu0 0
    %352 = vmatprep.subr.bf16.mxu0 0
    %353 = vmatpush1.bf16.xpose.msra.mxu0 0
    %354 = vmatprep.subr.bf16.mxu0 0
    %355 = vmatpush1.bf16.xpose.msra.mxu0 0
    %356 = vmatprep.subr.bf16.mxu0 0
    %357 = vmatpush1.bf16.xpose.msra.mxu0 0
    %358 = vmatprep.subr.bf16.mxu0 0
    %359 = vmatpush1.bf16.xpose.msra.mxu0 0
    %360 = vmatprep.subr.bf16.mxu0 0
    %361 = vmatpush1.bf16.xpose.msra.mxu0 0
    %362 = vmatprep.subr.bf16.mxu0 0
    %363 = vmatpush1.bf16.xpose.msra.mxu0 0
    %364 = vmatprep.subr.bf16.mxu0 0
    %365 = vmatpush1.bf16.xpose.msra.mxu0 0
    %366 = vmatprep.subr.bf16.mxu0 0
    %367 = vmatpush1.bf16.xpose.msra.mxu0 0
    %368 = vmatprep.subr.bf16.mxu0 0
    %369 = vmatpush1.bf16.xpose.msra.mxu0 0
    %370 = vmatprep.subr.bf16.mxu0 0
    %371 = vmatpush1.bf16.xpose.msra.mxu0 0
    %372 = vmatprep.subr.bf16.mxu0 0
    %373 = vmatpush1.bf16.xpose.msra.mxu0 0
    %374 = vmatprep.subr.bf16.mxu0 0
    %375 = vmatpush1.bf16.xpose.msra.mxu0 0
    %376 = vmatprep.subr.bf16.mxu0 0
    %377 = vmatpush1.bf16.xpose.msra.mxu0 0
    %378 = vmatprep.mubr.bf16.mxu0 0
    %379 = vmatmul.mubr.bf16.gmra.mrb[0].mxu0 %v341
    %v380 = vpop.f32.mrb[0].mxu0
    %v381 = vadd.f32 %v332, %v380
    %v382 = vpop.f32.mrb[0].mxu0
    %v383 = vpop.f32.mrb[0].mxu0
    %v384 = vpop.f32.mrb[0].mxu0
    %385 = vdwg.mxu0
    %v387 = vsel %vm339, %v322, 0
    %v390 = vsel %vm339, %v324, 0
    %392 = vmatprep.subr.bf16.mxu0 0
    %393 = vmatpush1.bf16.xpose.msra.mxu0 %v390
    %394 = vmatprep.subr.bf16.mxu0 0
    %395 = vmatpush1.bf16.xpose.msra.mxu0 0
    %396 = vmatprep.subr.bf16.mxu0 0
    %397 = vmatpush1.bf16.xpose.msra.mxu0 0
    %398 = vmatprep.subr.bf16.mxu0 0
    %399 = vmatpush1.bf16.xpose.msra.mxu0 0
    %400 = vmatprep.subr.bf16.mxu0 0
    %401 = vmatpush1.bf16.xpose.msra.mxu0 0
    %402 = vmatprep.subr.bf16.mxu0 0
    %403 = vmatpush1.bf16.xpose.msra.mxu0 0
    %404 = vmatprep.subr.bf16.mxu0 0
    %405 = vmatpush1.bf16.xpose.msra.mxu0 0
    %406 = vmatprep.subr.bf16.mxu0 0
    %407 = vmatpush1.bf16.xpose.msra.mxu0 0
    %408 = vmatprep.subr.bf16.mxu0 0
    %409 = vmatpush1.bf16.xpose.msra.mxu0 0
    %410 = vmatprep.subr.bf16.mxu0 0
    %411 = vmatpush1.bf16.xpose.msra.mxu0 0
    %412 = vmatprep.subr.bf16.mxu0 0
    %413 = vmatpush1.bf16.xpose.msra.mxu0 0
    %414 = vmatprep.subr.bf16.mxu0 0
    %415 = vmatpush1.bf16.xpose.msra.mxu0 0
    %416 = vmatprep.subr.bf16.mxu0 0
    %417 = vmatpush1.bf16.xpose.msra.mxu0 0
    %418 = vmatprep.subr.bf16.mxu0 0
    %419 = vmatpush1.bf16.xpose.msra.mxu0 0
    %420 = vmatprep.subr.bf16.mxu0 0
    %421 = vmatpush1.bf16.xpose.msra.mxu0 0
    %422 = vmatprep.subr.bf16.mxu0 0
    %423 = vmatpush1.bf16.xpose.msra.mxu0 0
    %424 = vmatprep.mubr.bf16.mxu0 0
    %425 = vmatmul.mubr.bf16.gmra.mrb[0].mxu0 %v387
    %v426 = vpop.f32.mrb[0].mxu0
    %v427 = vadd.f32 %v336, %v426
    %v428 = vpop.f32.mrb[0].mxu0
    %v429 = vpop.f32.mrb[0].mxu0
    %v430 = vpop.f32.mrb[0].mxu0
    %431 = vdwg.mxu0
    %v432 = vsel %vm339, %v381, -inf
    %433 = vmax.xlane.f32.xlu0 %v432
    %v434 = vpop.xlane.xlu0 %433
    %v435 = vsel %vm339, %v427, -inf
    %436 = vmax.xlane.f32.xlu0 %v435
    %v437 = vpop.xlane.xlu0 %436
    %v438 = vsub.f32 %v381, %v434
    %v439 = vsub.f32 %v427, %v437
    %v440 = vmul.f32 %v438, 1.442695
    %v441 = vpow.pop %v440
    %v442 = vmul.f32 %v439, 1.442695
    %v443 = vpow.pop %v442
    %v444 = vsel %vm339, %v441, 0.0
    %445 = vadd.xlane.f32.xlu0 %v444
    %v446 = vpop.xlane.xlu0 %445
    %v447 = vsel %vm339, %v443, 0.0
    %448 = vadd.xlane.f32.xlu0 %v447
    %v449 = vpop.xlane.xlu0 %448
    %v450 = vrcp.pop %v446
    %v451 = vrcp.pop %v449
    %v452 = vmul.f32 %v441, %v450
    %v453 = vmul.f32 %v443, %v451
    %v454 = vpack.c.bf16 %v452, %v452
    %v455 = vpack.c.bf16 %v453, %v453
    %v457 = vsel %vm339, %v454, 0
    %vm459 = vcmask 1043456
    %v461 = vsel %vm459, %v325, 0
    %463 = vmatprep.subr.bf16.mxu0 0
    %464 = vmatpush1.bf16.msra.mxu0 %v461
    %465 = vmatprep.subr.bf16.mxu0 0
    %466 = vmatpush1.bf16.msra.mxu0 0
    %467 = vmatprep.subr.bf16.mxu0 0
    %468 = vmatpush1.bf16.msra.mxu0 0
    %469 = vmatprep.subr.bf16.mxu0 0
    %470 = vmatpush1.bf16.msra.mxu0 0
    %471 = vmatprep.subr.bf16.mxu0 0
    %472 = vmatpush1.bf16.msra.mxu0 0
    %473 = vmatprep.subr.bf16.mxu0 0
    %474 = vmatpush1.bf16.msra.mxu0 0
    %475 = vmatprep.subr.bf16.mxu0 0
    %476 = vmatpush1.bf16.msra.mxu0 0
    %477 = vmatprep.subr.bf16.mxu0 0
    %478 = vmatpush1.bf16.msra.mxu0 0
    %479 = vmatprep.subr.bf16.mxu0 0
    %480 = vmatpush1.bf16.msra.mxu0 0
    %481 = vmatprep.subr.bf16.mxu0 0
    %482 = vmatpush1.bf16.msra.mxu0 0
    %483 = vmatprep.subr.bf16.mxu0 0
    %484 = vmatpush1.bf16.msra.mxu0 0
    %485 = vmatprep.subr.bf16.mxu0 0
    %486 = vmatpush1.bf16.msra.mxu0 0
    %487 = vmatprep.subr.bf16.mxu0 0
    %488 = vmatpush1.bf16.msra.mxu0 0
    %489 = vmatprep.subr.bf16.mxu0 0
    %490 = vmatpush1.bf16.msra.mxu0 0
    %491 = vmatprep.subr.bf16.mxu0 0
    %492 = vmatpush1.bf16.msra.mxu0 0
    %493 = vmatprep.subr.bf16.mxu0 0
    %494 = vmatpush1.bf16.msra.mxu0 0
    %495 = vmatprep.mubr.bf16.mxu0 0
    %496 = vmatmul.mubr.bf16.gmra.mrb[0].mxu0 %v457
    %v497 = vpop.f32.mrb[0].mxu0
    %v498 = vadd.f32 0.0, %v497
    %v499 = vpop.f32.mrb[0].mxu0
    %v500 = vpop.f32.mrb[0].mxu0
    %v501 = vpop.f32.mrb[0].mxu0
    %502 = vdwg.mxu0
    %v504 = vsel %vm339, %v455, 0
    %v507 = vsel %vm459, %v326, 0
    %509 = vmatprep.subr.bf16.mxu0 0
    %510 = vmatpush1.bf16.msra.mxu0 %v507
    %511 = vmatprep.subr.bf16.mxu0 0
    %512 = vmatpush1.bf16.msra.mxu0 0
    %513 = vmatprep.subr.bf16.mxu0 0
    %514 = vmatpush1.bf16.msra.mxu0 0
    %515 = vmatprep.subr.bf16.mxu0 0
    %516 = vmatpush1.bf16.msra.mxu0 0
    %517 = vmatprep.subr.bf16.mxu0 0
    %518 = vmatpush1.bf16.msra.mxu0 0
    %519 = vmatprep.subr.bf16.mxu0 0
    %520 = vmatpush1.bf16.msra.mxu0 0
    %521 = vmatprep.subr.bf16.mxu0 0
    %522 = vmatpush1.bf16.msra.mxu0 0
    %523 = vmatprep.subr.bf16.mxu0 0
    %524 = vmatpush1.bf16.msra.mxu0 0
    %525 = vmatprep.subr.bf16.mxu0 0
    %526 = vmatpush1.bf16.msra.mxu0 0
    %527 = vmatprep.subr.bf16.mxu0 0
    %528 = vmatpush1.bf16.msra.mxu0 0
    %529 = vmatprep.subr.bf16.mxu0 0
    %530 = vmatpush1.bf16.msra.mxu0 0
    %531 = vmatprep.subr.bf16.mxu0 0
    %532 = vmatpush1.bf16.msra.mxu0 0
    %533 = vmatprep.subr.bf16.mxu0 0
    %534 = vmatpush1.bf16.msra.mxu0 0
    %535 = vmatprep.subr.bf16.mxu0 0
    %536 = vmatpush1.bf16.msra.mxu0 0
    %537 = vmatprep.subr.bf16.mxu0 0
    %538 = vmatpush1.bf16.msra.mxu0 0
    %539 = vmatprep.subr.bf16.mxu0 0
    %540 = vmatpush1.bf16.msra.mxu0 0
    %541 = vmatprep.mubr.bf16.mxu0 0
    %542 = vmatmul.mubr.bf16.gmra.mrb[0].mxu0 %v504
    %v543 = vpop.f32.mrb[0].mxu0
    %v544 = vadd.f32 0.0, %v543
    %v545 = vpop.f32.mrb[0].mxu0
    %v546 = vpop.f32.mrb[0].mxu0
    %v547 = vpop.f32.mrb[0].mxu0
    %548 = vdwg.mxu0
    %v549 = vpack.c.bf16 %v544, %v498
    %v550 = vld [vmem:[%s10] sm:$0xf]
    %s551 = scalar_lea.vmem %s4, 16
    %v552 = vld [vmem:[%s551] sm:$0xf]
    %v553 = vld [vmem:[%s551 + $0x4] sm:$0xf]
    %v554 = vld [vmem:[%s551 + $0x8] sm:$0xf]
    %v555 = vld [vmem:[%s551 + $0xc] sm:$0xf]
    %s556 = scalar_lea.vmem %s5, 1
    %v557 = vld [vmem:[%s556] sm:$0x1]
    %v559 = vlaneseq
    %v560 = vshrl.u32 %v559, 7
    %v561 = vsub.s32 0, %v560
    %v562 = vrot.slane %v557, %v561
    %v568 = vunpack.c.l.b16 %v552
    %v569 = vunpack.c.l.b16 %v553
    %v570 = vunpack.c.l.b16 %v554
    %v571 = vunpack.c.l.b16 %v555
    %v572 = vpack.c.b16 %v569, %v568
    %v573 = vpack.c.b16 %v571, %v570
    %576 = vmatprep.subr.bf16.mxu0 0
    %577 = vmatpush1.bf16.msra.mxu0 %v572
    %578 = vmatprep.subr.bf16.mxu0 0
    %579 = vmatpush1.bf16.msra.mxu0 %v573
    %580 = vmatprep.subr.bf16.mxu0 0
    %581 = vmatpush1.bf16.msra.mxu0 0
    %582 = vmatprep.subr.bf16.mxu0 0
    %583 = vmatpush1.bf16.msra.mxu0 0
    %584 = vmatprep.subr.bf16.mxu0 0
    %585 = vmatpush1.bf16.msra.mxu0 0
    %586 = vmatprep.subr.bf16.mxu0 0
    %587 = vmatpush1.bf16.msra.mxu0 0
    %588 = vmatprep.subr.bf16.mxu0 0
    %589 = vmatpush1.bf16.msra.mxu0 0
    %590 = vmatprep.subr.bf16.mxu0 0
    %591 = vmatpush1.bf16.msra.mxu0 0
    %592 = vmatprep.subr.bf16.mxu0 0
    %593 = vmatpush1.bf16.msra.mxu0 0
    %594 = vmatprep.subr.bf16.mxu0 0
    %595 = vmatpush1.bf16.msra.mxu0 0
    %596 = vmatprep.subr.bf16.mxu0 0
    %597 = vmatpush1.bf16.msra.mxu0 0
    %598 = vmatprep.subr.bf16.mxu0 0
    %599 = vmatpush1.bf16.msra.mxu0 0
    %600 = vmatprep.subr.bf16.mxu0 0
    %601 = vmatpush1.bf16.msra.mxu0 0
    %602 = vmatprep.subr.bf16.mxu0 0
    %603 = vmatpush1.bf16.msra.mxu0 0
    %604 = vmatprep.subr.bf16.mxu0 0
    %605 = vmatpush1.bf16.msra.mxu0 0
    %606 = vmatprep.subr.bf16.mxu0 0
    %607 = vmatpush1.bf16.msra.mxu0 0
    %608 = vmatprep.mubr.bf16.mxu0 0
    %609 = vmatmul.mubr.bf16.gmra.mrb[0].mxu0 %v148
    %v610 = vpop.f32.mrb[0].mxu0
    %v611 = vadd.f32 %v562, %v610
    %v612 = vpop.f32.mrb[0].mxu0
    %v613 = vpop.f32.mrb[0].mxu0
    %v614 = vadd.f32 %v562, %v613
    %v615 = vpop.f32.mrb[0].mxu0
    %616 = vdwg.mxu0
    %v617 = vmul.f32 %v611, 0.35355338
    %v618 = vmul.f32 %v614, 0.35355338
    %s619 = scalar_lea.vmem %s6, 16
    %v620 = vld [vmem:[%s619] sm:$0xf]
    %v621 = vld [vmem:[%s619 + $0x4] sm:$0xf]
    %v622 = vld [vmem:[%s619 + $0x8] sm:$0xf]
    %v623 = vld [vmem:[%s619 + $0xc] sm:$0xf]
    %s624 = scalar_lea.vmem %s7, 1
    %v625 = vld [vmem:[%s624] sm:$0x1]
    %v627 = vlaneseq
    %v628 = vshrl.u32 %v627, 7
    %v629 = vsub.s32 0, %v628
    %v630 = vrot.slane %v625, %v629
    %v636 = vunpack.c.l.b16 %v620
    %v637 = vunpack.c.l.b16 %v621
    %v638 = vunpack.c.l.b16 %v622
    %v639 = vunpack.c.l.b16 %v623
    %v640 = vpack.c.b16 %v637, %v636
    %v641 = vpack.c.b16 %v639, %v638
    %644 = vmatprep.subr.bf16.mxu0 0
    %645 = vmatpush1.bf16.msra.mxu0 %v640
    %646 = vmatprep.subr.bf16.mxu0 0
    %647 = vmatpush1.bf16.msra.mxu0 %v641
    %648 = vmatprep.subr.bf16.mxu0 0
    %649 = vmatpush1.bf16.msra.mxu0 0
    %650 = vmatprep.subr.bf16.mxu0 0
    %651 = vmatpush1.bf16.msra.mxu0 0
    %652 = vmatprep.subr.bf16.mxu0 0
    %653 = vmatpush1.bf16.msra.mxu0 0
    %654 = vmatprep.subr.bf16.mxu0 0
    %655 = vmatpush1.bf16.msra.mxu0 0
    %656 = vmatprep.subr.bf16.mxu0 0
    %657 = vmatpush1.bf16.msra.mxu0 0
    %658 = vmatprep.subr.bf16.mxu0 0
    %659 = vmatpush1.bf16.msra.mxu0 0
    %660 = vmatprep.subr.bf16.mxu0 0
    %661 = vmatpush1.bf16.msra.mxu0 0
    %662 = vmatprep.subr.bf16.mxu0 0
    %663 = vmatpush1.bf16.msra.mxu0 0
    %664 = vmatprep.subr.bf16.mxu0 0
    %665 = vmatpush1.bf16.msra.mxu0 0
    %666 = vmatprep.subr.bf16.mxu0 0
    %667 = vmatpush1.bf16.msra.mxu0 0
    %668 = vmatprep.subr.bf16.mxu0 0
    %669 = vmatpush1.bf16.msra.mxu0 0
    %670 = vmatprep.subr.bf16.mxu0 0
    %671 = vmatpush1.bf16.msra.mxu0 0
    %672 = vmatprep.subr.bf16.mxu0 0
    %673 = vmatpush1.bf16.msra.mxu0 0
    %674 = vmatprep.subr.bf16.mxu0 0
    %675 = vmatpush1.bf16.msra.mxu0 0
    %676 = vmatprep.mubr.bf16.mxu0 0
    %677 = vmatmul.mubr.bf16.gmra.mrb[0].mxu0 %v148
    %v678 = vpop.f32.mrb[0].mxu0
    %v679 = vadd.f32 %v630, %v678
    %v680 = vpop.f32.mrb[0].mxu0
    %v681 = vpop.f32.mrb[0].mxu0
    %v682 = vadd.f32 %v630, %v681
    %v683 = vpop.f32.mrb[0].mxu0
    %684 = vdwg.mxu0
    %s685 = scalar_lea.vmem %s8, 16
    %v686 = vld [vmem:[%s685] sm:$0xf]
    %v687 = vld [vmem:[%s685 + $0x4] sm:$0xf]
    %v688 = vld [vmem:[%s685 + $0x8] sm:$0xf]
    %v689 = vld [vmem:[%s685 + $0xc] sm:$0xf]
    %s690 = scalar_lea.vmem %s9, 1
    %v691 = vld [vmem:[%s690] sm:$0x1]
    %v693 = vlaneseq
    %v694 = vshrl.u32 %v693, 7
    %v695 = vsub.s32 0, %v694
    %v696 = vrot.slane %v691, %v695
    %v702 = vunpack.c.l.b16 %v686
    %v703 = vunpack.c.l.b16 %v687
    %v704 = vunpack.c.l.b16 %v688
    %v705 = vunpack.c.l.b16 %v689
    %v706 = vpack.c.b16 %v703, %v702
    %v707 = vpack.c.b16 %v705, %v704
    %710 = vmatprep.subr.bf16.mxu0 0
    %711 = vmatpush1.bf16.msra.mxu0 %v706
    %712 = vmatprep.subr.bf16.mxu0 0
    %713 = vmatpush1.bf16.msra.mxu0 %v707
    %714 = vmatprep.subr.bf16.mxu0 0
    %715 = vmatpush1.bf16.msra.mxu0 0
    %716 = vmatprep.subr.bf16.mxu0 0
    %717 = vmatpush1.bf16.msra.mxu0 0
    %718 = vmatprep.subr.bf16.mxu0 0
    %719 = vmatpush1.bf16.msra.mxu0 0
    %720 = vmatprep.subr.bf16.mxu0 0
    %721 = vmatpush1.bf16.msra.mxu0 0
    %722 = vmatprep.subr.bf16.mxu0 0
    %723 = vmatpush1.bf16.msra.mxu0 0
    %724 = vmatprep.subr.bf16.mxu0 0
    %725 = vmatpush1.bf16.msra.mxu0 0
    %726 = vmatprep.subr.bf16.mxu0 0
    %727 = vmatpush1.bf16.msra.mxu0 0
    %728 = vmatprep.subr.bf16.mxu0 0
    %729 = vmatpush1.bf16.msra.mxu0 0
    %730 = vmatprep.subr.bf16.mxu0 0
    %731 = vmatpush1.bf16.msra.mxu0 0
    %732 = vmatprep.subr.bf16.mxu0 0
    %733 = vmatpush1.bf16.msra.mxu0 0
    %734 = vmatprep.subr.bf16.mxu0 0
    %735 = vmatpush1.bf16.msra.mxu0 0
    %736 = vmatprep.subr.bf16.mxu0 0
    %737 = vmatpush1.bf16.msra.mxu0 0
    %738 = vmatprep.subr.bf16.mxu0 0
    %739 = vmatpush1.bf16.msra.mxu0 0
    %740 = vmatprep.subr.bf16.mxu0 0
    %741 = vmatpush1.bf16.msra.mxu0 0
    %742 = vmatprep.mubr.bf16.mxu0 0
    %743 = vmatmul.mubr.bf16.gmra.mrb[0].mxu0 %v148
    %v744 = vpop.f32.mrb[0].mxu0
    %v745 = vadd.f32 %v696, %v744
    %v746 = vpop.f32.mrb[0].mxu0
    %v747 = vpop.f32.mrb[0].mxu0
    %v748 = vadd.f32 %v696, %v747
    %v749 = vpop.f32.mrb[0].mxu0
    %750 = vdwg.mxu0
    %v751 = vpack.c.bf16 %v617, %v617
    %v752 = vpack.c.bf16 %v618, %v618
    %v753 = vpack.c.bf16 %v679, %v679
    %v754 = vpack.c.bf16 %v682, %v682
    %v755 = vpack.c.bf16 %v745, %v745
    %v756 = vpack.c.bf16 %v748, %v748
    %v758 = vsel %vm339, %v751, 0
    %v761 = vsel %vm339, %v753, 0
    %763 = vmatprep.subr.bf16.mxu0 0
    %764 = vmatpush1.bf16.xpose.msra.mxu0 %v761
    %765 = vmatprep.subr.bf16.mxu0 0
    %766 = vmatpush1.bf16.xpose.msra.mxu0 0
    %767 = vmatprep.subr.bf16.mxu0 0
    %768 = vmatpush1.bf16.xpose.msra.mxu0 0
    %769 = vmatprep.subr.bf16.mxu0 0
    %770 = vmatpush1.bf16.xpose.msra.mxu0 0
    %771 = vmatprep.subr.bf16.mxu0 0
    %772 = vmatpush1.bf16.xpose.msra.mxu0 0
    %773 = vmatprep.subr.bf16.mxu0 0
    %774 = vmatpush1.bf16.xpose.msra.mxu0 0
    %775 = vmatprep.subr.bf16.mxu0 0
    %776 = vmatpush1.bf16.xpose.msra.mxu0 0
    %777 = vmatprep.subr.bf16.mxu0 0
    %778 = vmatpush1.bf16.xpose.msra.mxu0 0
    %779 = vmatprep.subr.bf16.mxu0 0
    %780 = vmatpush1.bf16.xpose.msra.mxu0 0
    %781 = vmatprep.subr.bf16.mxu0 0
    %782 = vmatpush1.bf16.xpose.msra.mxu0 0
    %783 = vmatprep.subr.bf16.mxu0 0
    %784 = vmatpush1.bf16.xpose.msra.mxu0 0
    %785 = vmatprep.subr.bf16.mxu0 0
    %786 = vmatpush1.bf16.xpose.msra.mxu0 0
    %787 = vmatprep.subr.bf16.mxu0 0
    %788 = vmatpush1.bf16.xpose.msra.mxu0 0
    %789 = vmatprep.subr.bf16.mxu0 0
    %790 = vmatpush1.bf16.xpose.msra.mxu0 0
    %791 = vmatprep.subr.bf16.mxu0 0
    %792 = vmatpush1.bf16.xpose.msra.mxu0 0
    %793 = vmatprep.subr.bf16.mxu0 0
    %794 = vmatpush1.bf16.xpose.msra.mxu0 0
    %795 = vmatprep.mubr.bf16.mxu0 0
    %796 = vmatmul.mubr.bf16.gmra.mrb[0].mxu0 %v758
    %v797 = vpop.f32.mrb[0].mxu0
    %v798 = vadd.f32 %v332, %v797
    %v799 = vpop.f32.mrb[0].mxu0
    %v800 = vpop.f32.mrb[0].mxu0
    %v801 = vpop.f32.mrb[0].mxu0
    %802 = vdwg.mxu0
    %v804 = vsel %vm339, %v752, 0
    %v807 = vsel %vm339, %v754, 0
    %809 = vmatprep.subr.bf16.mxu0 0
    %810 = vmatpush1.bf16.xpose.msra.mxu0 %v807
    %811 = vmatprep.subr.bf16.mxu0 0
    %812 = vmatpush1.bf16.xpose.msra.mxu0 0
    %813 = vmatprep.subr.bf16.mxu0 0
    %814 = vmatpush1.bf16.xpose.msra.mxu0 0
    %815 = vmatprep.subr.bf16.mxu0 0
    %816 = vmatpush1.bf16.xpose.msra.mxu0 0
    %817 = vmatprep.subr.bf16.mxu0 0
    %818 = vmatpush1.bf16.xpose.msra.mxu0 0
    %819 = vmatprep.subr.bf16.mxu0 0
    %820 = vmatpush1.bf16.xpose.msra.mxu0 0
    %821 = vmatprep.subr.bf16.mxu0 0
    %822 = vmatpush1.bf16.xpose.msra.mxu0 0
    %823 = vmatprep.subr.bf16.mxu0 0
    %824 = vmatpush1.bf16.xpose.msra.mxu0 0
    %825 = vmatprep.subr.bf16.mxu0 0
    %826 = vmatpush1.bf16.xpose.msra.mxu0 0
    %827 = vmatprep.subr.bf16.mxu0 0
    %828 = vmatpush1.bf16.xpose.msra.mxu0 0
    %829 = vmatprep.subr.bf16.mxu0 0
    %830 = vmatpush1.bf16.xpose.msra.mxu0 0
    %831 = vmatprep.subr.bf16.mxu0 0
    %832 = vmatpush1.bf16.xpose.msra.mxu0 0
    %833 = vmatprep.subr.bf16.mxu0 0
    %834 = vmatpush1.bf16.xpose.msra.mxu0 0
    %835 = vmatprep.subr.bf16.mxu0 0
    %836 = vmatpush1.bf16.xpose.msra.mxu0 0
    %837 = vmatprep.subr.bf16.mxu0 0
    %838 = vmatpush1.bf16.xpose.msra.mxu0 0
    %839 = vmatprep.subr.bf16.mxu0 0
    %840 = vmatpush1.bf16.xpose.msra.mxu0 0
    %841 = vmatprep.mubr.bf16.mxu0 0
    %842 = vmatmul.mubr.bf16.gmra.mrb[0].mxu0 %v804
    %v843 = vpop.f32.mrb[0].mxu0
    %v844 = vadd.f32 %v336, %v843
    %v845 = vpop.f32.mrb[0].mxu0
    %v846 = vpop.f32.mrb[0].mxu0
    %v847 = vpop.f32.mrb[0].mxu0
    %848 = vdwg.mxu0
    %v849 = vsel %vm339, %v798, -inf
    %850 = vmax.xlane.f32.xlu0 %v849
    %v851 = vpop.xlane.xlu0 %850
    %v852 = vsel %vm339, %v844, -inf
    %853 = vmax.xlane.f32.xlu0 %v852
    %v854 = vpop.xlane.xlu0 %853
    %v855 = vsub.f32 %v798, %v851
    %v856 = vsub.f32 %v844, %v854
    %v857 = vmul.f32 %v855, 1.442695
    %v858 = vpow.pop %v857
    %v859 = vmul.f32 %v856, 1.442695
    %v860 = vpow.pop %v859
    %v861 = vsel %vm339, %v858, 0.0
    %862 = vadd.xlane.f32.xlu0 %v861
    %v863 = vpop.xlane.xlu0 %862
    %v864 = vsel %vm339, %v860, 0.0
    %865 = vadd.xlane.f32.xlu0 %v864
    %v866 = vpop.xlane.xlu0 %865
    %v867 = vrcp.pop %v863
    %v868 = vrcp.pop %v866
    %v869 = vmul.f32 %v858, %v867
    %v870 = vmul.f32 %v860, %v868
    %v871 = vpack.c.bf16 %v869, %v869
    %v872 = vpack.c.bf16 %v870, %v870
    %v874 = vsel %vm339, %v871, 0
    %v877 = vsel %vm459, %v755, 0
    %879 = vmatprep.subr.bf16.mxu0 0
    %880 = vmatpush1.bf16.msra.mxu0 %v877
    %881 = vmatprep.subr.bf16.mxu0 0
    %882 = vmatpush1.bf16.msra.mxu0 0
    %883 = vmatprep.subr.bf16.mxu0 0
    %884 = vmatpush1.bf16.msra.mxu0 0
    %885 = vmatprep.subr.bf16.mxu0 0
    %886 = vmatpush1.bf16.msra.mxu0 0
    %887 = vmatprep.subr.bf16.mxu0 0
    %888 = vmatpush1.bf16.msra.mxu0 0
    %889 = vmatprep.subr.bf16.mxu0 0
    %890 = vmatpush1.bf16.msra.mxu0 0
    %891 = vmatprep.subr.bf16.mxu0 0
    %892 = vmatpush1.bf16.msra.mxu0 0
    %893 = vmatprep.subr.bf16.mxu0 0
    %894 = vmatpush1.bf16.msra.mxu0 0
    %895 = vmatprep.subr.bf16.mxu0 0
    %896 = vmatpush1.bf16.msra.mxu0 0
    %897 = vmatprep.subr.bf16.mxu0 0
    %898 = vmatpush1.bf16.msra.mxu0 0
    %899 = vmatprep.subr.bf16.mxu0 0
    %900 = vmatpush1.bf16.msra.mxu0 0
    %901 = vmatprep.subr.bf16.mxu0 0
    %902 = vmatpush1.bf16.msra.mxu0 0
    %903 = vmatprep.subr.bf16.mxu0 0
    %904 = vmatpush1.bf16.msra.mxu0 0
    %905 = vmatprep.subr.bf16.mxu0 0
    %906 = vmatpush1.bf16.msra.mxu0 0
    %907 = vmatprep.subr.bf16.mxu0 0
    %908 = vmatpush1.bf16.msra.mxu0 0
    %909 = vmatprep.subr.bf16.mxu0 0
    %910 = vmatpush1.bf16.msra.mxu0 0
    %911 = vmatprep.mubr.bf16.mxu0 0
    %912 = vmatmul.mubr.bf16.gmra.mrb[0].mxu0 %v874
    %v913 = vpop.f32.mrb[0].mxu0
    %v914 = vadd.f32 0.0, %v913
    %v915 = vpop.f32.mrb[0].mxu0
    %v916 = vpop.f32.mrb[0].mxu0
    %v917 = vpop.f32.mrb[0].mxu0
    %918 = vdwg.mxu0
    %v920 = vsel %vm339, %v872, 0
    %v923 = vsel %vm459, %v756, 0
    %925 = vmatprep.subr.bf16.mxu0 0
    %926 = vmatpush1.bf16.msra.mxu0 %v923
    %927 = vmatprep.subr.bf16.mxu0 0
    %928 = vmatpush1.bf16.msra.mxu0 0
    %929 = vmatprep.subr.bf16.mxu0 0
    %930 = vmatpush1.bf16.msra.mxu0 0
    %931 = vmatprep.subr.bf16.mxu0 0
    %932 = vmatpush1.bf16.msra.mxu0 0
    %933 = vmatprep.subr.bf16.mxu0 0
    %934 = vmatpush1.bf16.msra.mxu0 0
    %935 = vmatprep.subr.bf16.mxu0 0
    %936 = vmatpush1.bf16.msra.mxu0 0
    %937 = vmatprep.subr.bf16.mxu0 0
    %938 = vmatpush1.bf16.msra.mxu0 0
    %939 = vmatprep.subr.bf16.mxu0 0
    %940 = vmatpush1.bf16.msra.mxu0 0
    %941 = vmatprep.subr.bf16.mxu0 0
    %942 = vmatpush1.bf16.msra.mxu0 0
    %943 = vmatprep.subr.bf16.mxu0 0
    %944 = vmatpush1.bf16.msra.mxu0 0
    %945 = vmatprep.subr.bf16.mxu0 0
    %946 = vmatpush1.bf16.msra.mxu0 0
    %947 = vmatprep.subr.bf16.mxu0 0
    %948 = vmatpush1.bf16.msra.mxu0 0
    %949 = vmatprep.subr.bf16.mxu0 0
    %950 = vmatpush1.bf16.msra.mxu0 0
    %951 = vmatprep.subr.bf16.mxu0 0
    %952 = vmatpush1.bf16.msra.mxu0 0
    %953 = vmatprep.subr.bf16.mxu0 0
    %954 = vmatpush1.bf16.msra.mxu0 0
    %955 = vmatprep.subr.bf16.mxu0 0
    %956 = vmatpush1.bf16.msra.mxu0 0
    %957 = vmatprep.mubr.bf16.mxu0 0
    %958 = vmatmul.mubr.bf16.gmra.mrb[0].mxu0 %v920
    %v959 = vpop.f32.mrb[0].mxu0
    %v960 = vadd.f32 0.0, %v959
    %v961 = vpop.f32.mrb[0].mxu0
    %v962 = vpop.f32.mrb[0].mxu0
    %v963 = vpop.f32.mrb[0].mxu0
    %964 = vdwg.mxu0
    %v965 = vpack.c.bf16 %v960, %v914
    %s966 = scalar_lea.vmem %s10, 4
    %v967 = vld [vmem:[%s966] sm:$0xf]
    %v969 = vsel %vm339, %v965, 0
    %v972 = vsel %vm459, %v967, 0
    %974 = vmatprep.subr.bf16.mxu0 0
    %975 = vmatpush1.bf16.msra.mxu0 %v972
    %976 = vmatprep.subr.bf16.mxu0 0
    %977 = vmatpush1.bf16.msra.mxu0 0
    %978 = vmatprep.subr.bf16.mxu0 0
    %979 = vmatpush1.bf16.msra.mxu0 0
    %980 = vmatprep.subr.bf16.mxu0 0
    %981 = vmatpush1.bf16.msra.mxu0 0
    %982 = vmatprep.subr.bf16.mxu0 0
    %983 = vmatpush1.bf16.msra.mxu0 0
    %984 = vmatprep.subr.bf16.mxu0 0
    %985 = vmatpush1.bf16.msra.mxu0 0
    %986 = vmatprep.subr.bf16.mxu0 0
    %987 = vmatpush1.bf16.msra.mxu0 0
    %988 = vmatprep.subr.bf16.mxu0 0
    %989 = vmatpush1.bf16.msra.mxu0 0
    %990 = vmatprep.subr.bf16.mxu0 0
    %991 = vmatpush1.bf16.msra.mxu0 0
    %992 = vmatprep.subr.bf16.mxu0 0
    %993 = vmatpush1.bf16.msra.mxu0 0
    %994 = vmatprep.subr.bf16.mxu0 0
    %995 = vmatpush1.bf16.msra.mxu0 0
    %996 = vmatprep.subr.bf16.mxu0 0
    %997 = vmatpush1.bf16.msra.mxu0 0
    %998 = vmatprep.subr.bf16.mxu0 0
    %999 = vmatpush1.bf16.msra.mxu0 0
    %1000 = vmatprep.subr.bf16.mxu0 0
    %1001 = vmatpush1.bf16.msra.mxu0 0
    %1002 = vmatprep.subr.bf16.mxu0 0
    %1003 = vmatpush1.bf16.msra.mxu0 0
    %1004 = vmatprep.subr.bf16.mxu0 0
    %1005 = vmatpush1.bf16.msra.mxu0 0
    %1006 = vmatprep.mubr.bf16.mxu0 0
    %1007 = vmatmul.mubr.bf16.gmra.mrb[0].mxu0 %v969
    %v1008 = vpop.f32.mrb[0].mxu0
    %v1009 = vadd.f32 0.0, %v1008
    %v1010 = vpop.f32.mrb[0].mxu0
    %v1011 = vpop.f32.mrb[0].mxu0
    %v1012 = vadd.f32 0.0, %v1011
    %v1013 = vpop.f32.mrb[0].mxu0
    %1014 = vdwg.mxu0
    %v1016 = vsel %vm339, %v549, 0
    %v1019 = vsel %vm459, %v550, 0
    %1021 = vmatprep.subr.bf16.mxu0 0
    %1022 = vmatpush1.bf16.msra.mxu0 %v1019
    %1023 = vmatprep.subr.bf16.mxu0 0
    %1024 = vmatpush1.bf16.msra.mxu0 0
    %1025 = vmatprep.subr.bf16.mxu0 0
    %1026 = vmatpush1.bf16.msra.mxu0 0
    %1027 = vmatprep.subr.bf16.mxu0 0
    %1028 = vmatpush1.bf16.msra.mxu0 0
    %1029 = vmatprep.subr.bf16.mxu0 0
    %1030 = vmatpush1.bf16.msra.mxu0 0
    %1031 = vmatprep.subr.bf16.mxu0 0
    %1032 = vmatpush1.bf16.msra.mxu0 0
    %1033 = vmatprep.subr.bf16.mxu0 0
    %1034 = vmatpush1.bf16.msra.mxu0 0
    %1035 = vmatprep.subr.bf16.mxu0 0
    %1036 = vmatpush1.bf16.msra.mxu0 0
    %1037 = vmatprep.subr.bf16.mxu0 0
    %1038 = vmatpush1.bf16.msra.mxu0 0
    %1039 = vmatprep.subr.bf16.mxu0 0
    %1040 = vmatpush1.bf16.msra.mxu0 0
    %1041 = vmatprep.subr.bf16.mxu0 0
    %1042 = vmatpush1.bf16.msra.mxu0 0
    %1043 = vmatprep.subr.bf16.mxu0 0
    %1044 = vmatpush1.bf16.msra.mxu0 0
    %1045 = vmatprep.subr.bf16.mxu0 0
    %1046 = vmatpush1.bf16.msra.mxu0 0
    %1047 = vmatprep.subr.bf16.mxu0 0
    %1048 = vmatpush1.bf16.msra.mxu0 0
    %1049 = vmatprep.subr.bf16.mxu0 0
    %1050 = vmatpush1.bf16.msra.mxu0 0
    %1051 = vmatprep.subr.bf16.mxu0 0
    %1052 = vmatpush1.bf16.msra.mxu0 0
    %1053 = vmatprep.mubr.bf16.mxu0 0
    %1054 = vmatmul.mubr.bf16.gmra.mrb[0].mxu0 %v1016
    %v1055 = vpop.f32.mrb[0].mxu0
    %v1056 = vadd.f32 %v1009, %v1055
    %v1057 = vpop.f32.mrb[0].mxu0
    %v1058 = vpop.f32.mrb[0].mxu0
    %v1059 = vadd.f32 %v1012, %v1058
    %v1060 = vpop.f32.mrb[0].mxu0
    %1061 = vdwg.mxu0
    %s1062 = scalar_lea.vmem %s4, 32
    %v1063 = vld [vmem:[%s1062] sm:$0xf]
    %v1064 = vld [vmem:[%s1062 + $0x4] sm:$0xf]
    %v1065 = vld [vmem:[%s1062 + $0x8] sm:$0xf]
    %v1066 = vld [vmem:[%s1062 + $0xc] sm:$0xf]
    %s1067 = scalar_lea.vmem %s5, 2
    %v1068 = vld [vmem:[%s1067] sm:$0x1]
    %v1070 = vlaneseq
    %v1071 = vshrl.u32 %v1070, 7
    %v1072 = vsub.s32 0, %v1071
    %v1073 = vrot.slane %v1068, %v1072
    %v1079 = vunpack.c.l.b16 %v1063
    %v1080 = vunpack.c.l.b16 %v1064
    %v1081 = vunpack.c.l.b16 %v1065
    %v1082 = vunpack.c.l.b16 %v1066
    %v1083 = vpack.c.b16 %v1080, %v1079
    %v1084 = vpack.c.b16 %v1082, %v1081
    %1087 = vmatprep.subr.bf16.mxu0 0
    %1088 = vmatpush1.bf16.msra.mxu0 %v1083
    %1089 = vmatprep.subr.bf16.mxu0 0
    %1090 = vmatpush1.bf16.msra.mxu0 %v1084
    %1091 = vmatprep.subr.bf16.mxu0 0
    %1092 = vmatpush1.bf16.msra.mxu0 0
    %1093 = vmatprep.subr.bf16.mxu0 0
    %1094 = vmatpush1.bf16.msra.mxu0 0
    %1095 = vmatprep.subr.bf16.mxu0 0
    %1096 = vmatpush1.bf16.msra.mxu0 0
    %1097 = vmatprep.subr.bf16.mxu0 0
    %1098 = vmatpush1.bf16.msra.mxu0 0
    %1099 = vmatprep.subr.bf16.mxu0 0
    %1100 = vmatpush1.bf16.msra.mxu0 0
    %1101 = vmatprep.subr.bf16.mxu0 0
    %1102 = vmatpush1.bf16.msra.mxu0 0
    %1103 = vmatprep.subr.bf16.mxu0 0
    %1104 = vmatpush1.bf16.msra.mxu0 0
    %1105 = vmatprep.subr.bf16.mxu0 0
    %1106 = vmatpush1.bf16.msra.mxu0 0
    %1107 = vmatprep.subr.bf16.mxu0 0
    %1108 = vmatpush1.bf16.msra.mxu0 0
    %1109 = vmatprep.subr.bf16.mxu0 0
    %1110 = vmatpush1.bf16.msra.mxu0 0
    %1111 = vmatprep.subr.bf16.mxu0 0
    %1112 = vmatpush1.bf16.msra.mxu0 0
    %1113 = vmatprep.subr.bf16.mxu0 0
    %1114 = vmatpush1.bf16.msra.mxu0 0
    %1115 = vmatprep.subr.bf16.mxu0 0
    %1116 = vmatpush1.bf16.msra.mxu0 0
    %1117 = vmatprep.subr.bf16.mxu0 0
    %1118 = vmatpush1.bf16.msra.mxu0 0
    %1119 = vmatprep.mubr.bf16.mxu0 0
    %1120 = vmatmul.mubr.bf16.gmra.mrb[0].mxu0 %v148
    %v1121 = vpop.f32.mrb[0].mxu0
    %v1122 = vadd.f32 %v1073, %v1121
    %v1123 = vpop.f32.mrb[0].mxu0
    %v1124 = vpop.f32.mrb[0].mxu0
    %v1125 = vadd.f32 %v1073, %v1124
    %v1126 = vpop.f32.mrb[0].mxu0
    %1127 = vdwg.mxu0
    %v1128 = vmul.f32 %v1122, 0.35355338
    %v1129 = vmul.f32 %v1125, 0.35355338
    %s1130 = scalar_lea.vmem %s6, 32
    %v1131 = vld [vmem:[%s1130] sm:$0xf]
    %v1132 = vld [vmem:[%s1130 + $0x4] sm:$0xf]
    %v1133 = vld [vmem:[%s1130 + $0x8] sm:$0xf]
    %v1134 = vld [vmem:[%s1130 + $0xc] sm:$0xf]
    %s1135 = scalar_lea.vmem %s7, 2
    %v1136 = vld [vmem:[%s1135] sm:$0x1]
    %v1138 = vlaneseq
    %v1139 = vshrl.u32 %v1138, 7
    %v1140 = vsub.s32 0, %v1139
    %v1141 = vrot.slane %v1136, %v1140
    %v1147 = vunpack.c.l.b16 %v1131
    %v1148 = vunpack.c.l.b16 %v1132
    %v1149 = vunpack.c.l.b16 %v1133
    %v1150 = vunpack.c.l.b16 %v1134
    %v1151 = vpack.c.b16 %v1148, %v1147
    %v1152 = vpack.c.b16 %v1150, %v1149
    %1155 = vmatprep.subr.bf16.mxu0 0
    %1156 = vmatpush1.bf16.msra.mxu0 %v1151
    %1157 = vmatprep.subr.bf16.mxu0 0
    %1158 = vmatpush1.bf16.msra.mxu0 %v1152
    %1159 = vmatprep.subr.bf16.mxu0 0
    %1160 = vmatpush1.bf16.msra.mxu0 0
    %1161 = vmatprep.subr.bf16.mxu0 0
    %1162 = vmatpush1.bf16.msra.mxu0 0
    %1163 = vmatprep.subr.bf16.mxu0 0
    %1164 = vmatpush1.bf16.msra.mxu0 0
    %1165 = vmatprep.subr.bf16.mxu0 0
    %1166 = vmatpush1.bf16.msra.mxu0 0
    %1167 = vmatprep.subr.bf16.mxu0 0
    %1168 = vmatpush1.bf16.msra.mxu0 0
    %1169 = vmatprep.subr.bf16.mxu0 0
    %1170 = vmatpush1.bf16.msra.mxu0 0
    %1171 = vmatprep.subr.bf16.mxu0 0
    %1172 = vmatpush1.bf16.msra.mxu0 0
    %1173 = vmatprep.subr.bf16.mxu0 0
    %1174 = vmatpush1.bf16.msra.mxu0 0
    %1175 = vmatprep.subr.bf16.mxu0 0
    %1176 = vmatpush1.bf16.msra.mxu0 0
    %1177 = vmatprep.subr.bf16.mxu0 0
    %1178 = vmatpush1.bf16.msra.mxu0 0
    %1179 = vmatprep.subr.bf16.mxu0 0
    %1180 = vmatpush1.bf16.msra.mxu0 0
    %1181 = vmatprep.subr.bf16.mxu0 0
    %1182 = vmatpush1.bf16.msra.mxu0 0
    %1183 = vmatprep.subr.bf16.mxu0 0
    %1184 = vmatpush1.bf16.msra.mxu0 0
    %1185 = vmatprep.subr.bf16.mxu0 0
    %1186 = vmatpush1.bf16.msra.mxu0 0
    %1187 = vmatprep.mubr.bf16.mxu0 0
    %1188 = vmatmul.mubr.bf16.gmra.mrb[0].mxu0 %v148
    %v1189 = vpop.f32.mrb[0].mxu0
    %v1190 = vadd.f32 %v1141, %v1189
    %v1191 = vpop.f32.mrb[0].mxu0
    %v1192 = vpop.f32.mrb[0].mxu0
    %v1193 = vadd.f32 %v1141, %v1192
    %v1194 = vpop.f32.mrb[0].mxu0
    %1195 = vdwg.mxu0
    %s1196 = scalar_lea.vmem %s8, 32
    %v1197 = vld [vmem:[%s1196] sm:$0xf]
    %v1198 = vld [vmem:[%s1196 + $0x4] sm:$0xf]
    %v1199 = vld [vmem:[%s1196 + $0x8] sm:$0xf]
    %v1200 = vld [vmem:[%s1196 + $0xc] sm:$0xf]
    %s1201 = scalar_lea.vmem %s9, 2
    %v1202 = vld [vmem:[%s1201] sm:$0x1]
    %v1204 = vlaneseq
    %v1205 = vshrl.u32 %v1204, 7
    %v1206 = vsub.s32 0, %v1205
    %v1207 = vrot.slane %v1202, %v1206
    %v1213 = vunpack.c.l.b16 %v1197
    %v1214 = vunpack.c.l.b16 %v1198
    %v1215 = vunpack.c.l.b16 %v1199
    %v1216 = vunpack.c.l.b16 %v1200
    %v1217 = vpack.c.b16 %v1214, %v1213
    %v1218 = vpack.c.b16 %v1216, %v1215
    %1221 = vmatprep.subr.bf16.mxu0 0
    %1222 = vmatpush1.bf16.msra.mxu0 %v1217
    %1223 = vmatprep.subr.bf16.mxu0 0
    %1224 = vmatpush1.bf16.msra.mxu0 %v1218
    %1225 = vmatprep.subr.bf16.mxu0 0
    %1226 = vmatpush1.bf16.msra.mxu0 0
    %1227 = vmatprep.subr.bf16.mxu0 0
    %1228 = vmatpush1.bf16.msra.mxu0 0
    %1229 = vmatprep.subr.bf16.mxu0 0
    %1230 = vmatpush1.bf16.msra.mxu0 0
    %1231 = vmatprep.subr.bf16.mxu0 0
    %1232 = vmatpush1.bf16.msra.mxu0 0
    %1233 = vmatprep.subr.bf16.mxu0 0
    %1234 = vmatpush1.bf16.msra.mxu0 0
    %1235 = vmatprep.subr.bf16.mxu0 0
    %1236 = vmatpush1.bf16.msra.mxu0 0
    %1237 = vmatprep.subr.bf16.mxu0 0
    %1238 = vmatpush1.bf16.msra.mxu0 0
    %1239 = vmatprep.subr.bf16.mxu0 0
    %1240 = vmatpush1.bf16.msra.mxu0 0
    %1241 = vmatprep.subr.bf16.mxu0 0
    %1242 = vmatpush1.bf16.msra.mxu0 0
    %1243 = vmatprep.subr.bf16.mxu0 0
    %1244 = vmatpush1.bf16.msra.mxu0 0
    %1245 = vmatprep.subr.bf16.mxu0 0
    %1246 = vmatpush1.bf16.msra.mxu0 0
    %1247 = vmatprep.subr.bf16.mxu0 0
    %1248 = vmatpush1.bf16.msra.mxu0 0
    %1249 = vmatprep.subr.bf16.mxu0 0
    %1250 = vmatpush1.bf16.msra.mxu0 0
    %1251 = vmatprep.subr.bf16.mxu0 0
    %1252 = vmatpush1.bf16.msra.mxu0 0
    %1253 = vmatprep.mubr.bf16.mxu0 0
    %1254 = vmatmul.mubr.bf16.gmra.mrb[0].mxu0 %v148
    %v1255 = vpop.f32.mrb[0].mxu0
    %v1256 = vadd.f32 %v1207, %v1255
    %v1257 = vpop.f32.mrb[0].mxu0
    %v1258 = vpop.f32.mrb[0].mxu0
    %v1259 = vadd.f32 %v1207, %v1258
    %v1260 = vpop.f32.mrb[0].mxu0
    %1261 = vdwg.mxu0
    %v1262 = vpack.c.bf16 %v1128, %v1128
    %v1263 = vpack.c.bf16 %v1129, %v1129
    %v1264 = vpack.c.bf16 %v1190, %v1190
    %v1265 = vpack.c.bf16 %v1193, %v1193
    %v1266 = vpack.c.bf16 %v1256, %v1256
    %v1267 = vpack.c.bf16 %v1259, %v1259
    %v1269 = vsel %vm339, %v1262, 0
    %v1272 = vsel %vm339, %v1264, 0
    %1274 = vmatprep.subr.bf16.mxu0 0
    %1275 = vmatpush1.bf16.xpose.msra.mxu0 %v1272
    %1276 = vmatprep.subr.bf16.mxu0 0
    %1277 = vmatpush1.bf16.xpose.msra.mxu0 0
    %1278 = vmatprep.subr.bf16.mxu0 0
    %1279 = vmatpush1.bf16.xpose.msra.mxu0 0
    %1280 = vmatprep.subr.bf16.mxu0 0
    %1281 = vmatpush1.bf16.xpose.msra.mxu0 0
    %1282 = vmatprep.subr.bf16.mxu0 0
    %1283 = vmatpush1.bf16.xpose.msra.mxu0 0
    %1284 = vmatprep.subr.bf16.mxu0 0
    %1285 = vmatpush1.bf16.xpose.msra.mxu0 0
    %1286 = vmatprep.subr.bf16.mxu0 0
    %1287 = vmatpush1.bf16.xpose.msra.mxu0 0
    %1288 = vmatprep.subr.bf16.mxu0 0
    %1289 = vmatpush1.bf16.xpose.msra.mxu0 0
    %1290 = vmatprep.subr.bf16.mxu0 0
    %1291 = vmatpush1.bf16.xpose.msra.mxu0 0
    %1292 = vmatprep.subr.bf16.mxu0 0
    %1293 = vmatpush1.bf16.xpose.msra.mxu0 0
    %1294 = vmatprep.subr.bf16.mxu0 0
    %1295 = vmatpush1.bf16.xpose.msra.mxu0 0
    %1296 = vmatprep.subr.bf16.mxu0 0
    %1297 = vmatpush1.bf16.xpose.msra.mxu0 0
    %1298 = vmatprep.subr.bf16.mxu0 0
    %1299 = vmatpush1.bf16.xpose.msra.mxu0 0
    %1300 = vmatprep.subr.bf16.mxu0 0
    %1301 = vmatpush1.bf16.xpose.msra.mxu0 0
    %1302 = vmatprep.subr.bf16.mxu0 0
    %1303 = vmatpush1.bf16.xpose.msra.mxu0 0
    %1304 = vmatprep.subr.bf16.mxu0 0
    %1305 = vmatpush1.bf16.xpose.msra.mxu0 0
    %1306 = vmatprep.mubr.bf16.mxu0 0
    %1307 = vmatmul.mubr.bf16.gmra.mrb[0].mxu0 %v1269
    %v1308 = vpop.f32.mrb[0].mxu0
    %v1309 = vadd.f32 %v332, %v1308
    %v1310 = vpop.f32.mrb[0].mxu0
    %v1311 = vpop.f32.mrb[0].mxu0
    %v1312 = vpop.f32.mrb[0].mxu0
    %1313 = vdwg.mxu0
    %v1315 = vsel %vm339, %v1263, 0
    %v1318 = vsel %vm339, %v1265, 0
    %1320 = vmatprep.subr.bf16.mxu0 0
    %1321 = vmatpush1.bf16.xpose.msra.mxu0 %v1318
    %1322 = vmatprep.subr.bf16.mxu0 0
    %1323 = vmatpush1.bf16.xpose.msra.mxu0 0
    %1324 = vmatprep.subr.bf16.mxu0 0
    %1325 = vmatpush1.bf16.xpose.msra.mxu0 0
    %1326 = vmatprep.subr.bf16.mxu0 0
    %1327 = vmatpush1.bf16.xpose.msra.mxu0 0
    %1328 = vmatprep.subr.bf16.mxu0 0
    %1329 = vmatpush1.bf16.xpose.msra.mxu0 0
    %1330 = vmatprep.subr.bf16.mxu0 0
    %1331 = vmatpush1.bf16.xpose.msra.mxu0 0
    %1332 = vmatprep.subr.bf16.mxu0 0
    %1333 = vmatpush1.bf16.xpose.msra.mxu0 0
    %1334 = vmatprep.subr.bf16.mxu0 0
    %1335 = vmatpush1.bf16.xpose.msra.mxu0 0
    %1336 = vmatprep.subr.bf16.mxu0 0
    %1337 = vmatpush1.bf16.xpose.msra.mxu0 0
    %1338 = vmatprep.subr.bf16.mxu0 0
    %1339 = vmatpush1.bf16.xpose.msra.mxu0 0
    %1340 = vmatprep.subr.bf16.mxu0 0
    %1341 = vmatpush1.bf16.xpose.msra.mxu0 0
    %1342 = vmatprep.subr.bf16.mxu0 0
    %1343 = vmatpush1.bf16.xpose.msra.mxu0 0
    %1344 = vmatprep.subr.bf16.mxu0 0
    %1345 = vmatpush1.bf16.xpose.msra.mxu0 0
    %1346 = vmatprep.subr.bf16.mxu0 0
    %1347 = vmatpush1.bf16.xpose.msra.mxu0 0
    %1348 = vmatprep.subr.bf16.mxu0 0
    %1349 = vmatpush1.bf16.xpose.msra.mxu0 0
    %1350 = vmatprep.subr.bf16.mxu0 0
    %1351 = vmatpush1.bf16.xpose.msra.mxu0 0
    %1352 = vmatprep.mubr.bf16.mxu0 0
    %1353 = vmatmul.mubr.bf16.gmra.mrb[0].mxu0 %v1315
    %v1354 = vpop.f32.mrb[0].mxu0
    %v1355 = vadd.f32 %v336, %v1354
    %v1356 = vpop.f32.mrb[0].mxu0
    %v1357 = vpop.f32.mrb[0].mxu0
    %v1358 = vpop.f32.mrb[0].mxu0
    %1359 = vdwg.mxu0
    %v1360 = vsel %vm339, %v1309, -inf
    %1361 = vmax.xlane.f32.xlu0 %v1360
    %v1362 = vpop.xlane.xlu0 %1361
    %v1363 = vsel %vm339, %v1355, -inf
    %1364 = vmax.xlane.f32.xlu0 %v1363
    %v1365 = vpop.xlane.xlu0 %1364
    %v1366 = vsub.f32 %v1309, %v1362
    %v1367 = vsub.f32 %v1355, %v1365
    %v1368 = vmul.f32 %v1366, 1.442695
    %v1369 = vpow.pop %v1368
    %v1370 = vmul.f32 %v1367, 1.442695
    %v1371 = vpow.pop %v1370
    %v1372 = vsel %vm339, %v1369, 0.0
    %1373 = vadd.xlane.f32.xlu0 %v1372
    %v1374 = vpop.xlane.xlu0 %1373
    %v1375 = vsel %vm339, %v1371, 0.0
    %1376 = vadd.xlane.f32.xlu0 %v1375
    %v1377 = vpop.xlane.xlu0 %1376
    %v1378 = vrcp.pop %v1374
    %v1379 = vrcp.pop %v1377
    %v1380 = vmul.f32 %v1369, %v1378
    %v1381 = vmul.f32 %v1371, %v1379
    %v1382 = vpack.c.bf16 %v1380, %v1380
    %v1383 = vpack.c.bf16 %v1381, %v1381
    %v1385 = vsel %vm339, %v1382, 0
    %v1388 = vsel %vm459, %v1266, 0
    %1390 = vmatprep.subr.bf16.mxu0 0
    %1391 = vmatpush1.bf16.msra.mxu0 %v1388
    %1392 = vmatprep.subr.bf16.mxu0 0
    %1393 = vmatpush1.bf16.msra.mxu0 0
    %1394 = vmatprep.subr.bf16.mxu0 0
    %1395 = vmatpush1.bf16.msra.mxu0 0
    %1396 = vmatprep.subr.bf16.mxu0 0
    %1397 = vmatpush1.bf16.msra.mxu0 0
    %1398 = vmatprep.subr.bf16.mxu0 0
    %1399 = vmatpush1.bf16.msra.mxu0 0
    %1400 = vmatprep.subr.bf16.mxu0 0
    %1401 = vmatpush1.bf16.msra.mxu0 0
    %1402 = vmatprep.subr.bf16.mxu0 0
    %1403 = vmatpush1.bf16.msra.mxu0 0
    %1404 = vmatprep.subr.bf16.mxu0 0
    %1405 = vmatpush1.bf16.msra.mxu0 0
    %1406 = vmatprep.subr.bf16.mxu0 0
    %1407 = vmatpush1.bf16.msra.mxu0 0
    %1408 = vmatprep.subr.bf16.mxu0 0
    %1409 = vmatpush1.bf16.msra.mxu0 0
    %1410 = vmatprep.subr.bf16.mxu0 0
    %1411 = vmatpush1.bf16.msra.mxu0 0
    %1412 = vmatprep.subr.bf16.mxu0 0
    %1413 = vmatpush1.bf16.msra.mxu0 0
    %1414 = vmatprep.subr.bf16.mxu0 0
    %1415 = vmatpush1.bf16.msra.mxu0 0
    %1416 = vmatprep.subr.bf16.mxu0 0
    %1417 = vmatpush1.bf16.msra.mxu0 0
    %1418 = vmatprep.subr.bf16.mxu0 0
    %1419 = vmatpush1.bf16.msra.mxu0 0
    %1420 = vmatprep.subr.bf16.mxu0 0
    %1421 = vmatpush1.bf16.msra.mxu0 0
    %1422 = vmatprep.mubr.bf16.mxu0 0
    %1423 = vmatmul.mubr.bf16.gmra.mrb[0].mxu0 %v1385
    %v1424 = vpop.f32.mrb[0].mxu0
    %v1425 = vadd.f32 0.0, %v1424
    %v1426 = vpop.f32.mrb[0].mxu0
    %v1427 = vpop.f32.mrb[0].mxu0
    %v1428 = vpop.f32.mrb[0].mxu0
    %1429 = vdwg.mxu0
    %v1431 = vsel %vm339, %v1383, 0
    %v1434 = vsel %vm459, %v1267, 0
    %1436 = vmatprep.subr.bf16.mxu0 0
    %1437 = vmatpush1.bf16.msra.mxu0 %v1434
    %1438 = vmatprep.subr.bf16.mxu0 0
    %1439 = vmatpush1.bf16.msra.mxu0 0
    %1440 = vmatprep.subr.bf16.mxu0 0
    %1441 = vmatpush1.bf16.msra.mxu0 0
    %1442 = vmatprep.subr.bf16.mxu0 0
    %1443 = vmatpush1.bf16.msra.mxu0 0
    %1444 = vmatprep.subr.bf16.mxu0 0
    %1445 = vmatpush1.bf16.msra.mxu0 0
    %1446 = vmatprep.subr.bf16.mxu0 0
    %1447 = vmatpush1.bf16.msra.mxu0 0
    %1448 = vmatprep.subr.bf16.mxu0 0
    %1449 = vmatpush1.bf16.msra.mxu0 0
    %1450 = vmatprep.subr.bf16.mxu0 0
    %1451 = vmatpush1.bf16.msra.mxu0 0
    %1452 = vmatprep.subr.bf16.mxu0 0
    %1453 = vmatpush1.bf16.msra.mxu0 0
    %1454 = vmatprep.subr.bf16.mxu0 0
    %1455 = vmatpush1.bf16.msra.mxu0 0
    %1456 = vmatprep.subr.bf16.mxu0 0
    %1457 = vmatpush1.bf16.msra.mxu0 0
    %1458 = vmatprep.subr.bf16.mxu0 0
    %1459 = vmatpush1.bf16.msra.mxu0 0
    %1460 = vmatprep.subr.bf16.mxu0 0
    %1461 = vmatpush1.bf16.msra.mxu0 0
    %1462 = vmatprep.subr.bf16.mxu0 0
    %1463 = vmatpush1.bf16.msra.mxu0 0
    %1464 = vmatprep.subr.bf16.mxu0 0
    %1465 = vmatpush1.bf16.msra.mxu0 0
    %1466 = vmatprep.subr.bf16.mxu0 0
    %1467 = vmatpush1.bf16.msra.mxu0 0
    %1468 = vmatprep.mubr.bf16.mxu0 0
    %1469 = vmatmul.mubr.bf16.gmra.mrb[0].mxu0 %v1431
    %v1470 = vpop.f32.mrb[0].mxu0
    %v1471 = vadd.f32 0.0, %v1470
    %v1472 = vpop.f32.mrb[0].mxu0
    %v1473 = vpop.f32.mrb[0].mxu0
    %v1474 = vpop.f32.mrb[0].mxu0
    %1475 = vdwg.mxu0
    %v1476 = vpack.c.bf16 %v1471, %v1425
    %s1477 = scalar_lea.vmem %s10, 8
    %v1478 = vld [vmem:[%s1477] sm:$0xf]
    %v1480 = vsel %vm339, %v1476, 0
    %v1483 = vsel %vm459, %v1478, 0
    %1485 = vmatprep.subr.bf16.mxu0 0
    %1486 = vmatpush1.bf16.msra.mxu0 %v1483
    %1487 = vmatprep.subr.bf16.mxu0 0
    %1488 = vmatpush1.bf16.msra.mxu0 0
    %1489 = vmatprep.subr.bf16.mxu0 0
    %1490 = vmatpush1.bf16.msra.mxu0 0
    %1491 = vmatprep.subr.bf16.mxu0 0
    %1492 = vmatpush1.bf16.msra.mxu0 0
    %1493 = vmatprep.subr.bf16.mxu0 0
    %1494 = vmatpush1.bf16.msra.mxu0 0
    %1495 = vmatprep.subr.bf16.mxu0 0
    %1496 = vmatpush1.bf16.msra.mxu0 0
    %1497 = vmatprep.subr.bf16.mxu0 0
    %1498 = vmatpush1.bf16.msra.mxu0 0
    %1499 = vmatprep.subr.bf16.mxu0 0
    %1500 = vmatpush1.bf16.msra.mxu0 0
    %1501 = vmatprep.subr.bf16.mxu0 0
    %1502 = vmatpush1.bf16.msra.mxu0 0
    %1503 = vmatprep.subr.bf16.mxu0 0
    %1504 = vmatpush1.bf16.msra.mxu0 0
    %1505 = vmatprep.subr.bf16.mxu0 0
    %1506 = vmatpush1.bf16.msra.mxu0 0
    %1507 = vmatprep.subr.bf16.mxu0 0
    %1508 = vmatpush1.bf16.msra.mxu0 0
    %1509 = vmatprep.subr.bf16.mxu0 0
    %1510 = vmatpush1.bf16.msra.mxu0 0
    %1511 = vmatprep.subr.bf16.mxu0 0
    %1512 = vmatpush1.bf16.msra.mxu0 0
    %1513 = vmatprep.subr.bf16.mxu0 0
    %1514 = vmatpush1.bf16.msra.mxu0 0
    %1515 = vmatprep.subr.bf16.mxu0 0
    %1516 = vmatpush1.bf16.msra.mxu0 0
    %1517 = vmatprep.mubr.bf16.mxu0 0
    %1518 = vmatmul.mubr.bf16.gmra.mrb[0].mxu0 %v1480
    %v1519 = vpop.f32.mrb[0].mxu0
    %v1520 = vadd.f32 0.0, %v1519
    %v1521 = vpop.f32.mrb[0].mxu0
    %v1522 = vpop.f32.mrb[0].mxu0
    %v1523 = vadd.f32 0.0, %v1522
    %v1524 = vpop.f32.mrb[0].mxu0
    %1525 = vdwg.mxu0
    %v1526 = vadd.f32 %v1056, %v1520
    %v1527 = vadd.f32 %v1059, %v1523
    %s1528 = scalar_lea.vmem %s4, 48
    %v1529 = vld [vmem:[%s1528] sm:$0xf]
    %v1530 = vld [vmem:[%s1528 + $0x4] sm:$0xf]
    %v1531 = vld [vmem:[%s1528 + $0x8] sm:$0xf]
    %v1532 = vld [vmem:[%s1528 + $0xc] sm:$0xf]
    %s1533 = scalar_lea.vmem %s5, 3
    %v1534 = vld [vmem:[%s1533] sm:$0x1]
    %v1536 = vlaneseq
    %v1537 = vshrl.u32 %v1536, 7
    %v1538 = vsub.s32 0, %v1537
    %v1539 = vrot.slane %v1534, %v1538
    %v1545 = vunpack.c.l.b16 %v1529
    %v1546 = vunpack.c.l.b16 %v1530
    %v1547 = vunpack.c.l.b16 %v1531
    %v1548 = vunpack.c.l.b16 %v1532
    %v1549 = vpack.c.b16 %v1546, %v1545
    %v1550 = vpack.c.b16 %v1548, %v1547
    %1553 = vmatprep.subr.bf16.mxu0 0
    %1554 = vmatpush1.bf16.msra.mxu0 %v1549
    %1555 = vmatprep.subr.bf16.mxu0 0
    %1556 = vmatpush1.bf16.msra.mxu0 %v1550
    %1557 = vmatprep.subr.bf16.mxu0 0
    %1558 = vmatpush1.bf16.msra.mxu0 0
    %1559 = vmatprep.subr.bf16.mxu0 0
    %1560 = vmatpush1.bf16.msra.mxu0 0
    %1561 = vmatprep.subr.bf16.mxu0 0
    %1562 = vmatpush1.bf16.msra.mxu0 0
    %1563 = vmatprep.subr.bf16.mxu0 0
    %1564 = vmatpush1.bf16.msra.mxu0 0
    %1565 = vmatprep.subr.bf16.mxu0 0
    %1566 = vmatpush1.bf16.msra.mxu0 0
    %1567 = vmatprep.subr.bf16.mxu0 0
    %1568 = vmatpush1.bf16.msra.mxu0 0
    %1569 = vmatprep.subr.bf16.mxu0 0
    %1570 = vmatpush1.bf16.msra.mxu0 0
    %1571 = vmatprep.subr.bf16.mxu0 0
    %1572 = vmatpush1.bf16.msra.mxu0 0
    %1573 = vmatprep.subr.bf16.mxu0 0
    %1574 = vmatpush1.bf16.msra.mxu0 0
    %1575 = vmatprep.subr.bf16.mxu0 0
    %1576 = vmatpush1.bf16.msra.mxu0 0
    %1577 = vmatprep.subr.bf16.mxu0 0
    %1578 = vmatpush1.bf16.msra.mxu0 0
    %1579 = vmatprep.subr.bf16.mxu0 0
    %1580 = vmatpush1.bf16.msra.mxu0 0
    %1581 = vmatprep.subr.bf16.mxu0 0
    %1582 = vmatpush1.bf16.msra.mxu0 0
    %1583 = vmatprep.subr.bf16.mxu0 0
    %1584 = vmatpush1.bf16.msra.mxu0 0
    %1585 = vmatprep.mubr.bf16.mxu0 0
    %1586 = vmatmul.mubr.bf16.gmra.mrb[0].mxu0 %v148
    %v1587 = vpop.f32.mrb[0].mxu0
    %v1588 = vadd.f32 %v1539, %v1587
    %v1589 = vpop.f32.mrb[0].mxu0
    %v1590 = vpop.f32.mrb[0].mxu0
    %v1591 = vadd.f32 %v1539, %v1590
    %v1592 = vpop.f32.mrb[0].mxu0
    %1593 = vdwg.mxu0
    %v1594 = vmul.f32 %v1588, 0.35355338
    %v1595 = vmul.f32 %v1591, 0.35355338
    %s1596 = scalar_lea.vmem %s6, 48
    %v1597 = vld [vmem:[%s1596] sm:$0xf]
    %v1598 = vld [vmem:[%s1596 + $0x4] sm:$0xf]
    %v1599 = vld [vmem:[%s1596 + $0x8] sm:$0xf]
    %v1600 = vld [vmem:[%s1596 + $0xc] sm:$0xf]
    %s1601 = scalar_lea.vmem %s7, 3
    %v1602 = vld [vmem:[%s1601] sm:$0x1]
    %v1604 = vlaneseq
    %v1605 = vshrl.u32 %v1604, 7
    %v1606 = vsub.s32 0, %v1605
    %v1607 = vrot.slane %v1602, %v1606
    %v1613 = vunpack.c.l.b16 %v1597
    %v1614 = vunpack.c.l.b16 %v1598
    %v1615 = vunpack.c.l.b16 %v1599
    %v1616 = vunpack.c.l.b16 %v1600
    %v1617 = vpack.c.b16 %v1614, %v1613
    %v1618 = vpack.c.b16 %v1616, %v1615
    %1621 = vmatprep.subr.bf16.mxu0 0
    %1622 = vmatpush1.bf16.msra.mxu0 %v1617
    %1623 = vmatprep.subr.bf16.mxu0 0
    %1624 = vmatpush1.bf16.msra.mxu0 %v1618
    %1625 = vmatprep.subr.bf16.mxu0 0
    %1626 = vmatpush1.bf16.msra.mxu0 0
    %1627 = vmatprep.subr.bf16.mxu0 0
    %1628 = vmatpush1.bf16.msra.mxu0 0
    %1629 = vmatprep.subr.bf16.mxu0 0
    %1630 = vmatpush1.bf16.msra.mxu0 0
    %1631 = vmatprep.subr.bf16.mxu0 0
    %1632 = vmatpush1.bf16.msra.mxu0 0
    %1633 = vmatprep.subr.bf16.mxu0 0
    %1634 = vmatpush1.bf16.msra.mxu0 0
    %1635 = vmatprep.subr.bf16.mxu0 0
    %1636 = vmatpush1.bf16.msra.mxu0 0
    %1637 = vmatprep.subr.bf16.mxu0 0
    %1638 = vmatpush1.bf16.msra.mxu0 0
    %1639 = vmatprep.subr.bf16.mxu0 0
    %1640 = vmatpush1.bf16.msra.mxu0 0
    %1641 = vmatprep.subr.bf16.mxu0 0
    %1642 = vmatpush1.bf16.msra.mxu0 0
    %1643 = vmatprep.subr.bf16.mxu0 0
    %1644 = vmatpush1.bf16.msra.mxu0 0
    %1645 = vmatprep.subr.bf16.mxu0 0
    %1646 = vmatpush1.bf16.msra.mxu0 0
    %1647 = vmatprep.subr.bf16.mxu0 0
    %1648 = vmatpush1.bf16.msra.mxu0 0
    %1649 = vmatprep.subr.bf16.mxu0 0
    %1650 = vmatpush1.bf16.msra.mxu0 0
    %1651 = vmatprep.subr.bf16.mxu0 0
    %1652 = vmatpush1.bf16.msra.mxu0 0
    %1653 = vmatprep.mubr.bf16.mxu0 0
    %1654 = vmatmul.mubr.bf16.gmra.mrb[0].mxu0 %v148
    %v1655 = vpop.f32.mrb[0].mxu0
    %v1656 = vadd.f32 %v1607, %v1655
    %v1657 = vpop.f32.mrb[0].mxu0
    %v1658 = vpop.f32.mrb[0].mxu0
    %v1659 = vadd.f32 %v1607, %v1658
    %v1660 = vpop.f32.mrb[0].mxu0
    %1661 = vdwg.mxu0
    %s1662 = scalar_lea.vmem %s8, 48
    %v1663 = vld [vmem:[%s1662] sm:$0xf]
    %v1664 = vld [vmem:[%s1662 + $0x4] sm:$0xf]
    %v1665 = vld [vmem:[%s1662 + $0x8] sm:$0xf]
    %v1666 = vld [vmem:[%s1662 + $0xc] sm:$0xf]
    %s1667 = scalar_lea.vmem %s9, 3
    %v1668 = vld [vmem:[%s1667] sm:$0x1]
    %v1670 = vlaneseq
    %v1671 = vshrl.u32 %v1670, 7
    %v1672 = vsub.s32 0, %v1671
    %v1673 = vrot.slane %v1668, %v1672
    %v1679 = vunpack.c.l.b16 %v1663
    %v1680 = vunpack.c.l.b16 %v1664
    %v1681 = vunpack.c.l.b16 %v1665
    %v1682 = vunpack.c.l.b16 %v1666
    %v1683 = vpack.c.b16 %v1680, %v1679
    %v1684 = vpack.c.b16 %v1682, %v1681
    %1687 = vmatprep.subr.bf16.mxu0 0
    %1688 = vmatpush1.bf16.msra.mxu0 %v1683
    %1689 = vmatprep.subr.bf16.mxu0 0
    %1690 = vmatpush1.bf16.msra.mxu0 %v1684
    %1691 = vmatprep.subr.bf16.mxu0 0
    %1692 = vmatpush1.bf16.msra.mxu0 0
    %1693 = vmatprep.subr.bf16.mxu0 0
    %1694 = vmatpush1.bf16.msra.mxu0 0
    %1695 = vmatprep.subr.bf16.mxu0 0
    %1696 = vmatpush1.bf16.msra.mxu0 0
    %1697 = vmatprep.subr.bf16.mxu0 0
    %1698 = vmatpush1.bf16.msra.mxu0 0
    %1699 = vmatprep.subr.bf16.mxu0 0
    %1700 = vmatpush1.bf16.msra.mxu0 0
    %1701 = vmatprep.subr.bf16.mxu0 0
    %1702 = vmatpush1.bf16.msra.mxu0 0
    %1703 = vmatprep.subr.bf16.mxu0 0
    %1704 = vmatpush1.bf16.msra.mxu0 0
    %1705 = vmatprep.subr.bf16.mxu0 0
    %1706 = vmatpush1.bf16.msra.mxu0 0
    %1707 = vmatprep.subr.bf16.mxu0 0
    %1708 = vmatpush1.bf16.msra.mxu0 0
    %1709 = vmatprep.subr.bf16.mxu0 0
    %1710 = vmatpush1.bf16.msra.mxu0 0
    %1711 = vmatprep.subr.bf16.mxu0 0
    %1712 = vmatpush1.bf16.msra.mxu0 0
    %1713 = vmatprep.subr.bf16.mxu0 0
    %1714 = vmatpush1.bf16.msra.mxu0 0
    %1715 = vmatprep.subr.bf16.mxu0 0
    %1716 = vmatpush1.bf16.msra.mxu0 0
    %1717 = vmatprep.subr.bf16.mxu0 0
    %1718 = vmatpush1.bf16.msra.mxu0 0
    %1719 = vmatprep.mubr.bf16.mxu0 0
    %1720 = vmatmul.mubr.bf16.gmra.mrb[0].mxu0 %v148
    %v1721 = vpop.f32.mrb[0].mxu0
    %v1722 = vadd.f32 %v1673, %v1721
    %v1723 = vpop.f32.mrb[0].mxu0
    %v1724 = vpop.f32.mrb[0].mxu0
    %v1725 = vadd.f32 %v1673, %v1724
    %v1726 = vpop.f32.mrb[0].mxu0
    %1727 = vdwg.mxu0
    %v1728 = vpack.c.bf16 %v1594, %v1594
    %v1729 = vpack.c.bf16 %v1595, %v1595
    %v1730 = vpack.c.bf16 %v1656, %v1656
    %v1731 = vpack.c.bf16 %v1659, %v1659
    %v1732 = vpack.c.bf16 %v1722, %v1722
    %v1733 = vpack.c.bf16 %v1725, %v1725
    %v1735 = vsel %vm339, %v1728, 0
    %v1738 = vsel %vm339, %v1730, 0
    %1740 = vmatprep.subr.bf16.mxu0 0
    %1741 = vmatpush1.bf16.xpose.msra.mxu0 %v1738
    %1742 = vmatprep.subr.bf16.mxu0 0
    %1743 = vmatpush1.bf16.xpose.msra.mxu0 0
    %1744 = vmatprep.subr.bf16.mxu0 0
    %1745 = vmatpush1.bf16.xpose.msra.mxu0 0
    %1746 = vmatprep.subr.bf16.mxu0 0
    %1747 = vmatpush1.bf16.xpose.msra.mxu0 0
    %1748 = vmatprep.subr.bf16.mxu0 0
    %1749 = vmatpush1.bf16.xpose.msra.mxu0 0
    %1750 = vmatprep.subr.bf16.mxu0 0
    %1751 = vmatpush1.bf16.xpose.msra.mxu0 0
    %1752 = vmatprep.subr.bf16.mxu0 0
    %1753 = vmatpush1.bf16.xpose.msra.mxu0 0
    %1754 = vmatprep.subr.bf16.mxu0 0
    %1755 = vmatpush1.bf16.xpose.msra.mxu0 0
    %1756 = vmatprep.subr.bf16.mxu0 0
    %1757 = vmatpush1.bf16.xpose.msra.mxu0 0
    %1758 = vmatprep.subr.bf16.mxu0 0
    %1759 = vmatpush1.bf16.xpose.msra.mxu0 0
    %1760 = vmatprep.subr.bf16.mxu0 0
    %1761 = vmatpush1.bf16.xpose.msra.mxu0 0
    %1762 = vmatprep.subr.bf16.mxu0 0
    %1763 = vmatpush1.bf16.xpose.msra.mxu0 0
    %1764 = vmatprep.subr.bf16.mxu0 0
    %1765 = vmatpush1.bf16.xpose.msra.mxu0 0
    %1766 = vmatprep.subr.bf16.mxu0 0
    %1767 = vmatpush1.bf16.xpose.msra.mxu0 0
    %1768 = vmatprep.subr.bf16.mxu0 0
    %1769 = vmatpush1.bf16.xpose.msra.mxu0 0
    %1770 = vmatprep.subr.bf16.mxu0 0
    %1771 = vmatpush1.bf16.xpose.msra.mxu0 0
    %1772 = vmatprep.mubr.bf16.mxu0 0
    %1773 = vmatmul.mubr.bf16.gmra.mrb[0].mxu0 %v1735
    %v1774 = vpop.f32.mrb[0].mxu0
    %v1775 = vadd.f32 %v332, %v1774
    %v1776 = vpop.f32.mrb[0].mxu0
    %v1777 = vpop.f32.mrb[0].mxu0
    %v1778 = vpop.f32.mrb[0].mxu0
    %1779 = vdwg.mxu0
    %v1781 = vsel %vm339, %v1729, 0
    %v1784 = vsel %vm339, %v1731, 0
    %1786 = vmatprep.subr.bf16.mxu0 0
    %1787 = vmatpush1.bf16.xpose.msra.mxu0 %v1784
    %1788 = vmatprep.subr.bf16.mxu0 0
    %1789 = vmatpush1.bf16.xpose.msra.mxu0 0
    %1790 = vmatprep.subr.bf16.mxu0 0
    %1791 = vmatpush1.bf16.xpose.msra.mxu0 0
    %1792 = vmatprep.subr.bf16.mxu0 0
    %1793 = vmatpush1.bf16.xpose.msra.mxu0 0
    %1794 = vmatprep.subr.bf16.mxu0 0
    %1795 = vmatpush1.bf16.xpose.msra.mxu0 0
    %1796 = vmatprep.subr.bf16.mxu0 0
    %1797 = vmatpush1.bf16.xpose.msra.mxu0 0
    %1798 = vmatprep.subr.bf16.mxu0 0
    %1799 = vmatpush1.bf16.xpose.msra.mxu0 0
    %1800 = vmatprep.subr.bf16.mxu0 0
    %1801 = vmatpush1.bf16.xpose.msra.mxu0 0
    %1802 = vmatprep.subr.bf16.mxu0 0
    %1803 = vmatpush1.bf16.xpose.msra.mxu0 0
    %1804 = vmatprep.subr.bf16.mxu0 0
    %1805 = vmatpush1.bf16.xpose.msra.mxu0 0
    %1806 = vmatprep.subr.bf16.mxu0 0
    %1807 = vmatpush1.bf16.xpose.msra.mxu0 0
    %1808 = vmatprep.subr.bf16.mxu0 0
    %1809 = vmatpush1.bf16.xpose.msra.mxu0 0
    %1810 = vmatprep.subr.bf16.mxu0 0
    %1811 = vmatpush1.bf16.xpose.msra.mxu0 0
    %1812 = vmatprep.subr.bf16.mxu0 0
    %1813 = vmatpush1.bf16.xpose.msra.mxu0 0
    %1814 = vmatprep.subr.bf16.mxu0 0
    %1815 = vmatpush1.bf16.xpose.msra.mxu0 0
    %1816 = vmatprep.subr.bf16.mxu0 0
    %1817 = vmatpush1.bf16.xpose.msra.mxu0 0
    %1818 = vmatprep.mubr.bf16.mxu0 0
    %1819 = vmatmul.mubr.bf16.gmra.mrb[0].mxu0 %v1781
    %v1820 = vpop.f32.mrb[0].mxu0
    %v1821 = vadd.f32 %v336, %v1820
    %v1822 = vpop.f32.mrb[0].mxu0
    %v1823 = vpop.f32.mrb[0].mxu0
    %v1824 = vpop.f32.mrb[0].mxu0
    %1825 = vdwg.mxu0
    %v1826 = vsel %vm339, %v1775, -inf
    %1827 = vmax.xlane.f32.xlu0 %v1826
    %v1828 = vpop.xlane.xlu0 %1827
    %v1829 = vsel %vm339, %v1821, -inf
    %1830 = vmax.xlane.f32.xlu0 %v1829
    %v1831 = vpop.xlane.xlu0 %1830
    %v1832 = vsub.f32 %v1775, %v1828
    %v1833 = vsub.f32 %v1821, %v1831
    %v1834 = vmul.f32 %v1832, 1.442695
    %v1835 = vpow.pop %v1834
    %v1836 = vmul.f32 %v1833, 1.442695
    %v1837 = vpow.pop %v1836
    %v1838 = vsel %vm339, %v1835, 0.0
    %1839 = vadd.xlane.f32.xlu0 %v1838
    %v1840 = vpop.xlane.xlu0 %1839
    %v1841 = vsel %vm339, %v1837, 0.0
    %1842 = vadd.xlane.f32.xlu0 %v1841
    %v1843 = vpop.xlane.xlu0 %1842
    %v1844 = vrcp.pop %v1840
    %v1845 = vrcp.pop %v1843
    %v1846 = vmul.f32 %v1835, %v1844
    %v1847 = vmul.f32 %v1837, %v1845
    %v1848 = vpack.c.bf16 %v1846, %v1846
    %v1849 = vpack.c.bf16 %v1847, %v1847
    %v1851 = vsel %vm339, %v1848, 0
    %v1854 = vsel %vm459, %v1732, 0
    %1856 = vmatprep.subr.bf16.mxu0 0
    %1857 = vmatpush1.bf16.msra.mxu0 %v1854
    %1858 = vmatprep.subr.bf16.mxu0 0
    %1859 = vmatpush1.bf16.msra.mxu0 0
    %1860 = vmatprep.subr.bf16.mxu0 0
    %1861 = vmatpush1.bf16.msra.mxu0 0
    %1862 = vmatprep.subr.bf16.mxu0 0
    %1863 = vmatpush1.bf16.msra.mxu0 0
    %1864 = vmatprep.subr.bf16.mxu0 0
    %1865 = vmatpush1.bf16.msra.mxu0 0
    %1866 = vmatprep.subr.bf16.mxu0 0
    %1867 = vmatpush1.bf16.msra.mxu0 0
    %1868 = vmatprep.subr.bf16.mxu0 0
    %1869 = vmatpush1.bf16.msra.mxu0 0
    %1870 = vmatprep.subr.bf16.mxu0 0
    %1871 = vmatpush1.bf16.msra.mxu0 0
    %1872 = vmatprep.subr.bf16.mxu0 0
    %1873 = vmatpush1.bf16.msra.mxu0 0
    %1874 = vmatprep.subr.bf16.mxu0 0
    %1875 = vmatpush1.bf16.msra.mxu0 0
    %1876 = vmatprep.subr.bf16.mxu0 0
    %1877 = vmatpush1.bf16.msra.mxu0 0
    %1878 = vmatprep.subr.bf16.mxu0 0
    %1879 = vmatpush1.bf16.msra.mxu0 0
    %1880 = vmatprep.subr.bf16.mxu0 0
    %1881 = vmatpush1.bf16.msra.mxu0 0
    %1882 = vmatprep.subr.bf16.mxu0 0
    %1883 = vmatpush1.bf16.msra.mxu0 0
    %1884 = vmatprep.subr.bf16.mxu0 0
    %1885 = vmatpush1.bf16.msra.mxu0 0
    %1886 = vmatprep.subr.bf16.mxu0 0
    %1887 = vmatpush1.bf16.msra.mxu0 0
    %1888 = vmatprep.mubr.bf16.mxu0 0
    %1889 = vmatmul.mubr.bf16.gmra.mrb[0].mxu0 %v1851
    %v1890 = vpop.f32.mrb[0].mxu0
    %v1891 = vadd.f32 0.0, %v1890
    %v1892 = vpop.f32.mrb[0].mxu0
    %v1893 = vpop.f32.mrb[0].mxu0
    %v1894 = vpop.f32.mrb[0].mxu0
    %1895 = vdwg.mxu0
    %v1897 = vsel %vm339, %v1849, 0
    %v1900 = vsel %vm459, %v1733, 0
    %1902 = vmatprep.subr.bf16.mxu0 0
    %1903 = vmatpush1.bf16.msra.mxu0 %v1900
    %1904 = vmatprep.subr.bf16.mxu0 0
    %1905 = vmatpush1.bf16.msra.mxu0 0
    %1906 = vmatprep.subr.bf16.mxu0 0
    %1907 = vmatpush1.bf16.msra.mxu0 0
    %1908 = vmatprep.subr.bf16.mxu0 0
    %1909 = vmatpush1.bf16.msra.mxu0 0
    %1910 = vmatprep.subr.bf16.mxu0 0
    %1911 = vmatpush1.bf16.msra.mxu0 0
    %1912 = vmatprep.subr.bf16.mxu0 0
    %1913 = vmatpush1.bf16.msra.mxu0 0
    %1914 = vmatprep.subr.bf16.mxu0 0
    %1915 = vmatpush1.bf16.msra.mxu0 0
    %1916 = vmatprep.subr.bf16.mxu0 0
    %1917 = vmatpush1.bf16.msra.mxu0 0
    %1918 = vmatprep.subr.bf16.mxu0 0
    %1919 = vmatpush1.bf16.msra.mxu0 0
    %1920 = vmatprep.subr.bf16.mxu0 0
    %1921 = vmatpush1.bf16.msra.mxu0 0
    %1922 = vmatprep.subr.bf16.mxu0 0
    %1923 = vmatpush1.bf16.msra.mxu0 0
    %1924 = vmatprep.subr.bf16.mxu0 0
    %1925 = vmatpush1.bf16.msra.mxu0 0
    %1926 = vmatprep.subr.bf16.mxu0 0
    %1927 = vmatpush1.bf16.msra.mxu0 0
    %1928 = vmatprep.subr.bf16.mxu0 0
    %1929 = vmatpush1.bf16.msra.mxu0 0
    %1930 = vmatprep.subr.bf16.mxu0 0
    %1931 = vmatpush1.bf16.msra.mxu0 0
    %1932 = vmatprep.subr.bf16.mxu0 0
    %1933 = vmatpush1.bf16.msra.mxu0 0
    %1934 = vmatprep.mubr.bf16.mxu0 0
    %1935 = vmatmul.mubr.bf16.gmra.mrb[0].mxu0 %v1897
    %v1936 = vpop.f32.mrb[0].mxu0
    %v1937 = vadd.f32 0.0, %v1936
    %v1938 = vpop.f32.mrb[0].mxu0
    %v1939 = vpop.f32.mrb[0].mxu0
    %v1940 = vpop.f32.mrb[0].mxu0
    %1941 = vdwg.mxu0
    %v1942 = vpack.c.bf16 %v1937, %v1891
    %s1943 = scalar_lea.vmem %s10, 12
    %v1944 = vld [vmem:[%s1943] sm:$0xf]
    %v1946 = vsel %vm339, %v1942, 0
    %v1949 = vsel %vm459, %v1944, 0
    %1951 = vmatprep.subr.bf16.mxu0 0
    %1952 = vmatpush1.bf16.msra.mxu0 %v1949
    %1953 = vmatprep.subr.bf16.mxu0 0
    %1954 = vmatpush1.bf16.msra.mxu0 0
    %1955 = vmatprep.subr.bf16.mxu0 0
    %1956 = vmatpush1.bf16.msra.mxu0 0
    %1957 = vmatprep.subr.bf16.mxu0 0
    %1958 = vmatpush1.bf16.msra.mxu0 0
    %1959 = vmatprep.subr.bf16.mxu0 0
    %1960 = vmatpush1.bf16.msra.mxu0 0
    %1961 = vmatprep.subr.bf16.mxu0 0
    %1962 = vmatpush1.bf16.msra.mxu0 0
    %1963 = vmatprep.subr.bf16.mxu0 0
    %1964 = vmatpush1.bf16.msra.mxu0 0
    %1965 = vmatprep.subr.bf16.mxu0 0
    %1966 = vmatpush1.bf16.msra.mxu0 0
    %1967 = vmatprep.subr.bf16.mxu0 0
    %1968 = vmatpush1.bf16.msra.mxu0 0
    %1969 = vmatprep.subr.bf16.mxu0 0
    %1970 = vmatpush1.bf16.msra.mxu0 0
    %1971 = vmatprep.subr.bf16.mxu0 0
    %1972 = vmatpush1.bf16.msra.mxu0 0
    %1973 = vmatprep.subr.bf16.mxu0 0
    %1974 = vmatpush1.bf16.msra.mxu0 0
    %1975 = vmatprep.subr.bf16.mxu0 0
    %1976 = vmatpush1.bf16.msra.mxu0 0
    %1977 = vmatprep.subr.bf16.mxu0 0
    %1978 = vmatpush1.bf16.msra.mxu0 0
    %1979 = vmatprep.subr.bf16.mxu0 0
    %1980 = vmatpush1.bf16.msra.mxu0 0
    %1981 = vmatprep.subr.bf16.mxu0 0
    %1982 = vmatpush1.bf16.msra.mxu0 0
    %1983 = vmatprep.mubr.bf16.mxu0 0
    %1984 = vmatmul.mubr.bf16.gmra.mrb[0].mxu0 %v1946
    %v1985 = vpop.f32.mrb[0].mxu0
    %v1986 = vadd.f32 0.0, %v1985
    %v1987 = vpop.f32.mrb[0].mxu0
    %v1988 = vpop.f32.mrb[0].mxu0
    %v1989 = vadd.f32 0.0, %v1988
    %v1990 = vpop.f32.mrb[0].mxu0
    %1991 = vdwg.mxu0
    %v1992 = vadd.f32 %v1526, %v1986
    %v1993 = vadd.f32 %v1527, %v1989
    %v1994 = vld [vmem:[%s11] sm:$0x1]
    %v1996 = vlaneseq
    %v1997 = vshrl.u32 %v1996, 7
    %v1998 = vsub.s32 0, %v1997
    %v1999 = vrot.slane %v1994, %v1998
    %v2001 = vadd.f32 %v1992, %v1999
    %v2002 = vadd.f32 %v1993, %v1999
    %v2003 = vadd.f32 %v119, %v2001
    %v2004 = vadd.f32 %v120, %v2002
    %v2005 = vld [vmem:[%s12] sm:$0x1]
    %v2006 = vld [vmem:[%s13] sm:$0x1]
    %v2007 = vsel %vm77, %v2003, 0.0
    %2008 = vadd.xlane.f32.xlu0 %v2007
    %v2009 = vpop.xlane.xlu0 %2008
    %v2010 = vsel %vm77, %v2004, 0.0
    %2011 = vadd.xlane.f32.xlu0 %v2010
    %v2012 = vpop.xlane.xlu0 %2011
    %v2013 = vmul.f32 %v2009, %v84
    %v2014 = vmul.f32 %v2012, %v84
    %v2015 = vsub.f32 %v2003, %v2013
    %v2016 = vsub.f32 %v2004, %v2014
    %v2017 = vmul.f32 %v2015, %v2015
    %v2018 = vmul.f32 %v2016, %v2016
    %v2019 = vsel %vm77, %v2017, 0.0
    %2020 = vadd.xlane.f32.xlu0 %v2019
    %v2021 = vpop.xlane.xlu0 %2020
    %v2022 = vsel %vm77, %v2018, 0.0
    %2023 = vadd.xlane.f32.xlu0 %v2022
    %v2024 = vpop.xlane.xlu0 %2023
    %v2025 = vmul.f32 %v2021, %v84
    %v2026 = vmul.f32 %v2024, %v84
    %v2027 = vadd.f32 %v2025, 1e-12
    %v2028 = vadd.f32 %v2026, 1e-12
    %v2029 = vrsqrt.pop %v2027
    %v2030 = vrsqrt.pop %v2028
    %v2031 = vmul.f32 %v2015, %v2029
    %v2032 = vmul.f32 %v2016, %v2030
    %v2034 = vlaneseq
    %v2035 = vshrl.u32 %v2034, 7
    %v2036 = vsub.s32 0, %v2035
    %v2037 = vrot.slane %v2005, %v2036
    %v2039 = vmul.f32 %v2031, %v2037
    %v2040 = vmul.f32 %v2032, %v2037
    %v2042 = vlaneseq
    %v2043 = vshrl.u32 %v2042, 7
    %v2044 = vsub.s32 0, %v2043
    %v2045 = vrot.slane %v2006, %v2044
    %v2047 = vadd.f32 %v2039, %v2045
    %v2048 = vadd.f32 %v2040, %v2045
    %v2049 = vpack.c.bf16 %v2048, %v2047
    %v2050 = vld [vmem:[%s14] sm:$0xf]
    %v2051 = vld [vmem:[%s14 + $0x4] sm:$0xf]
    %v2052 = vld [vmem:[%s14 + $0x8] sm:$0xf]
    %v2053 = vld [vmem:[%s14 + $0xc] sm:$0xf]
    %v2054 = vld [vmem:[%s15] sm:$0x1]
    %v2056 = vlaneseq
    %v2057 = vshrl.u32 %v2056, 7
    %v2058 = vsub.s32 0, %v2057
    %v2059 = vrot.slane %v2054, %v2058
    %v2065 = vunpack.c.l.b16 %v2050
    %v2066 = vunpack.c.l.b16 %v2051
    %v2067 = vunpack.c.l.b16 %v2052
    %v2068 = vunpack.c.l.b16 %v2053
    %v2069 = vpack.c.b16 %v2066, %v2065
    %v2070 = vpack.c.b16 %v2068, %v2067
    %v2074 = vsel %vm77, %v2049, 0
    %2076 = vmatprep.subr.bf16.mxu0 0
    %2077 = vmatpush1.bf16.msra.mxu0 %v2069
    %2078 = vmatprep.subr.bf16.mxu0 0
    %2079 = vmatpush1.bf16.msra.mxu0 %v2070
    %2080 = vmatprep.subr.bf16.mxu0 0
    %2081 = vmatpush1.bf16.msra.mxu0 0
    %2082 = vmatprep.subr.bf16.mxu0 0
    %2083 = vmatpush1.bf16.msra.mxu0 0
    %2084 = vmatprep.subr.bf16.mxu0 0
    %2085 = vmatpush1.bf16.msra.mxu0 0
    %2086 = vmatprep.subr.bf16.mxu0 0
    %2087 = vmatpush1.bf16.msra.mxu0 0
    %2088 = vmatprep.subr.bf16.mxu0 0
    %2089 = vmatpush1.bf16.msra.mxu0 0
    %2090 = vmatprep.subr.bf16.mxu0 0
    %2091 = vmatpush1.bf16.msra.mxu0 0
    %2092 = vmatprep.subr.bf16.mxu0 0
    %2093 = vmatpush1.bf16.msra.mxu0 0
    %2094 = vmatprep.subr.bf16.mxu0 0
    %2095 = vmatpush1.bf16.msra.mxu0 0
    %2096 = vmatprep.subr.bf16.mxu0 0
    %2097 = vmatpush1.bf16.msra.mxu0 0
    %2098 = vmatprep.subr.bf16.mxu0 0
    %2099 = vmatpush1.bf16.msra.mxu0 0
    %2100 = vmatprep.subr.bf16.mxu0 0
    %2101 = vmatpush1.bf16.msra.mxu0 0
    %2102 = vmatprep.subr.bf16.mxu0 0
    %2103 = vmatpush1.bf16.msra.mxu0 0
    %2104 = vmatprep.subr.bf16.mxu0 0
    %2105 = vmatpush1.bf16.msra.mxu0 0
    %2106 = vmatprep.subr.bf16.mxu0 0
    %2107 = vmatpush1.bf16.msra.mxu0 0
    %2108 = vmatprep.mubr.bf16.mxu0 0
    %2109 = vmatmul.mubr.bf16.gmra.mrb[0].mxu0 %v2074
    %v2110 = vpop.f32.mrb[0].mxu0
    %v2111 = vadd.f32 %v2059, %v2110
    %v2112 = vpop.f32.mrb[0].mxu0
    %v2113 = vpop.f32.mrb[0].mxu0
    %v2114 = vadd.f32 %v2059, %v2113
    %v2115 = vpop.f32.mrb[0].mxu0
    %2116 = vdwg.mxu0
    %v2117 = vmul.f32 %v2111, 0.5
    %v2118 = vmul.f32 %v2114, 0.5
    %v2119 = vmul.f32 %v2111, 0.044715
    %v2120 = vmul.f32 %v2114, 0.044715
    %v2121 = vmul.f32 %v2119, %v2111
    %v2122 = vmul.f32 %v2120, %v2114
    %v2123 = vmul.f32 %v2121, %v2111
    %v2124 = vmul.f32 %v2122, %v2114
    %v2125 = vadd.f32 %v2111, %v2123
    %v2126 = vadd.f32 %v2114, %v2124
    %v2127 = vmul.f32 %v2125, 0.7978846
    %v2128 = vmul.f32 %v2126, 0.7978846
    %v2129 = vtanh.pop %v2127
    %v2130 = vtanh.pop %v2128
    %v2131 = vadd.f32 %v2129, 1.0
    %v2132 = vadd.f32 %v2130, 1.0
    %v2133 = vmul.f32 %v2117, %v2131
    %v2134 = vmul.f32 %v2118, %v2132
    %v2135 = vpack.c.bf16 %v2134, %v2133
    %v2136 = vld [vmem:[%s16] sm:$0xf]
    %v2137 = vld [vmem:[%s16 + $0x4] sm:$0xf]
    %v2138 = vld [vmem:[%s16 + $0x8] sm:$0xf]
    %v2139 = vld [vmem:[%s16 + $0xc] sm:$0xf]
    %v2140 = vld [vmem:[%s16 + $0x10] sm:$0xf]
    %v2141 = vld [vmem:[%s16 + $0x14] sm:$0xf]
    %v2142 = vld [vmem:[%s16 + $0x18] sm:$0xf]
    %v2143 = vld [vmem:[%s16 + $0x1c] sm:$0xf]
    %v2144 = vld [vmem:[%s17] sm:$0x1]
    %v2146 = vlaneseq
    %v2147 = vshrl.u32 %v2146, 7
    %v2148 = vsub.s32 0, %v2147
    %v2149 = vrot.slane %v2144, %v2148
    %v2159 = vunpack.c.l.b16 %v2136
    %v2160 = vunpack.c.l.b16 %v2137
    %v2161 = vunpack.c.l.b16 %v2138
    %v2162 = vunpack.c.l.b16 %v2139
    %v2163 = vunpack.c.l.b16 %v2140
    %v2164 = vunpack.c.l.b16 %v2141
    %v2165 = vunpack.c.l.b16 %v2142
    %v2166 = vunpack.c.l.b16 %v2143
    %v2167 = vpack.c.b16 %v2160, %v2159
    %v2168 = vpack.c.b16 %v2162, %v2161
    %v2169 = vpack.c.b16 %v2164, %v2163
    %v2170 = vpack.c.b16 %v2166, %v2165
    %vm2175 = vcmask 523264
    %v2177 = vsel %vm2175, %v2135, 0
    %2179 = vmatprep.subr.bf16.mxu0 0
    %2180 = vmatpush1.bf16.msra.mxu0 %v2167
    %2181 = vmatprep.subr.bf16.mxu0 0
    %2182 = vmatpush1.bf16.msra.mxu0 %v2168
    %2183 = vmatprep.subr.bf16.mxu0 0
    %2184 = vmatpush1.bf16.msra.mxu0 %v2169
    %2185 = vmatprep.subr.bf16.mxu0 0
    %2186 = vmatpush1.bf16.msra.mxu0 %v2170
    %2187 = vmatprep.subr.bf16.mxu0 0
    %2188 = vmatpush1.bf16.msra.mxu0 0
    %2189 = vmatprep.subr.bf16.mxu0 0
    %2190 = vmatpush1.bf16.msra.mxu0 0
    %2191 = vmatprep.subr.bf16.mxu0 0
    %2192 = vmatpush1.bf16.msra.mxu0 0
    %2193 = vmatprep.subr.bf16.mxu0 0
    %2194 = vmatpush1.bf16.msra.mxu0 0
    %2195 = vmatprep.subr.bf16.mxu0 0
    %2196 = vmatpush1.bf16.msra.mxu0 0
    %2197 = vmatprep.subr.bf16.mxu0 0
    %2198 = vmatpush1.bf16.msra.mxu0 0
    %2199 = vmatprep.subr.bf16.mxu0 0
    %2200 = vmatpush1.bf16.msra.mxu0 0
    %2201 = vmatprep.subr.bf16.mxu0 0
    %2202 = vmatpush1.bf16.msra.mxu0 0
    %2203 = vmatprep.subr.bf16.mxu0 0
    %2204 = vmatpush1.bf16.msra.mxu0 0
    %2205 = vmatprep.subr.bf16.mxu0 0
    %2206 = vmatpush1.bf16.msra.mxu0 0
    %2207 = vmatprep.subr.bf16.mxu0 0
    %2208 = vmatpush1.bf16.msra.mxu0 0
    %2209 = vmatprep.subr.bf16.mxu0 0
    %2210 = vmatpush1.bf16.msra.mxu0 0
    %2211 = vmatprep.mubr.bf16.mxu0 0
    %2212 = vmatmul.mubr.bf16.gmra.mrb[0].mxu0 %v2177
    %v2213 = vpop.f32.mrb[0].mxu0
    %v2214 = vadd.f32 %v2149, %v2213
    %v2215 = vpop.f32.mrb[0].mxu0
    %v2216 = vpop.f32.mrb[0].mxu0
    %v2217 = vadd.f32 %v2149, %v2216
    %v2218 = vpop.f32.mrb[0].mxu0
    %2219 = vdwg.mxu0
    %v2220 = vadd.f32 %v2047, %v2214
    %v2221 = vadd.f32 %v2048, %v2217
    %v2222 = vld [vmem:[%s18] sm:$0x1]
    %v2223 = vld [vmem:[%s19] sm:$0x1]
    %v2224 = vsel %vm77, %v2220, 0.0
    %2225 = vadd.xlane.f32.xlu0 %v2224
    %v2226 = vpop.xlane.xlu0 %2225
    %v2227 = vsel %vm77, %v2221, 0.0
    %2228 = vadd.xlane.f32.xlu0 %v2227
    %v2229 = vpop.xlane.xlu0 %2228
    %v2230 = vmul.f32 %v2226, %v84
    %v2231 = vmul.f32 %v2229, %v84
    %v2232 = vsub.f32 %v2220, %v2230
    %v2233 = vsub.f32 %v2221, %v2231
    %v2234 = vmul.f32 %v2232, %v2232
    %v2235 = vmul.f32 %v2233, %v2233
    %v2236 = vsel %vm77, %v2234, 0.0
    %2237 = vadd.xlane.f32.xlu0 %v2236
    %v2238 = vpop.xlane.xlu0 %2237
    %v2239 = vsel %vm77, %v2235, 0.0
    %2240 = vadd.xlane.f32.xlu0 %v2239
    %v2241 = vpop.xlane.xlu0 %2240
    %v2242 = vmul.f32 %v2238, %v84
    %v2243 = vmul.f32 %v2241, %v84
    %v2244 = vadd.f32 %v2242, 1e-12
    %v2245 = vadd.f32 %v2243, 1e-12
    %v2246 = vrsqrt.pop %v2244
    %v2247 = vrsqrt.pop %v2245
    %v2248 = vmul.f32 %v2232, %v2246
    %v2249 = vmul.f32 %v2233, %v2247
    %v2251 = vlaneseq
    %v2252 = vshrl.u32 %v2251, 7
    %v2253 = vsub.s32 0, %v2252
    %v2254 = vrot.slane %v2222, %v2253
    %v2256 = vmul.f32 %v2248, %v2254
    %v2257 = vmul.f32 %v2249, %v2254
    %v2259 = vlaneseq
    %v2260 = vshrl.u32 %v2259, 7
    %v2261 = vsub.s32 0, %v2260
    %v2262 = vrot.slane %v2223, %v2261
    %v2264 = vadd.f32 %v2256, %v2262
    %v2265 = vadd.f32 %v2257, %v2262
    %v2266 = vpack.c.bf16 %v2265, %v2264
    %s2267 = scalar_lea.vmem %s4, 64
    %v2268 = vld [vmem:[%s2267] sm:$0xf]
    %v2269 = vld [vmem:[%s2267 + $0x4] sm:$0xf]
    %v2270 = vld [vmem:[%s2267 + $0x8] sm:$0xf]
    %v2271 = vld [vmem:[%s2267 + $0xc] sm:$0xf]
    %s2272 = scalar_lea.vmem %s5, 4
    %v2273 = vld [vmem:[%s2272] sm:$0x1]
    %v2275 = vlaneseq
    %v2276 = vshrl.u32 %v2275, 7
    %v2277 = vsub.s32 0, %v2276
    %v2278 = vrot.slane %v2273, %v2277
    %v2284 = vunpack.c.l.b16 %v2268
    %v2285 = vunpack.c.l.b16 %v2269
    %v2286 = vunpack.c.l.b16 %v2270
    %v2287 = vunpack.c.l.b16 %v2271
    %v2288 = vpack.c.b16 %v2285, %v2284
    %v2289 = vpack.c.b16 %v2287, %v2286
    %v2293 = vsel %vm77, %v2266, 0
    %2295 = vmatprep.subr.bf16.mxu0 0
    %2296 = vmatpush1.bf16.msra.mxu0 %v2288
    %2297 = vmatprep.subr.bf16.mxu0 0
    %2298 = vmatpush1.bf16.msra.mxu0 %v2289
    %2299 = vmatprep.subr.bf16.mxu0 0
    %2300 = vmatpush1.bf16.msra.mxu0 0
    %2301 = vmatprep.subr.bf16.mxu0 0
    %2302 = vmatpush1.bf16.msra.mxu0 0
    %2303 = vmatprep.subr.bf16.mxu0 0
    %2304 = vmatpush1.bf16.msra.mxu0 0
    %2305 = vmatprep.subr.bf16.mxu0 0
    %2306 = vmatpush1.bf16.msra.mxu0 0
    %2307 = vmatprep.subr.bf16.mxu0 0
    %2308 = vmatpush1.bf16.msra.mxu0 0
    %2309 = vmatprep.subr.bf16.mxu0 0
    %2310 = vmatpush1.bf16.msra.mxu0 0
    %2311 = vmatprep.subr.bf16.mxu0 0
    %2312 = vmatpush1.bf16.msra.mxu0 0
    %2313 = vmatprep.subr.bf16.mxu0 0
    %2314 = vmatpush1.bf16.msra.mxu0 0
    %2315 = vmatprep.subr.bf16.mxu0 0
    %2316 = vmatpush1.bf16.msra.mxu0 0
    %2317 = vmatprep.subr.bf16.mxu0 0
    %2318 = vmatpush1.bf16.msra.mxu0 0
    %2319 = vmatprep.subr.bf16.mxu0 0
    %2320 = vmatpush1.bf16.msra.mxu0 0
    %2321 = vmatprep.subr.bf16.mxu0 0
    %2322 = vmatpush1.bf16.msra.mxu0 0
    %2323 = vmatprep.subr.bf16.mxu0 0
    %2324 = vmatpush1.bf16.msra.mxu0 0
    %2325 = vmatprep.subr.bf16.mxu0 0
    %2326 = vmatpush1.bf16.msra.mxu0 0
    %2327 = vmatprep.mubr.bf16.mxu0 0
    %2328 = vmatmul.mubr.bf16.gmra.mrb[0].mxu0 %v2293
    %v2329 = vpop.f32.mrb[0].mxu0
    %v2330 = vadd.f32 %v2278, %v2329
    %v2331 = vpop.f32.mrb[0].mxu0
    %v2332 = vpop.f32.mrb[0].mxu0
    %v2333 = vadd.f32 %v2278, %v2332
    %v2334 = vpop.f32.mrb[0].mxu0
    %2335 = vdwg.mxu0
    %v2336 = vmul.f32 %v2330, 0.35355338
    %v2337 = vmul.f32 %v2333, 0.35355338
    %s2338 = scalar_lea.vmem %s6, 64
    %v2339 = vld [vmem:[%s2338] sm:$0xf]
    %v2340 = vld [vmem:[%s2338 + $0x4] sm:$0xf]
    %v2341 = vld [vmem:[%s2338 + $0x8] sm:$0xf]
    %v2342 = vld [vmem:[%s2338 + $0xc] sm:$0xf]
    %s2343 = scalar_lea.vmem %s7, 4
    %v2344 = vld [vmem:[%s2343] sm:$0x1]
    %v2346 = vlaneseq
    %v2347 = vshrl.u32 %v2346, 7
    %v2348 = vsub.s32 0, %v2347
    %v2349 = vrot.slane %v2344, %v2348
    %v2355 = vunpack.c.l.b16 %v2339
    %v2356 = vunpack.c.l.b16 %v2340
    %v2357 = vunpack.c.l.b16 %v2341
    %v2358 = vunpack.c.l.b16 %v2342
    %v2359 = vpack.c.b16 %v2356, %v2355
    %v2360 = vpack.c.b16 %v2358, %v2357
    %2363 = vmatprep.subr.bf16.mxu0 0
    %2364 = vmatpush1.bf16.msra.mxu0 %v2359
    %2365 = vmatprep.subr.bf16.mxu0 0
    %2366 = vmatpush1.bf16.msra.mxu0 %v2360
    %2367 = vmatprep.subr.bf16.mxu0 0
    %2368 = vmatpush1.bf16.msra.mxu0 0
    %2369 = vmatprep.subr.bf16.mxu0 0
    %2370 = vmatpush1.bf16.msra.mxu0 0
    %2371 = vmatprep.subr.bf16.mxu0 0
    %2372 = vmatpush1.bf16.msra.mxu0 0
    %2373 = vmatprep.subr.bf16.mxu0 0
    %2374 = vmatpush1.bf16.msra.mxu0 0
    %2375 = vmatprep.subr.bf16.mxu0 0
    %2376 = vmatpush1.bf16.msra.mxu0 0
    %2377 = vmatprep.subr.bf16.mxu0 0
    %2378 = vmatpush1.bf16.msra.mxu0 0
    %2379 = vmatprep.subr.bf16.mxu0 0
    %2380 = vmatpush1.bf16.msra.mxu0 0
    %2381 = vmatprep.subr.bf16.mxu0 0
    %2382 = vmatpush1.bf16.msra.mxu0 0
    %2383 = vmatprep.subr.bf16.mxu0 0
    %2384 = vmatpush1.bf16.msra.mxu0 0
    %2385 = vmatprep.subr.bf16.mxu0 0
    %2386 = vmatpush1.bf16.msra.mxu0 0
    %2387 = vmatprep.subr.bf16.mxu0 0
    %2388 = vmatpush1.bf16.msra.mxu0 0
    %2389 = vmatprep.subr.bf16.mxu0 0
    %2390 = vmatpush1.bf16.msra.mxu0 0
    %2391 = vmatprep.subr.bf16.mxu0 0
    %2392 = vmatpush1.bf16.msra.mxu0 0
    %2393 = vmatprep.subr.bf16.mxu0 0
    %2394 = vmatpush1.bf16.msra.mxu0 0
    %2395 = vmatprep.mubr.bf16.mxu0 0
    %2396 = vmatmul.mubr.bf16.gmra.mrb[0].mxu0 %v2293
    %v2397 = vpop.f32.mrb[0].mxu0
    %v2398 = vadd.f32 %v2349, %v2397
    %v2399 = vpop.f32.mrb[0].mxu0
    %v2400 = vpop.f32.mrb[0].mxu0
    %v2401 = vadd.f32 %v2349, %v2400
    %v2402 = vpop.f32.mrb[0].mxu0
    %2403 = vdwg.mxu0
    %s2404 = scalar_lea.vmem %s8, 64
    %v2405 = vld [vmem:[%s2404] sm:$0xf]
    %v2406 = vld [vmem:[%s2404 + $0x4] sm:$0xf]
    %v2407 = vld [vmem:[%s2404 + $0x8] sm:$0xf]
    %v2408 = vld [vmem:[%s2404 + $0xc] sm:$0xf]
    %s2409 = scalar_lea.vmem %s9, 4
    %v2410 = vld [vmem:[%s2409] sm:$0x1]
    %v2412 = vlaneseq
    %v2413 = vshrl.u32 %v2412, 7
    %v2414 = vsub.s32 0, %v2413
    %v2415 = vrot.slane %v2410, %v2414
    %v2421 = vunpack.c.l.b16 %v2405
    %v2422 = vunpack.c.l.b16 %v2406
    %v2423 = vunpack.c.l.b16 %v2407
    %v2424 = vunpack.c.l.b16 %v2408
    %v2425 = vpack.c.b16 %v2422, %v2421
    %v2426 = vpack.c.b16 %v2424, %v2423
    %2429 = vmatprep.subr.bf16.mxu0 0
    %2430 = vmatpush1.bf16.msra.mxu0 %v2425
    %2431 = vmatprep.subr.bf16.mxu0 0
    %2432 = vmatpush1.bf16.msra.mxu0 %v2426
    %2433 = vmatprep.subr.bf16.mxu0 0
    %2434 = vmatpush1.bf16.msra.mxu0 0
    %2435 = vmatprep.subr.bf16.mxu0 0
    %2436 = vmatpush1.bf16.msra.mxu0 0
    %2437 = vmatprep.subr.bf16.mxu0 0
    %2438 = vmatpush1.bf16.msra.mxu0 0
    %2439 = vmatprep.subr.bf16.mxu0 0
    %2440 = vmatpush1.bf16.msra.mxu0 0
    %2441 = vmatprep.subr.bf16.mxu0 0
    %2442 = vmatpush1.bf16.msra.mxu0 0
    %2443 = vmatprep.subr.bf16.mxu0 0
    %2444 = vmatpush1.bf16.msra.mxu0 0
    %2445 = vmatprep.subr.bf16.mxu0 0
    %2446 = vmatpush1.bf16.msra.mxu0 0
    %2447 = vmatprep.subr.bf16.mxu0 0
    %2448 = vmatpush1.bf16.msra.mxu0 0
    %2449 = vmatprep.subr.bf16.mxu0 0
    %2450 = vmatpush1.bf16.msra.mxu0 0
    %2451 = vmatprep.subr.bf16.mxu0 0
    %2452 = vmatpush1.bf16.msra.mxu0 0
    %2453 = vmatprep.subr.bf16.mxu0 0
    %2454 = vmatpush1.bf16.msra.mxu0 0
    %2455 = vmatprep.subr.bf16.mxu0 0
    %2456 = vmatpush1.bf16.msra.mxu0 0
    %2457 = vmatprep.subr.bf16.mxu0 0
    %2458 = vmatpush1.bf16.msra.mxu0 0
    %2459 = vmatprep.subr.bf16.mxu0 0
    %2460 = vmatpush1.bf16.msra.mxu0 0
    %2461 = vmatprep.mubr.bf16.mxu0 0
    %2462 = vmatmul.mubr.bf16.gmra.mrb[0].mxu0 %v2293
    %v2463 = vpop.f32.mrb[0].mxu0
    %v2464 = vadd.f32 %v2415, %v2463
    %v2465 = vpop.f32.mrb[0].mxu0
    %v2466 = vpop.f32.mrb[0].mxu0
    %v2467 = vadd.f32 %v2415, %v2466
    %v2468 = vpop.f32.mrb[0].mxu0
    %2469 = vdwg.mxu0
    %v2470 = vpack.c.bf16 %v2336, %v2336
    %v2471 = vpack.c.bf16 %v2337, %v2337
    %v2472 = vpack.c.bf16 %v2398, %v2398
    %v2473 = vpack.c.bf16 %v2401, %v2401
    %v2474 = vpack.c.bf16 %v2464, %v2464
    %v2475 = vpack.c.bf16 %v2467, %v2467
    %v2477 = vsel %vm339, %v2470, 0
    %v2480 = vsel %vm339, %v2472, 0
    %2482 = vmatprep.subr.bf16.mxu0 0
    %2483 = vmatpush1.bf16.xpose.msra.mxu0 %v2480
    %2484 = vmatprep.subr.bf16.mxu0 0
    %2485 = vmatpush1.bf16.xpose.msra.mxu0 0
    %2486 = vmatprep.subr.bf16.mxu0 0
    %2487 = vmatpush1.bf16.xpose.msra.mxu0 0
    %2488 = vmatprep.subr.bf16.mxu0 0
    %2489 = vmatpush1.bf16.xpose.msra.mxu0 0
    %2490 = vmatprep.subr.bf16.mxu0 0
    %2491 = vmatpush1.bf16.xpose.msra.mxu0 0
    %2492 = vmatprep.subr.bf16.mxu0 0
    %2493 = vmatpush1.bf16.xpose.msra.mxu0 0
    %2494 = vmatprep.subr.bf16.mxu0 0
    %2495 = vmatpush1.bf16.xpose.msra.mxu0 0
    %2496 = vmatprep.subr.bf16.mxu0 0
    %2497 = vmatpush1.bf16.xpose.msra.mxu0 0
    %2498 = vmatprep.subr.bf16.mxu0 0
    %2499 = vmatpush1.bf16.xpose.msra.mxu0 0
    %2500 = vmatprep.subr.bf16.mxu0 0
    %2501 = vmatpush1.bf16.xpose.msra.mxu0 0
    %2502 = vmatprep.subr.bf16.mxu0 0
    %2503 = vmatpush1.bf16.xpose.msra.mxu0 0
    %2504 = vmatprep.subr.bf16.mxu0 0
    %2505 = vmatpush1.bf16.xpose.msra.mxu0 0
    %2506 = vmatprep.subr.bf16.mxu0 0
    %2507 = vmatpush1.bf16.xpose.msra.mxu0 0
    %2508 = vmatprep.subr.bf16.mxu0 0
    %2509 = vmatpush1.bf16.xpose.msra.mxu0 0
    %2510 = vmatprep.subr.bf16.mxu0 0
    %2511 = vmatpush1.bf16.xpose.msra.mxu0 0
    %2512 = vmatprep.subr.bf16.mxu0 0
    %2513 = vmatpush1.bf16.xpose.msra.mxu0 0
    %2514 = vmatprep.mubr.bf16.mxu0 0
    %2515 = vmatmul.mubr.bf16.gmra.mrb[0].mxu0 %v2477
    %v2516 = vpop.f32.mrb[0].mxu0
    %v2517 = vadd.f32 %v332, %v2516
    %v2518 = vpop.f32.mrb[0].mxu0
    %v2519 = vpop.f32.mrb[0].mxu0
    %v2520 = vpop.f32.mrb[0].mxu0
    %2521 = vdwg.mxu0
    %v2523 = vsel %vm339, %v2471, 0
    %v2526 = vsel %vm339, %v2473, 0
    %2528 = vmatprep.subr.bf16.mxu0 0
    %2529 = vmatpush1.bf16.xpose.msra.mxu0 %v2526
    %2530 = vmatprep.subr.bf16.mxu0 0
    %2531 = vmatpush1.bf16.xpose.msra.mxu0 0
    %2532 = vmatprep.subr.bf16.mxu0 0
    %2533 = vmatpush1.bf16.xpose.msra.mxu0 0
    %2534 = vmatprep.subr.bf16.mxu0 0
    %2535 = vmatpush1.bf16.xpose.msra.mxu0 0
    %2536 = vmatprep.subr.bf16.mxu0 0
    %2537 = vmatpush1.bf16.xpose.msra.mxu0 0
    %2538 = vmatprep.subr.bf16.mxu0 0
    %2539 = vmatpush1.bf16.xpose.msra.mxu0 0
    %2540 = vmatprep.subr.bf16.mxu0 0
    %2541 = vmatpush1.bf16.xpose.msra.mxu0 0
    %2542 = vmatprep.subr.bf16.mxu0 0
    %2543 = vmatpush1.bf16.xpose.msra.mxu0 0
    %2544 = vmatprep.subr.bf16.mxu0 0
    %2545 = vmatpush1.bf16.xpose.msra.mxu0 0
    %2546 = vmatprep.subr.bf16.mxu0 0
    %2547 = vmatpush1.bf16.xpose.msra.mxu0 0
    %2548 = vmatprep.subr.bf16.mxu0 0
    %2549 = vmatpush1.bf16.xpose.msra.mxu0 0
    %2550 = vmatprep.subr.bf16.mxu0 0
    %2551 = vmatpush1.bf16.xpose.msra.mxu0 0
    %2552 = vmatprep.subr.bf16.mxu0 0
    %2553 = vmatpush1.bf16.xpose.msra.mxu0 0
    %2554 = vmatprep.subr.bf16.mxu0 0
    %2555 = vmatpush1.bf16.xpose.msra.mxu0 0
    %2556 = vmatprep.subr.bf16.mxu0 0
    %2557 = vmatpush1.bf16.xpose.msra.mxu0 0
    %2558 = vmatprep.subr.bf16.mxu0 0
    %2559 = vmatpush1.bf16.xpose.msra.mxu0 0
    %2560 = vmatprep.mubr.bf16.mxu0 0
    %2561 = vmatmul.mubr.bf16.gmra.mrb[0].mxu0 %v2523
    %v2562 = vpop.f32.mrb[0].mxu0
    %v2563 = vadd.f32 %v336, %v2562
    %v2564 = vpop.f32.mrb[0].mxu0
    %v2565 = vpop.f32.mrb[0].mxu0
    %v2566 = vpop.f32.mrb[0].mxu0
    %2567 = vdwg.mxu0
    %v2568 = vsel %vm339, %v2517, -inf
    %2569 = vmax.xlane.f32.xlu0 %v2568
    %v2570 = vpop.xlane.xlu0 %2569
    %v2571 = vsel %vm339, %v2563, -inf
    %2572 = vmax.xlane.f32.xlu0 %v2571
    %v2573 = vpop.xlane.xlu0 %2572
    %v2574 = vsub.f32 %v2517, %v2570
    %v2575 = vsub.f32 %v2563, %v2573
    %v2576 = vmul.f32 %v2574, 1.442695
    %v2577 = vpow.pop %v2576
    %v2578 = vmul.f32 %v2575, 1.442695
    %v2579 = vpow.pop %v2578
    %v2580 = vsel %vm339, %v2577, 0.0
    %2581 = vadd.xlane.f32.xlu0 %v2580
    %v2582 = vpop.xlane.xlu0 %2581
    %v2583 = vsel %vm339, %v2579, 0.0
    %2584 = vadd.xlane.f32.xlu0 %v2583
    %v2585 = vpop.xlane.xlu0 %2584
    %v2586 = vrcp.pop %v2582
    %v2587 = vrcp.pop %v2585
    %v2588 = vmul.f32 %v2577, %v2586
    %v2589 = vmul.f32 %v2579, %v2587
    %v2590 = vpack.c.bf16 %v2588, %v2588
    %v2591 = vpack.c.bf16 %v2589, %v2589
    %v2593 = vsel %vm339, %v2590, 0
    %v2596 = vsel %vm459, %v2474, 0
    %2598 = vmatprep.subr.bf16.mxu0 0
    %2599 = vmatpush1.bf16.msra.mxu0 %v2596
    %2600 = vmatprep.subr.bf16.mxu0 0
    %2601 = vmatpush1.bf16.msra.mxu0 0
    %2602 = vmatprep.subr.bf16.mxu0 0
    %2603 = vmatpush1.bf16.msra.mxu0 0
    %2604 = vmatprep.subr.bf16.mxu0 0
    %2605 = vmatpush1.bf16.msra.mxu0 0
    %2606 = vmatprep.subr.bf16.mxu0 0
    %2607 = vmatpush1.bf16.msra.mxu0 0
    %2608 = vmatprep.subr.bf16.mxu0 0
    %2609 = vmatpush1.bf16.msra.mxu0 0
    %2610 = vmatprep.subr.bf16.mxu0 0
    %2611 = vmatpush1.bf16.msra.mxu0 0
    %2612 = vmatprep.subr.bf16.mxu0 0
    %2613 = vmatpush1.bf16.msra.mxu0 0
    %2614 = vmatprep.subr.bf16.mxu0 0
    %2615 = vmatpush1.bf16.msra.mxu0 0
    %2616 = vmatprep.subr.bf16.mxu0 0
    %2617 = vmatpush1.bf16.msra.mxu0 0
    %2618 = vmatprep.subr.bf16.mxu0 0
    %2619 = vmatpush1.bf16.msra.mxu0 0
    %2620 = vmatprep.subr.bf16.mxu0 0
    %2621 = vmatpush1.bf16.msra.mxu0 0
    %2622 = vmatprep.subr.bf16.mxu0 0
    %2623 = vmatpush1.bf16.msra.mxu0 0
    %2624 = vmatprep.subr.bf16.mxu0 0
    %2625 = vmatpush1.bf16.msra.mxu0 0
    %2626 = vmatprep.subr.bf16.mxu0 0
    %2627 = vmatpush1.bf16.msra.mxu0 0
    %2628 = vmatprep.subr.bf16.mxu0 0
    %2629 = vmatpush1.bf16.msra.mxu0 0
    %2630 = vmatprep.mubr.bf16.mxu0 0
    %2631 = vmatmul.mubr.bf16.gmra.mrb[0].mxu0 %v2593
    %v2632 = vpop.f32.mrb[0].mxu0
    %v2633 = vadd.f32 0.0, %v2632
    %v2634 = vpop.f32.mrb[0].mxu0
    %v2635 = vpop.f32.mrb[0].mxu0
    %v2636 = vpop.f32.mrb[0].mxu0
    %2637 = vdwg.mxu0
    %v2639 = vsel %vm339, %v2591, 0
    %v2642 = vsel %vm459, %v2475, 0
    %2644 = vmatprep.subr.bf16.mxu0 0
    %2645 = vmatpush1.bf16.msra.mxu0 %v2642
    %2646 = vmatprep.subr.bf16.mxu0 0
    %2647 = vmatpush1.bf16.msra.mxu0 0
    %2648 = vmatprep.subr.bf16.mxu0 0
    %2649 = vmatpush1.bf16.msra.mxu0 0
    %2650 = vmatprep.subr.bf16.mxu0 0
    %2651 = vmatpush1.bf16.msra.mxu0 0
    %2652 = vmatprep.subr.bf16.mxu0 0
    %2653 = vmatpush1.bf16.msra.mxu0 0
    %2654 = vmatprep.subr.bf16.mxu0 0
    %2655 = vmatpush1.bf16.msra.mxu0 0
    %2656 = vmatprep.subr.bf16.mxu0 0
    %2657 = vmatpush1.bf16.msra.mxu0 0
    %2658 = vmatprep.subr.bf16.mxu0 0
    %2659 = vmatpush1.bf16.msra.mxu0 0
    %2660 = vmatprep.subr.bf16.mxu0 0
    %2661 = vmatpush1.bf16.msra.mxu0 0
    %2662 = vmatprep.subr.bf16.mxu0 0
    %2663 = vmatpush1.bf16.msra.mxu0 0
    %2664 = vmatprep.subr.bf16.mxu0 0
    %2665 = vmatpush1.bf16.msra.mxu0 0
    %2666 = vmatprep.subr.bf16.mxu0 0
    %2667 = vmatpush1.bf16.msra.mxu0 0
    %2668 = vmatprep.subr.bf16.mxu0 0
    %2669 = vmatpush1.bf16.msra.mxu0 0
    %2670 = vmatprep.subr.bf16.mxu0 0
    %2671 = vmatpush1.bf16.msra.mxu0 0
    %2672 = vmatprep.subr.bf16.mxu0 0
    %2673 = vmatpush1.bf16.msra.mxu0 0
    %2674 = vmatprep.subr.bf16.mxu0 0
    %2675 = vmatpush1.bf16.msra.mxu0 0
    %2676 = vmatprep.mubr.bf16.mxu0 0
    %2677 = vmatmul.mubr.bf16.gmra.mrb[0].mxu0 %v2639
    %v2678 = vpop.f32.mrb[0].mxu0
    %v2679 = vadd.f32 0.0, %v2678
    %v2680 = vpop.f32.mrb[0].mxu0
    %v2681 = vpop.f32.mrb[0].mxu0
    %v2682 = vpop.f32.mrb[0].mxu0
    %2683 = vdwg.mxu0
    %v2684 = vpack.c.bf16 %v2679, %v2633
    %s2685 = scalar_lea.vmem %s10, 16
    %v2686 = vld [vmem:[%s2685] sm:$0xf]
    %s2687 = scalar_lea.vmem %s4, 80
    %v2688 = vld [vmem:[%s2687] sm:$0xf]
    %v2689 = vld [vmem:[%s2687 + $0x4] sm:$0xf]
    %v2690 = vld [vmem:[%s2687 + $0x8] sm:$0xf]
    %v2691 = vld [vmem:[%s2687 + $0xc] sm:$0xf]
    %s2692 = scalar_lea.vmem %s5, 5
    %v2693 = vld [vmem:[%s2692] sm:$0x1]
    %v2695 = vlaneseq
    %v2696 = vshrl.u32 %v2695, 7
    %v2697 = vsub.s32 0, %v2696
    %v2698 = vrot.slane %v2693, %v2697
    %v2704 = vunpack.c.l.b16 %v2688
    %v2705 = vunpack.c.l.b16 %v2689
    %v2706 = vunpack.c.l.b16 %v2690
    %v2707 = vunpack.c.l.b16 %v2691
    %v2708 = vpack.c.b16 %v2705, %v2704
    %v2709 = vpack.c.b16 %v2707, %v2706
    %2712 = vmatprep.subr.bf16.mxu0 0
    %2713 = vmatpush1.bf16.msra.mxu0 %v2708
    %2714 = vmatprep.subr.bf16.mxu0 0
    %2715 = vmatpush1.bf16.msra.mxu0 %v2709
    %2716 = vmatprep.subr.bf16.mxu0 0
    %2717 = vmatpush1.bf16.msra.mxu0 0
    %2718 = vmatprep.subr.bf16.mxu0 0
    %2719 = vmatpush1.bf16.msra.mxu0 0
    %2720 = vmatprep.subr.bf16.mxu0 0
    %2721 = vmatpush1.bf16.msra.mxu0 0
    %2722 = vmatprep.subr.bf16.mxu0 0
    %2723 = vmatpush1.bf16.msra.mxu0 0
    %2724 = vmatprep.subr.bf16.mxu0 0
    %2725 = vmatpush1.bf16.msra.mxu0 0
    %2726 = vmatprep.subr.bf16.mxu0 0
    %2727 = vmatpush1.bf16.msra.mxu0 0
    %2728 = vmatprep.subr.bf16.mxu0 0
    %2729 = vmatpush1.bf16.msra.mxu0 0
    %2730 = vmatprep.subr.bf16.mxu0 0
    %2731 = vmatpush1.bf16.msra.mxu0 0
    %2732 = vmatprep.subr.bf16.mxu0 0
    %2733 = vmatpush1.bf16.msra.mxu0 0
    %2734 = vmatprep.subr.bf16.mxu0 0
    %2735 = vmatpush1.bf16.msra.mxu0 0
    %2736 = vmatprep.subr.bf16.mxu0 0
    %2737 = vmatpush1.bf16.msra.mxu0 0
    %2738 = vmatprep.subr.bf16.mxu0 0
    %2739 = vmatpush1.bf16.msra.mxu0 0
    %2740 = vmatprep.subr.bf16.mxu0 0
    %2741 = vmatpush1.bf16.msra.mxu0 0
    %2742 = vmatprep.subr.bf16.mxu0 0
    %2743 = vmatpush1.bf16.msra.mxu0 0
    %2744 = vmatprep.mubr.bf16.mxu0 0
    %2745 = vmatmul.mubr.bf16.gmra.mrb[0].mxu0 %v2293
    %v2746 = vpop.f32.mrb[0].mxu0
    %v2747 = vadd.f32 %v2698, %v2746
    %v2748 = vpop.f32.mrb[0].mxu0
    %v2749 = vpop.f32.mrb[0].mxu0
    %v2750 = vadd.f32 %v2698, %v2749
    %v2751 = vpop.f32.mrb[0].mxu0
    %2752 = vdwg.mxu0
    %v2753 = vmul.f32 %v2747, 0.35355338
    %v2754 = vmul.f32 %v2750, 0.35355338
    %s2755 = scalar_lea.vmem %s6, 80
    %v2756 = vld [vmem:[%s2755] sm:$0xf]
    %v2757 = vld [vmem:[%s2755 + $0x4] sm:$0xf]
    %v2758 = vld [vmem:[%s2755 + $0x8] sm:$0xf]
    %v2759 = vld [vmem:[%s2755 + $0xc] sm:$0xf]
    %s2760 = scalar_lea.vmem %s7, 5
    %v2761 = vld [vmem:[%s2760] sm:$0x1]
    %v2763 = vlaneseq
    %v2764 = vshrl.u32 %v2763, 7
    %v2765 = vsub.s32 0, %v2764
    %v2766 = vrot.slane %v2761, %v2765
    %v2772 = vunpack.c.l.b16 %v2756
    %v2773 = vunpack.c.l.b16 %v2757
    %v2774 = vunpack.c.l.b16 %v2758
    %v2775 = vunpack.c.l.b16 %v2759
    %v2776 = vpack.c.b16 %v2773, %v2772
    %v2777 = vpack.c.b16 %v2775, %v2774
    %2780 = vmatprep.subr.bf16.mxu0 0
    %2781 = vmatpush1.bf16.msra.mxu0 %v2776
    %2782 = vmatprep.subr.bf16.mxu0 0
    %2783 = vmatpush1.bf16.msra.mxu0 %v2777
    %2784 = vmatprep.subr.bf16.mxu0 0
    %2785 = vmatpush1.bf16.msra.mxu0 0
    %2786 = vmatprep.subr.bf16.mxu0 0
    %2787 = vmatpush1.bf16.msra.mxu0 0
    %2788 = vmatprep.subr.bf16.mxu0 0
    %2789 = vmatpush1.bf16.msra.mxu0 0
    %2790 = vmatprep.subr.bf16.mxu0 0
    %2791 = vmatpush1.bf16.msra.mxu0 0
    %2792 = vmatprep.subr.bf16.mxu0 0
    %2793 = vmatpush1.bf16.msra.mxu0 0
    %2794 = vmatprep.subr.bf16.mxu0 0
    %2795 = vmatpush1.bf16.msra.mxu0 0
    %2796 = vmatprep.subr.bf16.mxu0 0
    %2797 = vmatpush1.bf16.msra.mxu0 0
    %2798 = vmatprep.subr.bf16.mxu0 0
    %2799 = vmatpush1.bf16.msra.mxu0 0
    %2800 = vmatprep.subr.bf16.mxu0 0
    %2801 = vmatpush1.bf16.msra.mxu0 0
    %2802 = vmatprep.subr.bf16.mxu0 0
    %2803 = vmatpush1.bf16.msra.mxu0 0
    %2804 = vmatprep.subr.bf16.mxu0 0
    %2805 = vmatpush1.bf16.msra.mxu0 0
    %2806 = vmatprep.subr.bf16.mxu0 0
    %2807 = vmatpush1.bf16.msra.mxu0 0
    %2808 = vmatprep.subr.bf16.mxu0 0
    %2809 = vmatpush1.bf16.msra.mxu0 0
    %2810 = vmatprep.subr.bf16.mxu0 0
    %2811 = vmatpush1.bf16.msra.mxu0 0
    %2812 = vmatprep.mubr.bf16.mxu0 0
    %2813 = vmatmul.mubr.bf16.gmra.mrb[0].mxu0 %v2293
    %v2814 = vpop.f32.mrb[0].mxu0
    %v2815 = vadd.f32 %v2766, %v2814
    %v2816 = vpop.f32.mrb[0].mxu0
    %v2817 = vpop.f32.mrb[0].mxu0
    %v2818 = vadd.f32 %v2766, %v2817
    %v2819 = vpop.f32.mrb[0].mxu0
    %2820 = vdwg.mxu0
    %s2821 = scalar_lea.vmem %s8, 80
    %v2822 = vld [vmem:[%s2821] sm:$0xf]
    %v2823 = vld [vmem:[%s2821 + $0x4] sm:$0xf]
    %v2824 = vld [vmem:[%s2821 + $0x8] sm:$0xf]
    %v2825 = vld [vmem:[%s2821 + $0xc] sm:$0xf]
    %s2826 = scalar_lea.vmem %s9, 5
    %v2827 = vld [vmem:[%s2826] sm:$0x1]
    %v2829 = vlaneseq
    %v2830 = vshrl.u32 %v2829, 7
    %v2831 = vsub.s32 0, %v2830
    %v2832 = vrot.slane %v2827, %v2831
    %v2838 = vunpack.c.l.b16 %v2822
    %v2839 = vunpack.c.l.b16 %v2823
    %v2840 = vunpack.c.l.b16 %v2824
    %v2841 = vunpack.c.l.b16 %v2825
    %v2842 = vpack.c.b16 %v2839, %v2838
    %v2843 = vpack.c.b16 %v2841, %v2840
    %2846 = vmatprep.subr.bf16.mxu0 0
    %2847 = vmatpush1.bf16.msra.mxu0 %v2842
    %2848 = vmatprep.subr.bf16.mxu0 0
    %2849 = vmatpush1.bf16.msra.mxu0 %v2843
    %2850 = vmatprep.subr.bf16.mxu0 0
    %2851 = vmatpush1.bf16.msra.mxu0 0
    %2852 = vmatprep.subr.bf16.mxu0 0
    %2853 = vmatpush1.bf16.msra.mxu0 0
    %2854 = vmatprep.subr.bf16.mxu0 0
    %2855 = vmatpush1.bf16.msra.mxu0 0
    %2856 = vmatprep.subr.bf16.mxu0 0
    %2857 = vmatpush1.bf16.msra.mxu0 0
    %2858 = vmatprep.subr.bf16.mxu0 0
    %2859 = vmatpush1.bf16.msra.mxu0 0
    %2860 = vmatprep.subr.bf16.mxu0 0
    %2861 = vmatpush1.bf16.msra.mxu0 0
    %2862 = vmatprep.subr.bf16.mxu0 0
    %2863 = vmatpush1.bf16.msra.mxu0 0
    %2864 = vmatprep.subr.bf16.mxu0 0
    %2865 = vmatpush1.bf16.msra.mxu0 0
    %2866 = vmatprep.subr.bf16.mxu0 0
    %2867 = vmatpush1.bf16.msra.mxu0 0
    %2868 = vmatprep.subr.bf16.mxu0 0
    %2869 = vmatpush1.bf16.msra.mxu0 0
    %2870 = vmatprep.subr.bf16.mxu0 0
    %2871 = vmatpush1.bf16.msra.mxu0 0
    %2872 = vmatprep.subr.bf16.mxu0 0
    %2873 = vmatpush1.bf16.msra.mxu0 0
    %2874 = vmatprep.subr.bf16.mxu0 0
    %2875 = vmatpush1.bf16.msra.mxu0 0
    %2876 = vmatprep.subr.bf16.mxu0 0
    %2877 = vmatpush1.bf16.msra.mxu0 0
    %2878 = vmatprep.mubr.bf16.mxu0 0
    %2879 = vmatmul.mubr.bf16.gmra.mrb[0].mxu0 %v2293
    %v2880 = vpop.f32.mrb[0].mxu0
    %v2881 = vadd.f32 %v2832, %v2880
    %v2882 = vpop.f32.mrb[0].mxu0
    %v2883 = vpop.f32.mrb[0].mxu0
    %v2884 = vadd.f32 %v2832, %v2883
    %v2885 = vpop.f32.mrb[0].mxu0
    %2886 = vdwg.mxu0
    %v2887 = vpack.c.bf16 %v2753, %v2753
    %v2888 = vpack.c.bf16 %v2754, %v2754
    %v2889 = vpack.c.bf16 %v2815, %v2815
    %v2890 = vpack.c.bf16 %v2818, %v2818
    %v2891 = vpack.c.bf16 %v2881, %v2881
    %v2892 = vpack.c.bf16 %v2884, %v2884
    %v2894 = vsel %vm339, %v2887, 0
    %v2897 = vsel %vm339, %v2889, 0
    %2899 = vmatprep.subr.bf16.mxu0 0
    %2900 = vmatpush1.bf16.xpose.msra.mxu0 %v2897
    %2901 = vmatprep.subr.bf16.mxu0 0
    %2902 = vmatpush1.bf16.xpose.msra.mxu0 0
    %2903 = vmatprep.subr.bf16.mxu0 0
    %2904 = vmatpush1.bf16.xpose.msra.mxu0 0
    %2905 = vmatprep.subr.bf16.mxu0 0
    %2906 = vmatpush1.bf16.xpose.msra.mxu0 0
    %2907 = vmatprep.subr.bf16.mxu0 0
    %2908 = vmatpush1.bf16.xpose.msra.mxu0 0
    %2909 = vmatprep.subr.bf16.mxu0 0
    %2910 = vmatpush1.bf16.xpose.msra.mxu0 0
    %2911 = vmatprep.subr.bf16.mxu0 0
    %2912 = vmatpush1.bf16.xpose.msra.mxu0 0
    %2913 = vmatprep.subr.bf16.mxu0 0
    %2914 = vmatpush1.bf16.xpose.msra.mxu0 0
    %2915 = vmatprep.subr.bf16.mxu0 0
    %2916 = vmatpush1.bf16.xpose.msra.mxu0 0
    %2917 = vmatprep.subr.bf16.mxu0 0
    %2918 = vmatpush1.bf16.xpose.msra.mxu0 0
    %2919 = vmatprep.subr.bf16.mxu0 0
    %2920 = vmatpush1.bf16.xpose.msra.mxu0 0
    %2921 = vmatprep.subr.bf16.mxu0 0
    %2922 = vmatpush1.bf16.xpose.msra.mxu0 0
    %2923 = vmatprep.subr.bf16.mxu0 0
    %2924 = vmatpush1.bf16.xpose.msra.mxu0 0
    %2925 = vmatprep.subr.bf16.mxu0 0
    %2926 = vmatpush1.bf16.xpose.msra.mxu0 0
    %2927 = vmatprep.subr.bf16.mxu0 0
    %2928 = vmatpush1.bf16.xpose.msra.mxu0 0
    %2929 = vmatprep.subr.bf16.mxu0 0
    %2930 = vmatpush1.bf16.xpose.msra.mxu0 0
    %2931 = vmatprep.mubr.bf16.mxu0 0
    %2932 = vmatmul.mubr.bf16.gmra.mrb[0].mxu0 %v2894
    %v2933 = vpop.f32.mrb[0].mxu0
    %v2934 = vadd.f32 %v332, %v2933
    %v2935 = vpop.f32.mrb[0].mxu0
    %v2936 = vpop.f32.mrb[0].mxu0
    %v2937 = vpop.f32.mrb[0].mxu0
    %2938 = vdwg.mxu0
    %v2940 = vsel %vm339, %v2888, 0
    %v2943 = vsel %vm339, %v2890, 0
    %2945 = vmatprep.subr.bf16.mxu0 0
    %2946 = vmatpush1.bf16.xpose.msra.mxu0 %v2943
    %2947 = vmatprep.subr.bf16.mxu0 0
    %2948 = vmatpush1.bf16.xpose.msra.mxu0 0
    %2949 = vmatprep.subr.bf16.mxu0 0
    %2950 = vmatpush1.bf16.xpose.msra.mxu0 0
    %2951 = vmatprep.subr.bf16.mxu0 0
    %2952 = vmatpush1.bf16.xpose.msra.mxu0 0
    %2953 = vmatprep.subr.bf16.mxu0 0
    %2954 = vmatpush1.bf16.xpose.msra.mxu0 0
    %2955 = vmatprep.subr.bf16.mxu0 0
    %2956 = vmatpush1.bf16.xpose.msra.mxu0 0
    %2957 = vmatprep.subr.bf16.mxu0 0
    %2958 = vmatpush1.bf16.xpose.msra.mxu0 0
    %2959 = vmatprep.subr.bf16.mxu0 0
    %2960 = vmatpush1.bf16.xpose.msra.mxu0 0
    %2961 = vmatprep.subr.bf16.mxu0 0
    %2962 = vmatpush1.bf16.xpose.msra.mxu0 0
    %2963 = vmatprep.subr.bf16.mxu0 0
    %2964 = vmatpush1.bf16.xpose.msra.mxu0 0
    %2965 = vmatprep.subr.bf16.mxu0 0
    %2966 = vmatpush1.bf16.xpose.msra.mxu0 0
    %2967 = vmatprep.subr.bf16.mxu0 0
    %2968 = vmatpush1.bf16.xpose.msra.mxu0 0
    %2969 = vmatprep.subr.bf16.mxu0 0
    %2970 = vmatpush1.bf16.xpose.msra.mxu0 0
    %2971 = vmatprep.subr.bf16.mxu0 0
    %2972 = vmatpush1.bf16.xpose.msra.mxu0 0
    %2973 = vmatprep.subr.bf16.mxu0 0
    %2974 = vmatpush1.bf16.xpose.msra.mxu0 0
    %2975 = vmatprep.subr.bf16.mxu0 0
    %2976 = vmatpush1.bf16.xpose.msra.mxu0 0
    %2977 = vmatprep.mubr.bf16.mxu0 0
    %2978 = vmatmul.mubr.bf16.gmra.mrb[0].mxu0 %v2940
    %v2979 = vpop.f32.mrb[0].mxu0
    %v2980 = vadd.f32 %v336, %v2979
    %v2981 = vpop.f32.mrb[0].mxu0
    %v2982 = vpop.f32.mrb[0].mxu0
    %v2983 = vpop.f32.mrb[0].mxu0
    %2984 = vdwg.mxu0
    %v2985 = vsel %vm339, %v2934, -inf
    %2986 = vmax.xlane.f32.xlu0 %v2985
    %v2987 = vpop.xlane.xlu0 %2986
    %v2988 = vsel %vm339, %v2980, -inf
    %2989 = vmax.xlane.f32.xlu0 %v2988
    %v2990 = vpop.xlane.xlu0 %2989
    %v2991 = vsub.f32 %v2934, %v2987
    %v2992 = vsub.f32 %v2980, %v2990
    %v2993 = vmul.f32 %v2991, 1.442695
    %v2994 = vpow.pop %v2993
    %v2995 = vmul.f32 %v2992, 1.442695
    %v2996 = vpow.pop %v2995
    %v2997 = vsel %vm339, %v2994, 0.0
    %2998 = vadd.xlane.f32.xlu0 %v2997
    %v2999 = vpop.xlane.xlu0 %2998
    %v3000 = vsel %vm339, %v2996, 0.0
    %3001 = vadd.xlane.f32.xlu0 %v3000
    %v3002 = vpop.xlane.xlu0 %3001
    %v3003 = vrcp.pop %v2999
    %v3004 = vrcp.pop %v3002
    %v3005 = vmul.f32 %v2994, %v3003
    %v3006 = vmul.f32 %v2996, %v3004
    %v3007 = vpack.c.bf16 %v3005, %v3005
    %v3008 = vpack.c.bf16 %v3006, %v3006
    %v3010 = vsel %vm339, %v3007, 0
    %v3013 = vsel %vm459, %v2891, 0
    %3015 = vmatprep.subr.bf16.mxu0 0
    %3016 = vmatpush1.bf16.msra.mxu0 %v3013
    %3017 = vmatprep.subr.bf16.mxu0 0
    %3018 = vmatpush1.bf16.msra.mxu0 0
    %3019 = vmatprep.subr.bf16.mxu0 0
    %3020 = vmatpush1.bf16.msra.mxu0 0
    %3021 = vmatprep.subr.bf16.mxu0 0
    %3022 = vmatpush1.bf16.msra.mxu0 0
    %3023 = vmatprep.subr.bf16.mxu0 0
    %3024 = vmatpush1.bf16.msra.mxu0 0
    %3025 = vmatprep.subr.bf16.mxu0 0
    %3026 = vmatpush1.bf16.msra.mxu0 0
    %3027 = vmatprep.subr.bf16.mxu0 0
    %3028 = vmatpush1.bf16.msra.mxu0 0
    %3029 = vmatprep.subr.bf16.mxu0 0
    %3030 = vmatpush1.bf16.msra.mxu0 0
    %3031 = vmatprep.subr.bf16.mxu0 0
    %3032 = vmatpush1.bf16.msra.mxu0 0
    %3033 = vmatprep.subr.bf16.mxu0 0
    %3034 = vmatpush1.bf16.msra.mxu0 0
    %3035 = vmatprep.subr.bf16.mxu0 0
    %3036 = vmatpush1.bf16.msra.mxu0 0
    %3037 = vmatprep.subr.bf16.mxu0 0
    %3038 = vmatpush1.bf16.msra.mxu0 0
    %3039 = vmatprep.subr.bf16.mxu0 0
    %3040 = vmatpush1.bf16.msra.mxu0 0
    %3041 = vmatprep.subr.bf16.mxu0 0
    %3042 = vmatpush1.bf16.msra.mxu0 0
    %3043 = vmatprep.subr.bf16.mxu0 0
    %3044 = vmatpush1.bf16.msra.mxu0 0
    %3045 = vmatprep.subr.bf16.mxu0 0
    %3046 = vmatpush1.bf16.msra.mxu0 0
    %3047 = vmatprep.mubr.bf16.mxu0 0
    %3048 = vmatmul.mubr.bf16.gmra.mrb[0].mxu0 %v3010
    %v3049 = vpop.f32.mrb[0].mxu0
    %v3050 = vadd.f32 0.0, %v3049
    %v3051 = vpop.f32.mrb[0].mxu0
    %v3052 = vpop.f32.mrb[0].mxu0
    %v3053 = vpop.f32.mrb[0].mxu0
    %3054 = vdwg.mxu0
    %v3056 = vsel %vm339, %v3008, 0
    %v3059 = vsel %vm459, %v2892, 0
    %3061 = vmatprep.subr.bf16.mxu0 0
    %3062 = vmatpush1.bf16.msra.mxu0 %v3059
    %3063 = vmatprep.subr.bf16.mxu0 0
    %3064 = vmatpush1.bf16.msra.mxu0 0
    %3065 = vmatprep.subr.bf16.mxu0 0
    %3066 = vmatpush1.bf16.msra.mxu0 0
    %3067 = vmatprep.subr.bf16.mxu0 0
    %3068 = vmatpush1.bf16.msra.mxu0 0
    %3069 = vmatprep.subr.bf16.mxu0 0
    %3070 = vmatpush1.bf16.msra.mxu0 0
    %3071 = vmatprep.subr.bf16.mxu0 0
    %3072 = vmatpush1.bf16.msra.mxu0 0
    %3073 = vmatprep.subr.bf16.mxu0 0
    %3074 = vmatpush1.bf16.msra.mxu0 0
    %3075 = vmatprep.subr.bf16.mxu0 0
    %3076 = vmatpush1.bf16.msra.mxu0 0
    %3077 = vmatprep.subr.bf16.mxu0 0
    %3078 = vmatpush1.bf16.msra.mxu0 0
    %3079 = vmatprep.subr.bf16.mxu0 0
    %3080 = vmatpush1.bf16.msra.mxu0 0
    %3081 = vmatprep.subr.bf16.mxu0 0
    %3082 = vmatpush1.bf16.msra.mxu0 0
    %3083 = vmatprep.subr.bf16.mxu0 0
    %3084 = vmatpush1.bf16.msra.mxu0 0
    %3085 = vmatprep.subr.bf16.mxu0 0
    %3086 = vmatpush1.bf16.msra.mxu0 0
    %3087 = vmatprep.subr.bf16.mxu0 0
    %3088 = vmatpush1.bf16.msra.mxu0 0
    %3089 = vmatprep.subr.bf16.mxu0 0
    %3090 = vmatpush1.bf16.msra.mxu0 0
    %3091 = vmatprep.subr.bf16.mxu0 0
    %3092 = vmatpush1.bf16.msra.mxu0 0
    %3093 = vmatprep.mubr.bf16.mxu0 0
    %3094 = vmatmul.mubr.bf16.gmra.mrb[0].mxu0 %v3056
    %v3095 = vpop.f32.mrb[0].mxu0
    %v3096 = vadd.f32 0.0, %v3095
    %v3097 = vpop.f32.mrb[0].mxu0
    %v3098 = vpop.f32.mrb[0].mxu0
    %v3099 = vpop.f32.mrb[0].mxu0
    %3100 = vdwg.mxu0
    %v3101 = vpack.c.bf16 %v3096, %v3050
    %s3102 = scalar_lea.vmem %s10, 20
    %v3103 = vld [vmem:[%s3102] sm:$0xf]
    %v3105 = vsel %vm339, %v3101, 0
    %v3108 = vsel %vm459, %v3103, 0
    %3110 = vmatprep.subr.bf16.mxu0 0
    %3111 = vmatpush1.bf16.msra.mxu0 %v3108
    %3112 = vmatprep.subr.bf16.mxu0 0
    %3113 = vmatpush1.bf16.msra.mxu0 0
    %3114 = vmatprep.subr.bf16.mxu0 0
    %3115 = vmatpush1.bf16.msra.mxu0 0
    %3116 = vmatprep.subr.bf16.mxu0 0
    %3117 = vmatpush1.bf16.msra.mxu0 0
    %3118 = vmatprep.subr.bf16.mxu0 0
    %3119 = vmatpush1.bf16.msra.mxu0 0
    %3120 = vmatprep.subr.bf16.mxu0 0
    %3121 = vmatpush1.bf16.msra.mxu0 0
    %3122 = vmatprep.subr.bf16.mxu0 0
    %3123 = vmatpush1.bf16.msra.mxu0 0
    %3124 = vmatprep.subr.bf16.mxu0 0
    %3125 = vmatpush1.bf16.msra.mxu0 0
    %3126 = vmatprep.subr.bf16.mxu0 0
    %3127 = vmatpush1.bf16.msra.mxu0 0
    %3128 = vmatprep.subr.bf16.mxu0 0
    %3129 = vmatpush1.bf16.msra.mxu0 0
    %3130 = vmatprep.subr.bf16.mxu0 0
    %3131 = vmatpush1.bf16.msra.mxu0 0
    %3132 = vmatprep.subr.bf16.mxu0 0
    %3133 = vmatpush1.bf16.msra.mxu0 0
    %3134 = vmatprep.subr.bf16.mxu0 0
    %3135 = vmatpush1.bf16.msra.mxu0 0
    %3136 = vmatprep.subr.bf16.mxu0 0
    %3137 = vmatpush1.bf16.msra.mxu0 0
    %3138 = vmatprep.subr.bf16.mxu0 0
    %3139 = vmatpush1.bf16.msra.mxu0 0
    %3140 = vmatprep.subr.bf16.mxu0 0
    %3141 = vmatpush1.bf16.msra.mxu0 0
    %3142 = vmatprep.mubr.bf16.mxu0 0
    %3143 = vmatmul.mubr.bf16.gmra.mrb[0].mxu0 %v3105
    %v3144 = vpop.f32.mrb[0].mxu0
    %v3145 = vadd.f32 0.0, %v3144
    %v3146 = vpop.f32.mrb[0].mxu0
    %v3147 = vpop.f32.mrb[0].mxu0
    %v3148 = vadd.f32 0.0, %v3147
    %v3149 = vpop.f32.mrb[0].mxu0
    %3150 = vdwg.mxu0
    %v3152 = vsel %vm339, %v2684, 0
    %v3155 = vsel %vm459, %v2686, 0
    %3157 = vmatprep.subr.bf16.mxu0 0
    %3158 = vmatpush1.bf16.msra.mxu0 %v3155
    %3159 = vmatprep.subr.bf16.mxu0 0
    %3160 = vmatpush1.bf16.msra.mxu0 0
    %3161 = vmatprep.subr.bf16.mxu0 0
    %3162 = vmatpush1.bf16.msra.mxu0 0
    %3163 = vmatprep.subr.bf16.mxu0 0
    %3164 = vmatpush1.bf16.msra.mxu0 0
    %3165 = vmatprep.subr.bf16.mxu0 0
    %3166 = vmatpush1.bf16.msra.mxu0 0
    %3167 = vmatprep.subr.bf16.mxu0 0
    %3168 = vmatpush1.bf16.msra.mxu0 0
    %3169 = vmatprep.subr.bf16.mxu0 0
    %3170 = vmatpush1.bf16.msra.mxu0 0
    %3171 = vmatprep.subr.bf16.mxu0 0
    %3172 = vmatpush1.bf16.msra.mxu0 0
    %3173 = vmatprep.subr.bf16.mxu0 0
    %3174 = vmatpush1.bf16.msra.mxu0 0
    %3175 = vmatprep.subr.bf16.mxu0 0
    %3176 = vmatpush1.bf16.msra.mxu0 0
    %3177 = vmatprep.subr.bf16.mxu0 0
    %3178 = vmatpush1.bf16.msra.mxu0 0
    %3179 = vmatprep.subr.bf16.mxu0 0
    %3180 = vmatpush1.bf16.msra.mxu0 0
    %3181 = vmatprep.subr.bf16.mxu0 0
    %3182 = vmatpush1.bf16.msra.mxu0 0
    %3183 = vmatprep.subr.bf16.mxu0 0
    %3184 = vmatpush1.bf16.msra.mxu0 0
    %3185 = vmatprep.subr.bf16.mxu0 0
    %3186 = vmatpush1.bf16.msra.mxu0 0
    %3187 = vmatprep.subr.bf16.mxu0 0
    %3188 = vmatpush1.bf16.msra.mxu0 0
    %3189 = vmatprep.mubr.bf16.mxu0 0
    %3190 = vmatmul.mubr.bf16.gmra.mrb[0].mxu0 %v3152
    %v3191 = vpop.f32.mrb[0].mxu0
    %v3192 = vadd.f32 %v3145, %v3191
    %v3193 = vpop.f32.mrb[0].mxu0
    %v3194 = vpop.f32.mrb[0].mxu0
    %v3195 = vadd.f32 %v3148, %v3194
    %v3196 = vpop.f32.mrb[0].mxu0
    %3197 = vdwg.mxu0
    %s3198 = scalar_lea.vmem %s4, 96
    %v3199 = vld [vmem:[%s3198] sm:$0xf]
    %v3200 = vld [vmem:[%s3198 + $0x4] sm:$0xf]
    %v3201 = vld [vmem:[%s3198 + $0x8] sm:$0xf]
    %v3202 = vld [vmem:[%s3198 + $0xc] sm:$0xf]
    %s3203 = scalar_lea.vmem %s5, 6
    %v3204 = vld [vmem:[%s3203] sm:$0x1]
    %v3206 = vlaneseq
    %v3207 = vshrl.u32 %v3206, 7
    %v3208 = vsub.s32 0, %v3207
    %v3209 = vrot.slane %v3204, %v3208
    %v3215 = vunpack.c.l.b16 %v3199
    %v3216 = vunpack.c.l.b16 %v3200
    %v3217 = vunpack.c.l.b16 %v3201
    %v3218 = vunpack.c.l.b16 %v3202
    %v3219 = vpack.c.b16 %v3216, %v3215
    %v3220 = vpack.c.b16 %v3218, %v3217
    %3223 = vmatprep.subr.bf16.mxu0 0
    %3224 = vmatpush1.bf16.msra.mxu0 %v3219
    %3225 = vmatprep.subr.bf16.mxu0 0
    %3226 = vmatpush1.bf16.msra.mxu0 %v3220
    %3227 = vmatprep.subr.bf16.mxu0 0
    %3228 = vmatpush1.bf16.msra.mxu0 0
    %3229 = vmatprep.subr.bf16.mxu0 0
    %3230 = vmatpush1.bf16.msra.mxu0 0
    %3231 = vmatprep.subr.bf16.mxu0 0
    %3232 = vmatpush1.bf16.msra.mxu0 0
    %3233 = vmatprep.subr.bf16.mxu0 0
    %3234 = vmatpush1.bf16.msra.mxu0 0
    %3235 = vmatprep.subr.bf16.mxu0 0
    %3236 = vmatpush1.bf16.msra.mxu0 0
    %3237 = vmatprep.subr.bf16.mxu0 0
    %3238 = vmatpush1.bf16.msra.mxu0 0
    %3239 = vmatprep.subr.bf16.mxu0 0
    %3240 = vmatpush1.bf16.msra.mxu0 0
    %3241 = vmatprep.subr.bf16.mxu0 0
    %3242 = vmatpush1.bf16.msra.mxu0 0
    %3243 = vmatprep.subr.bf16.mxu0 0
    %3244 = vmatpush1.bf16.msra.mxu0 0
    %3245 = vmatprep.subr.bf16.mxu0 0
    %3246 = vmatpush1.bf16.msra.mxu0 0
    %3247 = vmatprep.subr.bf16.mxu0 0
    %3248 = vmatpush1.bf16.msra.mxu0 0
    %3249 = vmatprep.subr.bf16.mxu0 0
    %3250 = vmatpush1.bf16.msra.mxu0 0
    %3251 = vmatprep.subr.bf16.mxu0 0
    %3252 = vmatpush1.bf16.msra.mxu0 0
    %3253 = vmatprep.subr.bf16.mxu0 0
    %3254 = vmatpush1.bf16.msra.mxu0 0
    %3255 = vmatprep.mubr.bf16.mxu0 0
    %3256 = vmatmul.mubr.bf16.gmra.mrb[0].mxu0 %v2293
    %v3257 = vpop.f32.mrb[0].mxu0
    %v3258 = vadd.f32 %v3209, %v3257
    %v3259 = vpop.f32.mrb[0].mxu0
    %v3260 = vpop.f32.mrb[0].mxu0
    %v3261 = vadd.f32 %v3209, %v3260
    %v3262 = vpop.f32.mrb[0].mxu0
    %3263 = vdwg.mxu0
    %v3264 = vmul.f32 %v3258, 0.35355338
    %v3265 = vmul.f32 %v3261, 0.35355338
    %s3266 = scalar_lea.vmem %s6, 96
    %v3267 = vld [vmem:[%s3266] sm:$0xf]
    %v3268 = vld [vmem:[%s3266 + $0x4] sm:$0xf]
    %v3269 = vld [vmem:[%s3266 + $0x8] sm:$0xf]
    %v3270 = vld [vmem:[%s3266 + $0xc] sm:$0xf]
    %s3271 = scalar_lea.vmem %s7, 6
    %v3272 = vld [vmem:[%s3271] sm:$0x1]
    %v3274 = vlaneseq
    %v3275 = vshrl.u32 %v3274, 7
    %v3276 = vsub.s32 0, %v3275
    %v3277 = vrot.slane %v3272, %v3276
    %v3283 = vunpack.c.l.b16 %v3267
    %v3284 = vunpack.c.l.b16 %v3268
    %v3285 = vunpack.c.l.b16 %v3269
    %v3286 = vunpack.c.l.b16 %v3270
    %v3287 = vpack.c.b16 %v3284, %v3283
    %v3288 = vpack.c.b16 %v3286, %v3285
    %3291 = vmatprep.subr.bf16.mxu0 0
    %3292 = vmatpush1.bf16.msra.mxu0 %v3287
    %3293 = vmatprep.subr.bf16.mxu0 0
    %3294 = vmatpush1.bf16.msra.mxu0 %v3288
    %3295 = vmatprep.subr.bf16.mxu0 0
    %3296 = vmatpush1.bf16.msra.mxu0 0
    %3297 = vmatprep.subr.bf16.mxu0 0
    %3298 = vmatpush1.bf16.msra.mxu0 0
    %3299 = vmatprep.subr.bf16.mxu0 0
    %3300 = vmatpush1.bf16.msra.mxu0 0
    %3301 = vmatprep.subr.bf16.mxu0 0
    %3302 = vmatpush1.bf16.msra.mxu0 0
    %3303 = vmatprep.subr.bf16.mxu0 0
    %3304 = vmatpush1.bf16.msra.mxu0 0
    %3305 = vmatprep.subr.bf16.mxu0 0
    %3306 = vmatpush1.bf16.msra.mxu0 0
    %3307 = vmatprep.subr.bf16.mxu0 0
    %3308 = vmatpush1.bf16.msra.mxu0 0
    %3309 = vmatprep.subr.bf16.mxu0 0
    %3310 = vmatpush1.bf16.msra.mxu0 0
    %3311 = vmatprep.subr.bf16.mxu0 0
    %3312 = vmatpush1.bf16.msra.mxu0 0
    %3313 = vmatprep.subr.bf16.mxu0 0
    %3314 = vmatpush1.bf16.msra.mxu0 0
    %3315 = vmatprep.subr.bf16.mxu0 0
    %3316 = vmatpush1.bf16.msra.mxu0 0
    %3317 = vmatprep.subr.bf16.mxu0 0
    %3318 = vmatpush1.bf16.msra.mxu0 0
    %3319 = vmatprep.subr.bf16.mxu0 0
    %3320 = vmatpush1.bf16.msra.mxu0 0
    %3321 = vmatprep.subr.bf16.mxu0 0
    %3322 = vmatpush1.bf16.msra.mxu0 0
    %3323 = vmatprep.mubr.bf16.mxu0 0
    %3324 = vmatmul.mubr.bf16.gmra.mrb[0].mxu0 %v2293
    %v3325 = vpop.f32.mrb[0].mxu0
    %v3326 = vadd.f32 %v3277, %v3325
    %v3327 = vpop.f32.mrb[0].mxu0
    %v3328 = vpop.f32.mrb[0].mxu0
    %v3329 = vadd.f32 %v3277, %v3328
    %v3330 = vpop.f32.mrb[0].mxu0
    %3331 = vdwg.mxu0
    %s3332 = scalar_lea.vmem %s8, 96
    %v3333 = vld [vmem:[%s3332] sm:$0xf]
    %v3334 = vld [vmem:[%s3332 + $0x4] sm:$0xf]
    %v3335 = vld [vmem:[%s3332 + $0x8] sm:$0xf]
    %v3336 = vld [vmem:[%s3332 + $0xc] sm:$0xf]
    %s3337 = scalar_lea.vmem %s9, 6
    %v3338 = vld [vmem:[%s3337] sm:$0x1]
    %v3340 = vlaneseq
    %v3341 = vshrl.u32 %v3340, 7
    %v3342 = vsub.s32 0, %v3341
    %v3343 = vrot.slane %v3338, %v3342
    %v3349 = vunpack.c.l.b16 %v3333
    %v3350 = vunpack.c.l.b16 %v3334
    %v3351 = vunpack.c.l.b16 %v3335
    %v3352 = vunpack.c.l.b16 %v3336
    %v3353 = vpack.c.b16 %v3350, %v3349
    %v3354 = vpack.c.b16 %v3352, %v3351
    %3357 = vmatprep.subr.bf16.mxu0 0
    %3358 = vmatpush1.bf16.msra.mxu0 %v3353
    %3359 = vmatprep.subr.bf16.mxu0 0
    %3360 = vmatpush1.bf16.msra.mxu0 %v3354
    %3361 = vmatprep.subr.bf16.mxu0 0
    %3362 = vmatpush1.bf16.msra.mxu0 0
    %3363 = vmatprep.subr.bf16.mxu0 0
    %3364 = vmatpush1.bf16.msra.mxu0 0
    %3365 = vmatprep.subr.bf16.mxu0 0
    %3366 = vmatpush1.bf16.msra.mxu0 0
    %3367 = vmatprep.subr.bf16.mxu0 0
    %3368 = vmatpush1.bf16.msra.mxu0 0
    %3369 = vmatprep.subr.bf16.mxu0 0
    %3370 = vmatpush1.bf16.msra.mxu0 0
    %3371 = vmatprep.subr.bf16.mxu0 0
    %3372 = vmatpush1.bf16.msra.mxu0 0
    %3373 = vmatprep.subr.bf16.mxu0 0
    %3374 = vmatpush1.bf16.msra.mxu0 0
    %3375 = vmatprep.subr.bf16.mxu0 0
    %3376 = vmatpush1.bf16.msra.mxu0 0
    %3377 = vmatprep.subr.bf16.mxu0 0
    %3378 = vmatpush1.bf16.msra.mxu0 0
    %3379 = vmatprep.subr.bf16.mxu0 0
    %3380 = vmatpush1.bf16.msra.mxu0 0
    %3381 = vmatprep.subr.bf16.mxu0 0
    %3382 = vmatpush1.bf16.msra.mxu0 0
    %3383 = vmatprep.subr.bf16.mxu0 0
    %3384 = vmatpush1.bf16.msra.mxu0 0
    %3385 = vmatprep.subr.bf16.mxu0 0
    %3386 = vmatpush1.bf16.msra.mxu0 0
    %3387 = vmatprep.subr.bf16.mxu0 0
    %3388 = vmatpush1.bf16.msra.mxu0 0
    %3389 = vmatprep.mubr.bf16.mxu0 0
    %3390 = vmatmul.mubr.bf16.gmra.mrb[0].mxu0 %v2293
    %v3391 = vpop.f32.mrb[0].mxu0
    %v3392 = vadd.f32 %v3343, %v3391
    %v3393 = vpop.f32.mrb[0].mxu0
    %v3394 = vpop.f32.mrb[0].mxu0
    %v3395 = vadd.f32 %v3343, %v3394
    %v3396 = vpop.f32.mrb[0].mxu0
    %3397 = vdwg.mxu0
    %v3398 = vpack.c.bf16 %v3264, %v3264
    %v3399 = vpack.c.bf16 %v3265, %v3265
    %v3400 = vpack.c.bf16 %v3326, %v3326
    %v3401 = vpack.c.bf16 %v3329, %v3329
    %v3402 = vpack.c.bf16 %v3392, %v3392
    %v3403 = vpack.c.bf16 %v3395, %v3395
    %v3405 = vsel %vm339, %v3398, 0
    %v3408 = vsel %vm339, %v3400, 0
    %3410 = vmatprep.subr.bf16.mxu0 0
    %3411 = vmatpush1.bf16.xpose.msra.mxu0 %v3408
    %3412 = vmatprep.subr.bf16.mxu0 0
    %3413 = vmatpush1.bf16.xpose.msra.mxu0 0
    %3414 = vmatprep.subr.bf16.mxu0 0
    %3415 = vmatpush1.bf16.xpose.msra.mxu0 0
    %3416 = vmatprep.subr.bf16.mxu0 0
    %3417 = vmatpush1.bf16.xpose.msra.mxu0 0
    %3418 = vmatprep.subr.bf16.mxu0 0
    %3419 = vmatpush1.bf16.xpose.msra.mxu0 0
    %3420 = vmatprep.subr.bf16.mxu0 0
    %3421 = vmatpush1.bf16.xpose.msra.mxu0 0
    %3422 = vmatprep.subr.bf16.mxu0 0
    %3423 = vmatpush1.bf16.xpose.msra.mxu0 0
    %3424 = vmatprep.subr.bf16.mxu0 0
    %3425 = vmatpush1.bf16.xpose.msra.mxu0 0
    %3426 = vmatprep.subr.bf16.mxu0 0
    %3427 = vmatpush1.bf16.xpose.msra.mxu0 0
    %3428 = vmatprep.subr.bf16.mxu0 0
    %3429 = vmatpush1.bf16.xpose.msra.mxu0 0
    %3430 = vmatprep.subr.bf16.mxu0 0
    %3431 = vmatpush1.bf16.xpose.msra.mxu0 0
    %3432 = vmatprep.subr.bf16.mxu0 0
    %3433 = vmatpush1.bf16.xpose.msra.mxu0 0
    %3434 = vmatprep.subr.bf16.mxu0 0
    %3435 = vmatpush1.bf16.xpose.msra.mxu0 0
    %3436 = vmatprep.subr.bf16.mxu0 0
    %3437 = vmatpush1.bf16.xpose.msra.mxu0 0
    %3438 = vmatprep.subr.bf16.mxu0 0
    %3439 = vmatpush1.bf16.xpose.msra.mxu0 0
    %3440 = vmatprep.subr.bf16.mxu0 0
    %3441 = vmatpush1.bf16.xpose.msra.mxu0 0
    %3442 = vmatprep.mubr.bf16.mxu0 0
    %3443 = vmatmul.mubr.bf16.gmra.mrb[0].mxu0 %v3405
    %v3444 = vpop.f32.mrb[0].mxu0
    %v3445 = vadd.f32 %v332, %v3444
    %v3446 = vpop.f32.mrb[0].mxu0
    %v3447 = vpop.f32.mrb[0].mxu0
    %v3448 = vpop.f32.mrb[0].mxu0
    %3449 = vdwg.mxu0
    %v3451 = vsel %vm339, %v3399, 0
    %v3454 = vsel %vm339, %v3401, 0
    %3456 = vmatprep.subr.bf16.mxu0 0
    %3457 = vmatpush1.bf16.xpose.msra.mxu0 %v3454
    %3458 = vmatprep.subr.bf16.mxu0 0
    %3459 = vmatpush1.bf16.xpose.msra.mxu0 0
    %3460 = vmatprep.subr.bf16.mxu0 0
    %3461 = vmatpush1.bf16.xpose.msra.mxu0 0
    %3462 = vmatprep.subr.bf16.mxu0 0
    %3463 = vmatpush1.bf16.xpose.msra.mxu0 0
    %3464 = vmatprep.subr.bf16.mxu0 0
    %3465 = vmatpush1.bf16.xpose.msra.mxu0 0
    %3466 = vmatprep.subr.bf16.mxu0 0
    %3467 = vmatpush1.bf16.xpose.msra.mxu0 0
    %3468 = vmatprep.subr.bf16.mxu0 0
    %3469 = vmatpush1.bf16.xpose.msra.mxu0 0
    %3470 = vmatprep.subr.bf16.mxu0 0
    %3471 = vmatpush1.bf16.xpose.msra.mxu0 0
    %3472 = vmatprep.subr.bf16.mxu0 0
    %3473 = vmatpush1.bf16.xpose.msra.mxu0 0
    %3474 = vmatprep.subr.bf16.mxu0 0
    %3475 = vmatpush1.bf16.xpose.msra.mxu0 0
    %3476 = vmatprep.subr.bf16.mxu0 0
    %3477 = vmatpush1.bf16.xpose.msra.mxu0 0
    %3478 = vmatprep.subr.bf16.mxu0 0
    %3479 = vmatpush1.bf16.xpose.msra.mxu0 0
    %3480 = vmatprep.subr.bf16.mxu0 0
    %3481 = vmatpush1.bf16.xpose.msra.mxu0 0
    %3482 = vmatprep.subr.bf16.mxu0 0
    %3483 = vmatpush1.bf16.xpose.msra.mxu0 0
    %3484 = vmatprep.subr.bf16.mxu0 0
    %3485 = vmatpush1.bf16.xpose.msra.mxu0 0
    %3486 = vmatprep.subr.bf16.mxu0 0
    %3487 = vmatpush1.bf16.xpose.msra.mxu0 0
    %3488 = vmatprep.mubr.bf16.mxu0 0
    %3489 = vmatmul.mubr.bf16.gmra.mrb[0].mxu0 %v3451
    %v3490 = vpop.f32.mrb[0].mxu0
    %v3491 = vadd.f32 %v336, %v3490
    %v3492 = vpop.f32.mrb[0].mxu0
    %v3493 = vpop.f32.mrb[0].mxu0
    %v3494 = vpop.f32.mrb[0].mxu0
    %3495 = vdwg.mxu0
    %v3496 = vsel %vm339, %v3445, -inf
    %3497 = vmax.xlane.f32.xlu0 %v3496
    %v3498 = vpop.xlane.xlu0 %3497
    %v3499 = vsel %vm339, %v3491, -inf
    %3500 = vmax.xlane.f32.xlu0 %v3499
    %v3501 = vpop.xlane.xlu0 %3500
    %v3502 = vsub.f32 %v3445, %v3498
    %v3503 = vsub.f32 %v3491, %v3501
    %v3504 = vmul.f32 %v3502, 1.442695
    %v3505 = vpow.pop %v3504
    %v3506 = vmul.f32 %v3503, 1.442695
    %v3507 = vpow.pop %v3506
    %v3508 = vsel %vm339, %v3505, 0.0
    %3509 = vadd.xlane.f32.xlu0 %v3508
    %v3510 = vpop.xlane.xlu0 %3509
    %v3511 = vsel %vm339, %v3507, 0.0
    %3512 = vadd.xlane.f32.xlu0 %v3511
    %v3513 = vpop.xlane.xlu0 %3512
    %v3514 = vrcp.pop %v3510
    %v3515 = vrcp.pop %v3513
    %v3516 = vmul.f32 %v3505, %v3514
    %v3517 = vmul.f32 %v3507, %v3515
    %v3518 = vpack.c.bf16 %v3516, %v3516
    %v3519 = vpack.c.bf16 %v3517, %v3517
    %v3521 = vsel %vm339, %v3518, 0
    %v3524 = vsel %vm459, %v3402, 0
    %3526 = vmatprep.subr.bf16.mxu0 0
    %3527 = vmatpush1.bf16.msra.mxu0 %v3524
    %3528 = vmatprep.subr.bf16.mxu0 0
    %3529 = vmatpush1.bf16.msra.mxu0 0
    %3530 = vmatprep.subr.bf16.mxu0 0
    %3531 = vmatpush1.bf16.msra.mxu0 0
    %3532 = vmatprep.subr.bf16.mxu0 0
    %3533 = vmatpush1.bf16.msra.mxu0 0
    %3534 = vmatprep.subr.bf16.mxu0 0
    %3535 = vmatpush1.bf16.msra.mxu0 0
    %3536 = vmatprep.subr.bf16.mxu0 0
    %3537 = vmatpush1.bf16.msra.mxu0 0
    %3538 = vmatprep.subr.bf16.mxu0 0
    %3539 = vmatpush1.bf16.msra.mxu0 0
    %3540 = vmatprep.subr.bf16.mxu0 0
    %3541 = vmatpush1.bf16.msra.mxu0 0
    %3542 = vmatprep.subr.bf16.mxu0 0
    %3543 = vmatpush1.bf16.msra.mxu0 0
    %3544 = vmatprep.subr.bf16.mxu0 0
    %3545 = vmatpush1.bf16.msra.mxu0 0
    %3546 = vmatprep.subr.bf16.mxu0 0
    %3547 = vmatpush1.bf16.msra.mxu0 0
    %3548 = vmatprep.subr.bf16.mxu0 0
    %3549 = vmatpush1.bf16.msra.mxu0 0
    %3550 = vmatprep.subr.bf16.mxu0 0
    %3551 = vmatpush1.bf16.msra.mxu0 0
    %3552 = vmatprep.subr.bf16.mxu0 0
    %3553 = vmatpush1.bf16.msra.mxu0 0
    %3554 = vmatprep.subr.bf16.mxu0 0
    %3555 = vmatpush1.bf16.msra.mxu0 0
    %3556 = vmatprep.subr.bf16.mxu0 0
    %3557 = vmatpush1.bf16.msra.mxu0 0
    %3558 = vmatprep.mubr.bf16.mxu0 0
    %3559 = vmatmul.mubr.bf16.gmra.mrb[0].mxu0 %v3521
    %v3560 = vpop.f32.mrb[0].mxu0
    %v3561 = vadd.f32 0.0, %v3560
    %v3562 = vpop.f32.mrb[0].mxu0
    %v3563 = vpop.f32.mrb[0].mxu0
    %v3564 = vpop.f32.mrb[0].mxu0
    %3565 = vdwg.mxu0
    %v3567 = vsel %vm339, %v3519, 0
    %v3570 = vsel %vm459, %v3403, 0
    %3572 = vmatprep.subr.bf16.mxu0 0
    %3573 = vmatpush1.bf16.msra.mxu0 %v3570
    %3574 = vmatprep.subr.bf16.mxu0 0
    %3575 = vmatpush1.bf16.msra.mxu0 0
    %3576 = vmatprep.subr.bf16.mxu0 0
    %3577 = vmatpush1.bf16.msra.mxu0 0
    %3578 = vmatprep.subr.bf16.mxu0 0
    %3579 = vmatpush1.bf16.msra.mxu0 0
    %3580 = vmatprep.subr.bf16.mxu0 0
    %3581 = vmatpush1.bf16.msra.mxu0 0
    %3582 = vmatprep.subr.bf16.mxu0 0
    %3583 = vmatpush1.bf16.msra.mxu0 0
    %3584 = vmatprep.subr.bf16.mxu0 0
    %3585 = vmatpush1.bf16.msra.mxu0 0
    %3586 = vmatprep.subr.bf16.mxu0 0
    %3587 = vmatpush1.bf16.msra.mxu0 0
    %3588 = vmatprep.subr.bf16.mxu0 0
    %3589 = vmatpush1.bf16.msra.mxu0 0
    %3590 = vmatprep.subr.bf16.mxu0 0
    %3591 = vmatpush1.bf16.msra.mxu0 0
    %3592 = vmatprep.subr.bf16.mxu0 0
    %3593 = vmatpush1.bf16.msra.mxu0 0
    %3594 = vmatprep.subr.bf16.mxu0 0
    %3595 = vmatpush1.bf16.msra.mxu0 0
    %3596 = vmatprep.subr.bf16.mxu0 0
    %3597 = vmatpush1.bf16.msra.mxu0 0
    %3598 = vmatprep.subr.bf16.mxu0 0
    %3599 = vmatpush1.bf16.msra.mxu0 0
    %3600 = vmatprep.subr.bf16.mxu0 0
    %3601 = vmatpush1.bf16.msra.mxu0 0
    %3602 = vmatprep.subr.bf16.mxu0 0
    %3603 = vmatpush1.bf16.msra.mxu0 0
    %3604 = vmatprep.mubr.bf16.mxu0 0
    %3605 = vmatmul.mubr.bf16.gmra.mrb[0].mxu0 %v3567
    %v3606 = vpop.f32.mrb[0].mxu0
    %v3607 = vadd.f32 0.0, %v3606
    %v3608 = vpop.f32.mrb[0].mxu0
    %v3609 = vpop.f32.mrb[0].mxu0
    %v3610 = vpop.f32.mrb[0].mxu0
    %3611 = vdwg.mxu0
    %v3612 = vpack.c.bf16 %v3607, %v3561
    %s3613 = scalar_lea.vmem %s10, 24
    %v3614 = vld [vmem:[%s3613] sm:$0xf]
    %v3616 = vsel %vm339, %v3612, 0
    %v3619 = vsel %vm459, %v3614, 0
    %3621 = vmatprep.subr.bf16.mxu0 0
    %3622 = vmatpush1.bf16.msra.mxu0 %v3619
    %3623 = vmatprep.subr.bf16.mxu0 0
    %3624 = vmatpush1.bf16.msra.mxu0 0
    %3625 = vmatprep.subr.bf16.mxu0 0
    %3626 = vmatpush1.bf16.msra.mxu0 0
    %3627 = vmatprep.subr.bf16.mxu0 0
    %3628 = vmatpush1.bf16.msra.mxu0 0
    %3629 = vmatprep.subr.bf16.mxu0 0
    %3630 = vmatpush1.bf16.msra.mxu0 0
    %3631 = vmatprep.subr.bf16.mxu0 0
    %3632 = vmatpush1.bf16.msra.mxu0 0
    %3633 = vmatprep.subr.bf16.mxu0 0
    %3634 = vmatpush1.bf16.msra.mxu0 0
    %3635 = vmatprep.subr.bf16.mxu0 0
    %3636 = vmatpush1.bf16.msra.mxu0 0
    %3637 = vmatprep.subr.bf16.mxu0 0
    %3638 = vmatpush1.bf16.msra.mxu0 0
    %3639 = vmatprep.subr.bf16.mxu0 0
    %3640 = vmatpush1.bf16.msra.mxu0 0
    %3641 = vmatprep.subr.bf16.mxu0 0
    %3642 = vmatpush1.bf16.msra.mxu0 0
    %3643 = vmatprep.subr.bf16.mxu0 0
    %3644 = vmatpush1.bf16.msra.mxu0 0
    %3645 = vmatprep.subr.bf16.mxu0 0
    %3646 = vmatpush1.bf16.msra.mxu0 0
    %3647 = vmatprep.subr.bf16.mxu0 0
    %3648 = vmatpush1.bf16.msra.mxu0 0
    %3649 = vmatprep.subr.bf16.mxu0 0
    %3650 = vmatpush1.bf16.msra.mxu0 0
    %3651 = vmatprep.subr.bf16.mxu0 0
    %3652 = vmatpush1.bf16.msra.mxu0 0
    %3653 = vmatprep.mubr.bf16.mxu0 0
    %3654 = vmatmul.mubr.bf16.gmra.mrb[0].mxu0 %v3616
    %v3655 = vpop.f32.mrb[0].mxu0
    %v3656 = vadd.f32 0.0, %v3655
    %v3657 = vpop.f32.mrb[0].mxu0
    %v3658 = vpop.f32.mrb[0].mxu0
    %v3659 = vadd.f32 0.0, %v3658
    %v3660 = vpop.f32.mrb[0].mxu0
    %3661 = vdwg.mxu0
    %v3662 = vadd.f32 %v3192, %v3656
    %v3663 = vadd.f32 %v3195, %v3659
    %s3664 = scalar_lea.vmem %s4, 112
    %v3665 = vld [vmem:[%s3664] sm:$0xf]
    %v3666 = vld [vmem:[%s3664 + $0x4] sm:$0xf]
    %v3667 = vld [vmem:[%s3664 + $0x8] sm:$0xf]
    %v3668 = vld [vmem:[%s3664 + $0xc] sm:$0xf]
    %s3669 = scalar_lea.vmem %s5, 7
    %v3670 = vld [vmem:[%s3669] sm:$0x1]
    %v3672 = vlaneseq
    %v3673 = vshrl.u32 %v3672, 7
    %v3674 = vsub.s32 0, %v3673
    %v3675 = vrot.slane %v3670, %v3674
    %v3681 = vunpack.c.l.b16 %v3665
    %v3682 = vunpack.c.l.b16 %v3666
    %v3683 = vunpack.c.l.b16 %v3667
    %v3684 = vunpack.c.l.b16 %v3668
    %v3685 = vpack.c.b16 %v3682, %v3681
    %v3686 = vpack.c.b16 %v3684, %v3683
    %3689 = vmatprep.subr.bf16.mxu0 0
    %3690 = vmatpush1.bf16.msra.mxu0 %v3685
    %3691 = vmatprep.subr.bf16.mxu0 0
    %3692 = vmatpush1.bf16.msra.mxu0 %v3686
    %3693 = vmatprep.subr.bf16.mxu0 0
    %3694 = vmatpush1.bf16.msra.mxu0 0
    %3695 = vmatprep.subr.bf16.mxu0 0
    %3696 = vmatpush1.bf16.msra.mxu0 0
    %3697 = vmatprep.subr.bf16.mxu0 0
    %3698 = vmatpush1.bf16.msra.mxu0 0
    %3699 = vmatprep.subr.bf16.mxu0 0
    %3700 = vmatpush1.bf16.msra.mxu0 0
    %3701 = vmatprep.subr.bf16.mxu0 0
    %3702 = vmatpush1.bf16.msra.mxu0 0
    %3703 = vmatprep.subr.bf16.mxu0 0
    %3704 = vmatpush1.bf16.msra.mxu0 0
    %3705 = vmatprep.subr.bf16.mxu0 0
    %3706 = vmatpush1.bf16.msra.mxu0 0
    %3707 = vmatprep.subr.bf16.mxu0 0
    %3708 = vmatpush1.bf16.msra.mxu0 0
    %3709 = vmatprep.subr.bf16.mxu0 0
    %3710 = vmatpush1.bf16.msra.mxu0 0
    %3711 = vmatprep.subr.bf16.mxu0 0
    %3712 = vmatpush1.bf16.msra.mxu0 0
    %3713 = vmatprep.subr.bf16.mxu0 0
    %3714 = vmatpush1.bf16.msra.mxu0 0
    %3715 = vmatprep.subr.bf16.mxu0 0
    %3716 = vmatpush1.bf16.msra.mxu0 0
    %3717 = vmatprep.subr.bf16.mxu0 0
    %3718 = vmatpush1.bf16.msra.mxu0 0
    %3719 = vmatprep.subr.bf16.mxu0 0
    %3720 = vmatpush1.bf16.msra.mxu0 0
    %3721 = vmatprep.mubr.bf16.mxu0 0
    %3722 = vmatmul.mubr.bf16.gmra.mrb[0].mxu0 %v2293
    %v3723 = vpop.f32.mrb[0].mxu0
    %v3724 = vadd.f32 %v3675, %v3723
    %v3725 = vpop.f32.mrb[0].mxu0
    %v3726 = vpop.f32.mrb[0].mxu0
    %v3727 = vadd.f32 %v3675, %v3726
    %v3728 = vpop.f32.mrb[0].mxu0
    %3729 = vdwg.mxu0
    %v3730 = vmul.f32 %v3724, 0.35355338
    %v3731 = vmul.f32 %v3727, 0.35355338
    %s3732 = scalar_lea.vmem %s6, 112
    %v3733 = vld [vmem:[%s3732] sm:$0xf]
    %v3734 = vld [vmem:[%s3732 + $0x4] sm:$0xf]
    %v3735 = vld [vmem:[%s3732 + $0x8] sm:$0xf]
    %v3736 = vld [vmem:[%s3732 + $0xc] sm:$0xf]
    %s3737 = scalar_lea.vmem %s7, 7
    %v3738 = vld [vmem:[%s3737] sm:$0x1]
    %v3740 = vlaneseq
    %v3741 = vshrl.u32 %v3740, 7
    %v3742 = vsub.s32 0, %v3741
    %v3743 = vrot.slane %v3738, %v3742
    %v3749 = vunpack.c.l.b16 %v3733
    %v3750 = vunpack.c.l.b16 %v3734
    %v3751 = vunpack.c.l.b16 %v3735
    %v3752 = vunpack.c.l.b16 %v3736
    %v3753 = vpack.c.b16 %v3750, %v3749
    %v3754 = vpack.c.b16 %v3752, %v3751
    %3757 = vmatprep.subr.bf16.mxu0 0
    %3758 = vmatpush1.bf16.msra.mxu0 %v3753
    %3759 = vmatprep.subr.bf16.mxu0 0
    %3760 = vmatpush1.bf16.msra.mxu0 %v3754
    %3761 = vmatprep.subr.bf16.mxu0 0
    %3762 = vmatpush1.bf16.msra.mxu0 0
    %3763 = vmatprep.subr.bf16.mxu0 0
    %3764 = vmatpush1.bf16.msra.mxu0 0
    %3765 = vmatprep.subr.bf16.mxu0 0
    %3766 = vmatpush1.bf16.msra.mxu0 0
    %3767 = vmatprep.subr.bf16.mxu0 0
    %3768 = vmatpush1.bf16.msra.mxu0 0
    %3769 = vmatprep.subr.bf16.mxu0 0
    %3770 = vmatpush1.bf16.msra.mxu0 0
    %3771 = vmatprep.subr.bf16.mxu0 0
    %3772 = vmatpush1.bf16.msra.mxu0 0
    %3773 = vmatprep.subr.bf16.mxu0 0
    %3774 = vmatpush1.bf16.msra.mxu0 0
    %3775 = vmatprep.subr.bf16.mxu0 0
    %3776 = vmatpush1.bf16.msra.mxu0 0
    %3777 = vmatprep.subr.bf16.mxu0 0
    %3778 = vmatpush1.bf16.msra.mxu0 0
    %3779 = vmatprep.subr.bf16.mxu0 0
    %3780 = vmatpush1.bf16.msra.mxu0 0
    %3781 = vmatprep.subr.bf16.mxu0 0
    %3782 = vmatpush1.bf16.msra.mxu0 0
    %3783 = vmatprep.subr.bf16.mxu0 0
    %3784 = vmatpush1.bf16.msra.mxu0 0
    %3785 = vmatprep.subr.bf16.mxu0 0
    %3786 = vmatpush1.bf16.msra.mxu0 0
    %3787 = vmatprep.subr.bf16.mxu0 0
    %3788 = vmatpush1.bf16.msra.mxu0 0
    %3789 = vmatprep.mubr.bf16.mxu0 0
    %3790 = vmatmul.mubr.bf16.gmra.mrb[0].mxu0 %v2293
    %v3791 = vpop.f32.mrb[0].mxu0
    %v3792 = vadd.f32 %v3743, %v3791
    %v3793 = vpop.f32.mrb[0].mxu0
    %v3794 = vpop.f32.mrb[0].mxu0
    %v3795 = vadd.f32 %v3743, %v3794
    %v3796 = vpop.f32.mrb[0].mxu0
    %3797 = vdwg.mxu0
    %s3798 = scalar_lea.vmem %s8, 112
    %v3799 = vld [vmem:[%s3798] sm:$0xf]
    %v3800 = vld [vmem:[%s3798 + $0x4] sm:$0xf]
    %v3801 = vld [vmem:[%s3798 + $0x8] sm:$0xf]
    %v3802 = vld [vmem:[%s3798 + $0xc] sm:$0xf]
    %s3803 = scalar_lea.vmem %s9, 7
    %v3804 = vld [vmem:[%s3803] sm:$0x1]
    %v3806 = vlaneseq
    %v3807 = vshrl.u32 %v3806, 7
    %v3808 = vsub.s32 0, %v3807
    %v3809 = vrot.slane %v3804, %v3808
    %v3815 = vunpack.c.l.b16 %v3799
    %v3816 = vunpack.c.l.b16 %v3800
    %v3817 = vunpack.c.l.b16 %v3801
    %v3818 = vunpack.c.l.b16 %v3802
    %v3819 = vpack.c.b16 %v3816, %v3815
    %v3820 = vpack.c.b16 %v3818, %v3817
    %3823 = vmatprep.subr.bf16.mxu0 0
    %3824 = vmatpush1.bf16.msra.mxu0 %v3819
    %3825 = vmatprep.subr.bf16.mxu0 0
    %3826 = vmatpush1.bf16.msra.mxu0 %v3820
    %3827 = vmatprep.subr.bf16.mxu0 0
    %3828 = vmatpush1.bf16.msra.mxu0 0
    %3829 = vmatprep.subr.bf16.mxu0 0
    %3830 = vmatpush1.bf16.msra.mxu0 0
    %3831 = vmatprep.subr.bf16.mxu0 0
    %3832 = vmatpush1.bf16.msra.mxu0 0
    %3833 = vmatprep.subr.bf16.mxu0 0
    %3834 = vmatpush1.bf16.msra.mxu0 0
    %3835 = vmatprep.subr.bf16.mxu0 0
    %3836 = vmatpush1.bf16.msra.mxu0 0
    %3837 = vmatprep.subr.bf16.mxu0 0
    %3838 = vmatpush1.bf16.msra.mxu0 0
    %3839 = vmatprep.subr.bf16.mxu0 0
    %3840 = vmatpush1.bf16.msra.mxu0 0
    %3841 = vmatprep.subr.bf16.mxu0 0
    %3842 = vmatpush1.bf16.msra.mxu0 0
    %3843 = vmatprep.subr.bf16.mxu0 0
    %3844 = vmatpush1.bf16.msra.mxu0 0
    %3845 = vmatprep.subr.bf16.mxu0 0
    %3846 = vmatpush1.bf16.msra.mxu0 0
    %3847 = vmatprep.subr.bf16.mxu0 0
    %3848 = vmatpush1.bf16.msra.mxu0 0
    %3849 = vmatprep.subr.bf16.mxu0 0
    %3850 = vmatpush1.bf16.msra.mxu0 0
    %3851 = vmatprep.subr.bf16.mxu0 0
    %3852 = vmatpush1.bf16.msra.mxu0 0
    %3853 = vmatprep.subr.bf16.mxu0 0
    %3854 = vmatpush1.bf16.msra.mxu0 0
    %3855 = vmatprep.mubr.bf16.mxu0 0
    %3856 = vmatmul.mubr.bf16.gmra.mrb[0].mxu0 %v2293
    %v3857 = vpop.f32.mrb[0].mxu0
    %v3858 = vadd.f32 %v3809, %v3857
    %v3859 = vpop.f32.mrb[0].mxu0
    %v3860 = vpop.f32.mrb[0].mxu0
    %v3861 = vadd.f32 %v3809, %v3860
    %v3862 = vpop.f32.mrb[0].mxu0
    %3863 = vdwg.mxu0
    %v3864 = vpack.c.bf16 %v3730, %v3730
    %v3865 = vpack.c.bf16 %v3731, %v3731
    %v3866 = vpack.c.bf16 %v3792, %v3792
    %v3867 = vpack.c.bf16 %v3795, %v3795
    %v3868 = vpack.c.bf16 %v3858, %v3858
    %v3869 = vpack.c.bf16 %v3861, %v3861
    %v3871 = vsel %vm339, %v3864, 0
    %v3874 = vsel %vm339, %v3866, 0
    %3876 = vmatprep.subr.bf16.mxu0 0
    %3877 = vmatpush1.bf16.xpose.msra.mxu0 %v3874
    %3878 = vmatprep.subr.bf16.mxu0 0
    %3879 = vmatpush1.bf16.xpose.msra.mxu0 0
    %3880 = vmatprep.subr.bf16.mxu0 0
    %3881 = vmatpush1.bf16.xpose.msra.mxu0 0
    %3882 = vmatprep.subr.bf16.mxu0 0
    %3883 = vmatpush1.bf16.xpose.msra.mxu0 0
    %3884 = vmatprep.subr.bf16.mxu0 0
    %3885 = vmatpush1.bf16.xpose.msra.mxu0 0
    %3886 = vmatprep.subr.bf16.mxu0 0
    %3887 = vmatpush1.bf16.xpose.msra.mxu0 0
    %3888 = vmatprep.subr.bf16.mxu0 0
    %3889 = vmatpush1.bf16.xpose.msra.mxu0 0
    %3890 = vmatprep.subr.bf16.mxu0 0
    %3891 = vmatpush1.bf16.xpose.msra.mxu0 0
    %3892 = vmatprep.subr.bf16.mxu0 0
    %3893 = vmatpush1.bf16.xpose.msra.mxu0 0
    %3894 = vmatprep.subr.bf16.mxu0 0
    %3895 = vmatpush1.bf16.xpose.msra.mxu0 0
    %3896 = vmatprep.subr.bf16.mxu0 0
    %3897 = vmatpush1.bf16.xpose.msra.mxu0 0
    %3898 = vmatprep.subr.bf16.mxu0 0
    %3899 = vmatpush1.bf16.xpose.msra.mxu0 0
    %3900 = vmatprep.subr.bf16.mxu0 0
    %3901 = vmatpush1.bf16.xpose.msra.mxu0 0
    %3902 = vmatprep.subr.bf16.mxu0 0
    %3903 = vmatpush1.bf16.xpose.msra.mxu0 0
    %3904 = vmatprep.subr.bf16.mxu0 0
    %3905 = vmatpush1.bf16.xpose.msra.mxu0 0
    %3906 = vmatprep.subr.bf16.mxu0 0
    %3907 = vmatpush1.bf16.xpose.msra.mxu0 0
    %3908 = vmatprep.mubr.bf16.mxu0 0
    %3909 = vmatmul.mubr.bf16.gmra.mrb[0].mxu0 %v3871
    %v3910 = vpop.f32.mrb[0].mxu0
    %v3911 = vadd.f32 %v332, %v3910
    %v3912 = vpop.f32.mrb[0].mxu0
    %v3913 = vpop.f32.mrb[0].mxu0
    %v3914 = vpop.f32.mrb[0].mxu0
    %3915 = vdwg.mxu0
    %v3917 = vsel %vm339, %v3865, 0
    %v3920 = vsel %vm339, %v3867, 0
    %3922 = vmatprep.subr.bf16.mxu0 0
    %3923 = vmatpush1.bf16.xpose.msra.mxu0 %v3920
    %3924 = vmatprep.subr.bf16.mxu0 0
    %3925 = vmatpush1.bf16.xpose.msra.mxu0 0
    %3926 = vmatprep.subr.bf16.mxu0 0
    %3927 = vmatpush1.bf16.xpose.msra.mxu0 0
    %3928 = vmatprep.subr.bf16.mxu0 0
    %3929 = vmatpush1.bf16.xpose.msra.mxu0 0
    %3930 = vmatprep.subr.bf16.mxu0 0
    %3931 = vmatpush1.bf16.xpose.msra.mxu0 0
    %3932 = vmatprep.subr.bf16.mxu0 0
    %3933 = vmatpush1.bf16.xpose.msra.mxu0 0
    %3934 = vmatprep.subr.bf16.mxu0 0
    %3935 = vmatpush1.bf16.xpose.msra.mxu0 0
    %3936 = vmatprep.subr.bf16.mxu0 0
    %3937 = vmatpush1.bf16.xpose.msra.mxu0 0
    %3938 = vmatprep.subr.bf16.mxu0 0
    %3939 = vmatpush1.bf16.xpose.msra.mxu0 0
    %3940 = vmatprep.subr.bf16.mxu0 0
    %3941 = vmatpush1.bf16.xpose.msra.mxu0 0
    %3942 = vmatprep.subr.bf16.mxu0 0
    %3943 = vmatpush1.bf16.xpose.msra.mxu0 0
    %3944 = vmatprep.subr.bf16.mxu0 0
    %3945 = vmatpush1.bf16.xpose.msra.mxu0 0
    %3946 = vmatprep.subr.bf16.mxu0 0
    %3947 = vmatpush1.bf16.xpose.msra.mxu0 0
    %3948 = vmatprep.subr.bf16.mxu0 0
    %3949 = vmatpush1.bf16.xpose.msra.mxu0 0
    %3950 = vmatprep.subr.bf16.mxu0 0
    %3951 = vmatpush1.bf16.xpose.msra.mxu0 0
    %3952 = vmatprep.subr.bf16.mxu0 0
    %3953 = vmatpush1.bf16.xpose.msra.mxu0 0
    %3954 = vmatprep.mubr.bf16.mxu0 0
    %3955 = vmatmul.mubr.bf16.gmra.mrb[0].mxu0 %v3917
    %v3956 = vpop.f32.mrb[0].mxu0
    %v3957 = vadd.f32 %v336, %v3956
    %v3958 = vpop.f32.mrb[0].mxu0
    %v3959 = vpop.f32.mrb[0].mxu0
    %v3960 = vpop.f32.mrb[0].mxu0
    %3961 = vdwg.mxu0
    %v3962 = vsel %vm339, %v3911, -inf
    %3963 = vmax.xlane.f32.xlu0 %v3962
    %v3964 = vpop.xlane.xlu0 %3963
    %v3965 = vsel %vm339, %v3957, -inf
    %3966 = vmax.xlane.f32.xlu0 %v3965
    %v3967 = vpop.xlane.xlu0 %3966
    %v3968 = vsub.f32 %v3911, %v3964
    %v3969 = vsub.f32 %v3957, %v3967
    %v3970 = vmul.f32 %v3968, 1.442695
    %v3971 = vpow.pop %v3970
    %v3972 = vmul.f32 %v3969, 1.442695
    %v3973 = vpow.pop %v3972
    %v3974 = vsel %vm339, %v3971, 0.0
    %3975 = vadd.xlane.f32.xlu0 %v3974
    %v3976 = vpop.xlane.xlu0 %3975
    %v3977 = vsel %vm339, %v3973, 0.0
    %3978 = vadd.xlane.f32.xlu0 %v3977
    %v3979 = vpop.xlane.xlu0 %3978
    %v3980 = vrcp.pop %v3976
    %v3981 = vrcp.pop %v3979
    %v3982 = vmul.f32 %v3971, %v3980
    %v3983 = vmul.f32 %v3973, %v3981
    %v3984 = vpack.c.bf16 %v3982, %v3982
    %v3985 = vpack.c.bf16 %v3983, %v3983
    %v3987 = vsel %vm339, %v3984, 0
    %v3990 = vsel %vm459, %v3868, 0
    %3992 = vmatprep.subr.bf16.mxu0 0
    %3993 = vmatpush1.bf16.msra.mxu0 %v3990
    %3994 = vmatprep.subr.bf16.mxu0 0
    %3995 = vmatpush1.bf16.msra.mxu0 0
    %3996 = vmatprep.subr.bf16.mxu0 0
    %3997 = vmatpush1.bf16.msra.mxu0 0
    %3998 = vmatprep.subr.bf16.mxu0 0
    %3999 = vmatpush1.bf16.msra.mxu0 0
    %4000 = vmatprep.subr.bf16.mxu0 0
    %4001 = vmatpush1.bf16.msra.mxu0 0
    %4002 = vmatprep.subr.bf16.mxu0 0
    %4003 = vmatpush1.bf16.msra.mxu0 0
    %4004 = vmatprep.subr.bf16.mxu0 0
    %4005 = vmatpush1.bf16.msra.mxu0 0
    %4006 = vmatprep.subr.bf16.mxu0 0
    %4007 = vmatpush1.bf16.msra.mxu0 0
    %4008 = vmatprep.subr.bf16.mxu0 0
    %4009 = vmatpush1.bf16.msra.mxu0 0
    %4010 = vmatprep.subr.bf16.mxu0 0
    %4011 = vmatpush1.bf16.msra.mxu0 0
    %4012 = vmatprep.subr.bf16.mxu0 0
    %4013 = vmatpush1.bf16.msra.mxu0 0
    %4014 = vmatprep.subr.bf16.mxu0 0
    %4015 = vmatpush1.bf16.msra.mxu0 0
    %4016 = vmatprep.subr.bf16.mxu0 0
    %4017 = vmatpush1.bf16.msra.mxu0 0
    %4018 = vmatprep.subr.bf16.mxu0 0
    %4019 = vmatpush1.bf16.msra.mxu0 0
    %4020 = vmatprep.subr.bf16.mxu0 0
    %4021 = vmatpush1.bf16.msra.mxu0 0
    %4022 = vmatprep.subr.bf16.mxu0 0
    %4023 = vmatpush1.bf16.msra.mxu0 0
    %4024 = vmatprep.mubr.bf16.mxu0 0
    %4025 = vmatmul.mubr.bf16.gmra.mrb[0].mxu0 %v3987
    %v4026 = vpop.f32.mrb[0].mxu0
    %v4027 = vadd.f32 0.0, %v4026
    %v4028 = vpop.f32.mrb[0].mxu0
    %v4029 = vpop.f32.mrb[0].mxu0
    %v4030 = vpop.f32.mrb[0].mxu0
    %4031 = vdwg.mxu0
    %v4033 = vsel %vm339, %v3985, 0
    %v4036 = vsel %vm459, %v3869, 0
    %4038 = vmatprep.subr.bf16.mxu0 0
    %4039 = vmatpush1.bf16.msra.mxu0 %v4036
    %4040 = vmatprep.subr.bf16.mxu0 0
    %4041 = vmatpush1.bf16.msra.mxu0 0
    %4042 = vmatprep.subr.bf16.mxu0 0
    %4043 = vmatpush1.bf16.msra.mxu0 0
    %4044 = vmatprep.subr.bf16.mxu0 0
    %4045 = vmatpush1.bf16.msra.mxu0 0
    %4046 = vmatprep.subr.bf16.mxu0 0
    %4047 = vmatpush1.bf16.msra.mxu0 0
    %4048 = vmatprep.subr.bf16.mxu0 0
    %4049 = vmatpush1.bf16.msra.mxu0 0
    %4050 = vmatprep.subr.bf16.mxu0 0
    %4051 = vmatpush1.bf16.msra.mxu0 0
    %4052 = vmatprep.subr.bf16.mxu0 0
    %4053 = vmatpush1.bf16.msra.mxu0 0
    %4054 = vmatprep.subr.bf16.mxu0 0
    %4055 = vmatpush1.bf16.msra.mxu0 0
    %4056 = vmatprep.subr.bf16.mxu0 0
    %4057 = vmatpush1.bf16.msra.mxu0 0
    %4058 = vmatprep.subr.bf16.mxu0 0
    %4059 = vmatpush1.bf16.msra.mxu0 0
    %4060 = vmatprep.subr.bf16.mxu0 0
    %4061 = vmatpush1.bf16.msra.mxu0 0
    %4062 = vmatprep.subr.bf16.mxu0 0
    %4063 = vmatpush1.bf16.msra.mxu0 0
    %4064 = vmatprep.subr.bf16.mxu0 0
    %4065 = vmatpush1.bf16.msra.mxu0 0
    %4066 = vmatprep.subr.bf16.mxu0 0
    %4067 = vmatpush1.bf16.msra.mxu0 0
    %4068 = vmatprep.subr.bf16.mxu0 0
    %4069 = vmatpush1.bf16.msra.mxu0 0
    %4070 = vmatprep.mubr.bf16.mxu0 0
    %4071 = vmatmul.mubr.bf16.gmra.mrb[0].mxu0 %v4033
    %v4072 = vpop.f32.mrb[0].mxu0
    %v4073 = vadd.f32 0.0, %v4072
    %v4074 = vpop.f32.mrb[0].mxu0
    %v4075 = vpop.f32.mrb[0].mxu0
    %v4076 = vpop.f32.mrb[0].mxu0
    %4077 = vdwg.mxu0
    %v4078 = vpack.c.bf16 %v4073, %v4027
    %s4079 = scalar_lea.vmem %s10, 28
    %v4080 = vld [vmem:[%s4079] sm:$0xf]
    %v4082 = vsel %vm339, %v4078, 0
    %v4085 = vsel %vm459, %v4080, 0
    %4087 = vmatprep.subr.bf16.mxu0 0
    %4088 = vmatpush1.bf16.msra.mxu0 %v4085
    %4089 = vmatprep.subr.bf16.mxu0 0
    %4090 = vmatpush1.bf16.msra.mxu0 0
    %4091 = vmatprep.subr.bf16.mxu0 0
    %4092 = vmatpush1.bf16.msra.mxu0 0
    %4093 = vmatprep.subr.bf16.mxu0 0
    %4094 = vmatpush1.bf16.msra.mxu0 0
    %4095 = vmatprep.subr.bf16.mxu0 0
    %4096 = vmatpush1.bf16.msra.mxu0 0
    %4097 = vmatprep.subr.bf16.mxu0 0
    %4098 = vmatpush1.bf16.msra.mxu0 0
    %4099 = vmatprep.subr.bf16.mxu0 0
    %4100 = vmatpush1.bf16.msra.mxu0 0
    %4101 = vmatprep.subr.bf16.mxu0 0
    %4102 = vmatpush1.bf16.msra.mxu0 0
    %4103 = vmatprep.subr.bf16.mxu0 0
    %4104 = vmatpush1.bf16.msra.mxu0 0
    %4105 = vmatprep.subr.bf16.mxu0 0
    %4106 = vmatpush1.bf16.msra.mxu0 0
    %4107 = vmatprep.subr.bf16.mxu0 0
    %4108 = vmatpush1.bf16.msra.mxu0 0
    %4109 = vmatprep.subr.bf16.mxu0 0
    %4110 = vmatpush1.bf16.msra.mxu0 0
    %4111 = vmatprep.subr.bf16.mxu0 0
    %4112 = vmatpush1.bf16.msra.mxu0 0
    %4113 = vmatprep.subr.bf16.mxu0 0
    %4114 = vmatpush1.bf16.msra.mxu0 0
    %4115 = vmatprep.subr.bf16.mxu0 0
    %4116 = vmatpush1.bf16.msra.mxu0 0
    %4117 = vmatprep.subr.bf16.mxu0 0
    %4118 = vmatpush1.bf16.msra.mxu0 0
    %4119 = vmatprep.mubr.bf16.mxu0 0
    %4120 = vmatmul.mubr.bf16.gmra.mrb[0].mxu0 %v4082
    %v4121 = vpop.f32.mrb[0].mxu0
    %v4122 = vadd.f32 0.0, %v4121
    %v4123 = vpop.f32.mrb[0].mxu0
    %v4124 = vpop.f32.mrb[0].mxu0
    %v4125 = vadd.f32 0.0, %v4124
    %v4126 = vpop.f32.mrb[0].mxu0
    %4127 = vdwg.mxu0
    %v4128 = vadd.f32 %v3662, %v4122
    %v4129 = vadd.f32 %v3663, %v4125
    %s4130 = scalar_lea.vmem %s11, 1
    %v4131 = vld [vmem:[%s4130] sm:$0x1]
    %v4133 = vlaneseq
    %v4134 = vshrl.u32 %v4133, 7
    %v4135 = vsub.s32 0, %v4134
    %v4136 = vrot.slane %v4131, %v4135
    %v4138 = vadd.f32 %v4128, %v4136
    %v4139 = vadd.f32 %v4129, %v4136
    %v4140 = vadd.f32 %v2264, %v4138
    %v4141 = vadd.f32 %v2265, %v4139
    %s4142 = scalar_lea.vmem %s12, 1
    %v4143 = vld [vmem:[%s4142] sm:$0x1]
    %s4144 = scalar_lea.vmem %s13, 1
    %v4145 = vld [vmem:[%s4144] sm:$0x1]
    %v4146 = vsel %vm77, %v4140, 0.0
    %4147 = vadd.xlane.f32.xlu0 %v4146
    %v4148 = vpop.xlane.xlu0 %4147
    %v4149 = vsel %vm77, %v4141, 0.0
    %4150 = vadd.xlane.f32.xlu0 %v4149
    %v4151 = vpop.xlane.xlu0 %4150
    %v4152 = vmul.f32 %v4148, %v84
    %v4153 = vmul.f32 %v4151, %v84
    %v4154 = vsub.f32 %v4140, %v4152
    %v4155 = vsub.f32 %v4141, %v4153
    %v4156 = vmul.f32 %v4154, %v4154
    %v4157 = vmul.f32 %v4155, %v4155
    %v4158 = vsel %vm77, %v4156, 0.0
    %4159 = vadd.xlane.f32.xlu0 %v4158
    %v4160 = vpop.xlane.xlu0 %4159
    %v4161 = vsel %vm77, %v4157, 0.0
    %4162 = vadd.xlane.f32.xlu0 %v4161
    %v4163 = vpop.xlane.xlu0 %4162
    %v4164 = vmul.f32 %v4160, %v84
    %v4165 = vmul.f32 %v4163, %v84
    %v4166 = vadd.f32 %v4164, 1e-12
    %v4167 = vadd.f32 %v4165, 1e-12
    %v4168 = vrsqrt.pop %v4166
    %v4169 = vrsqrt.pop %v4167
    %v4170 = vmul.f32 %v4154, %v4168
    %v4171 = vmul.f32 %v4155, %v4169
    %v4173 = vlaneseq
    %v4174 = vshrl.u32 %v4173, 7
    %v4175 = vsub.s32 0, %v4174
    %v4176 = vrot.slane %v4143, %v4175
    %v4178 = vmul.f32 %v4170, %v4176
    %v4179 = vmul.f32 %v4171, %v4176
    %v4181 = vlaneseq
    %v4182 = vshrl.u32 %v4181, 7
    %v4183 = vsub.s32 0, %v4182
    %v4184 = vrot.slane %v4145, %v4183
    %v4186 = vadd.f32 %v4178, %v4184
    %v4187 = vadd.f32 %v4179, %v4184
    %v4188 = vpack.c.bf16 %v4187, %v4186
    %s4189 = scalar_lea.vmem %s14, 16
    %v4190 = vld [vmem:[%s4189] sm:$0xf]
    %v4191 = vld [vmem:[%s4189 + $0x4] sm:$0xf]
    %v4192 = vld [vmem:[%s4189 + $0x8] sm:$0xf]
    %v4193 = vld [vmem:[%s4189 + $0xc] sm:$0xf]
    %s4194 = scalar_lea.vmem %s15, 1
    %v4195 = vld [vmem:[%s4194] sm:$0x1]
    %v4197 = vlaneseq
    %v4198 = vshrl.u32 %v4197, 7
    %v4199 = vsub.s32 0, %v4198
    %v4200 = vrot.slane %v4195, %v4199
    %v4206 = vunpack.c.l.b16 %v4190
    %v4207 = vunpack.c.l.b16 %v4191
    %v4208 = vunpack.c.l.b16 %v4192
    %v4209 = vunpack.c.l.b16 %v4193
    %v4210 = vpack.c.b16 %v4207, %v4206
    %v4211 = vpack.c.b16 %v4209, %v4208
    %v4215 = vsel %vm77, %v4188, 0
    %4217 = vmatprep.subr.bf16.mxu0 0
    %4218 = vmatpush1.bf16.msra.mxu0 %v4210
    %4219 = vmatprep.subr.bf16.mxu0 0
    %4220 = vmatpush1.bf16.msra.mxu0 %v4211
    %4221 = vmatprep.subr.bf16.mxu0 0
    %4222 = vmatpush1.bf16.msra.mxu0 0
    %4223 = vmatprep.subr.bf16.mxu0 0
    %4224 = vmatpush1.bf16.msra.mxu0 0
    %4225 = vmatprep.subr.bf16.mxu0 0
    %4226 = vmatpush1.bf16.msra.mxu0 0
    %4227 = vmatprep.subr.bf16.mxu0 0
    %4228 = vmatpush1.bf16.msra.mxu0 0
    %4229 = vmatprep.subr.bf16.mxu0 0
    %4230 = vmatpush1.bf16.msra.mxu0 0
    %4231 = vmatprep.subr.bf16.mxu0 0
    %4232 = vmatpush1.bf16.msra.mxu0 0
    %4233 = vmatprep.subr.bf16.mxu0 0
    %4234 = vmatpush1.bf16.msra.mxu0 0
    %4235 = vmatprep.subr.bf16.mxu0 0
    %4236 = vmatpush1.bf16.msra.mxu0 0
    %4237 = vmatprep.subr.bf16.mxu0 0
    %4238 = vmatpush1.bf16.msra.mxu0 0
    %4239 = vmatprep.subr.bf16.mxu0 0
    %4240 = vmatpush1.bf16.msra.mxu0 0
    %4241 = vmatprep.subr.bf16.mxu0 0
    %4242 = vmatpush1.bf16.msra.mxu0 0
    %4243 = vmatprep.subr.bf16.mxu0 0
    %4244 = vmatpush1.bf16.msra.mxu0 0
    %4245 = vmatprep.subr.bf16.mxu0 0
    %4246 = vmatpush1.bf16.msra.mxu0 0
    %4247 = vmatprep.subr.bf16.mxu0 0
    %4248 = vmatpush1.bf16.msra.mxu0 0
    %4249 = vmatprep.mubr.bf16.mxu0 0
    %4250 = vmatmul.mubr.bf16.gmra.mrb[0].mxu0 %v4215
    %v4251 = vpop.f32.mrb[0].mxu0
    %v4252 = vadd.f32 %v4200, %v4251
    %v4253 = vpop.f32.mrb[0].mxu0
    %v4254 = vpop.f32.mrb[0].mxu0
    %v4255 = vadd.f32 %v4200, %v4254
    %v4256 = vpop.f32.mrb[0].mxu0
    %4257 = vdwg.mxu0
    %v4258 = vmul.f32 %v4252, 0.5
    %v4259 = vmul.f32 %v4255, 0.5
    %v4260 = vmul.f32 %v4252, 0.044715
    %v4261 = vmul.f32 %v4255, 0.044715
    %v4262 = vmul.f32 %v4260, %v4252
    %v4263 = vmul.f32 %v4261, %v4255
    %v4264 = vmul.f32 %v4262, %v4252
    %v4265 = vmul.f32 %v4263, %v4255
    %v4266 = vadd.f32 %v4252, %v4264
    %v4267 = vadd.f32 %v4255, %v4265
    %v4268 = vmul.f32 %v4266, 0.7978846
    %v4269 = vmul.f32 %v4267, 0.7978846
    %v4270 = vtanh.pop %v4268
    %v4271 = vtanh.pop %v4269
    %v4272 = vadd.f32 %v4270, 1.0
    %v4273 = vadd.f32 %v4271, 1.0
    %v4274 = vmul.f32 %v4258, %v4272
    %v4275 = vmul.f32 %v4259, %v4273
    %v4276 = vpack.c.bf16 %v4275, %v4274
    %s4277 = scalar_lea.vmem %s16, 32
    %v4278 = vld [vmem:[%s4277] sm:$0xf]
    %v4279 = vld [vmem:[%s4277 + $0x4] sm:$0xf]
    %v4280 = vld [vmem:[%s4277 + $0x8] sm:$0xf]
    %v4281 = vld [vmem:[%s4277 + $0xc] sm:$0xf]
    %v4282 = vld [vmem:[%s4277 + $0x10] sm:$0xf]
    %v4283 = vld [vmem:[%s4277 + $0x14] sm:$0xf]
    %v4284 = vld [vmem:[%s4277 + $0x18] sm:$0xf]
    %v4285 = vld [vmem:[%s4277 + $0x1c] sm:$0xf]
    %s4286 = scalar_lea.vmem %s17, 1
    %v4287 = vld [vmem:[%s4286] sm:$0x1]
    %v4289 = vlaneseq
    %v4290 = vshrl.u32 %v4289, 7
    %v4291 = vsub.s32 0, %v4290
    %v4292 = vrot.slane %v4287, %v4291
    %v4302 = vunpack.c.l.b16 %v4278
    %v4303 = vunpack.c.l.b16 %v4279
    %v4304 = vunpack.c.l.b16 %v4280
    %v4305 = vunpack.c.l.b16 %v4281
    %v4306 = vunpack.c.l.b16 %v4282
    %v4307 = vunpack.c.l.b16 %v4283
    %v4308 = vunpack.c.l.b16 %v4284
    %v4309 = vunpack.c.l.b16 %v4285
    %v4310 = vpack.c.b16 %v4303, %v4302
    %v4311 = vpack.c.b16 %v4305, %v4304
    %v4312 = vpack.c.b16 %v4307, %v4306
    %v4313 = vpack.c.b16 %v4309, %v4308
    %v4319 = vsel %vm2175, %v4276, 0
    %4321 = vmatprep.subr.bf16.mxu0 0
    %4322 = vmatpush1.bf16.msra.mxu0 %v4310
    %4323 = vmatprep.subr.bf16.mxu0 0
    %4324 = vmatpush1.bf16.msra.mxu0 %v4311
    %4325 = vmatprep.subr.bf16.mxu0 0
    %4326 = vmatpush1.bf16.msra.mxu0 %v4312
    %4327 = vmatprep.subr.bf16.mxu0 0
    %4328 = vmatpush1.bf16.msra.mxu0 %v4313
    %4329 = vmatprep.subr.bf16.mxu0 0
    %4330 = vmatpush1.bf16.msra.mxu0 0
    %4331 = vmatprep.subr.bf16.mxu0 0
    %4332 = vmatpush1.bf16.msra.mxu0 0
    %4333 = vmatprep.subr.bf16.mxu0 0
    %4334 = vmatpush1.bf16.msra.mxu0 0
    %4335 = vmatprep.subr.bf16.mxu0 0
    %4336 = vmatpush1.bf16.msra.mxu0 0
    %4337 = vmatprep.subr.bf16.mxu0 0
    %4338 = vmatpush1.bf16.msra.mxu0 0
    %4339 = vmatprep.subr.bf16.mxu0 0
    %4340 = vmatpush1.bf16.msra.mxu0 0
    %4341 = vmatprep.subr.bf16.mxu0 0
    %4342 = vmatpush1.bf16.msra.mxu0 0
    %4343 = vmatprep.subr.bf16.mxu0 0
    %4344 = vmatpush1.bf16.msra.mxu0 0
    %4345 = vmatprep.subr.bf16.mxu0 0
    %4346 = vmatpush1.bf16.msra.mxu0 0
    %4347 = vmatprep.subr.bf16.mxu0 0
    %4348 = vmatpush1.bf16.msra.mxu0 0
    %4349 = vmatprep.subr.bf16.mxu0 0
    %4350 = vmatpush1.bf16.msra.mxu0 0
    %4351 = vmatprep.subr.bf16.mxu0 0
    %4352 = vmatpush1.bf16.msra.mxu0 0
    %4353 = vmatprep.mubr.bf16.mxu0 0
    %4354 = vmatmul.mubr.bf16.gmra.mrb[0].mxu0 %v4319
    %v4355 = vpop.f32.mrb[0].mxu0
    %v4356 = vadd.f32 %v4292, %v4355
    %v4357 = vpop.f32.mrb[0].mxu0
    %v4358 = vpop.f32.mrb[0].mxu0
    %v4359 = vadd.f32 %v4292, %v4358
    %v4360 = vpop.f32.mrb[0].mxu0
    %4361 = vdwg.mxu0
    %v4362 = vadd.f32 %v4186, %v4356
    %v4363 = vadd.f32 %v4187, %v4359
    %s4364 = scalar_lea.vmem %s18, 1
    %v4365 = vld [vmem:[%s4364] sm:$0x1]
    %s4366 = scalar_lea.vmem %s19, 1
    %v4367 = vld [vmem:[%s4366] sm:$0x1]
    %v4368 = vsel %vm77, %v4362, 0.0
    %4369 = vadd.xlane.f32.xlu0 %v4368
    %v4370 = vpop.xlane.xlu0 %4369
    %v4371 = vsel %vm77, %v4363, 0.0
    %4372 = vadd.xlane.f32.xlu0 %v4371
    %v4373 = vpop.xlane.xlu0 %4372
    %v4374 = vmul.f32 %v4370, %v84
    %v4375 = vmul.f32 %v4373, %v84
    %v4376 = vsub.f32 %v4362, %v4374
    %v4377 = vsub.f32 %v4363, %v4375
    %v4378 = vmul.f32 %v4376, %v4376
    %v4379 = vmul.f32 %v4377, %v4377
    %v4380 = vsel %vm77, %v4378, 0.0
    %4381 = vadd.xlane.f32.xlu0 %v4380
    %v4382 = vpop.xlane.xlu0 %4381
    %v4383 = vsel %vm77, %v4379, 0.0
    %4384 = vadd.xlane.f32.xlu0 %v4383
    %v4385 = vpop.xlane.xlu0 %4384
    %v4386 = vmul.f32 %v4382, %v84
    %v4387 = vmul.f32 %v4385, %v84
    %v4388 = vadd.f32 %v4386, 1e-12
    %v4389 = vadd.f32 %v4387, 1e-12
    %v4390 = vrsqrt.pop %v4388
    %v4391 = vrsqrt.pop %v4389
    %v4392 = vmul.f32 %v4376, %v4390
    %v4393 = vmul.f32 %v4377, %v4391
    %v4395 = vlaneseq
    %v4396 = vshrl.u32 %v4395, 7
    %v4397 = vsub.s32 0, %v4396
    %v4398 = vrot.slane %v4365, %v4397
    %v4400 = vmul.f32 %v4392, %v4398
    %v4401 = vmul.f32 %v4393, %v4398
    %v4403 = vlaneseq
    %v4404 = vshrl.u32 %v4403, 7
    %v4405 = vsub.s32 0, %v4404
    %v4406 = vrot.slane %v4367, %v4405
    %v4408 = vadd.f32 %v4400, %v4406
    %v4409 = vadd.f32 %v4401, %v4406
    %v4410 = vpack.c.bf16 %v4408, %v4408
    %v4411 = vpack.c.bf16 %v4409, %v4409
    %v4412 = vld [vmem:[%s20] sm:$0xf]
    %v4413 = vld [vmem:[%s20 + $0x4] sm:$0xf]
    %v4414 = vld [vmem:[%s20 + $0x8] sm:$0xf]
    %v4415 = vld [vmem:[%s20 + $0xc] sm:$0xf]
    %v4416 = vld [vmem:[%s21] sm:$0x1]
    %v4418 = vlaneseq
    %v4419 = vshrl.u32 %v4418, 7
    %v4420 = vsub.s32 0, %v4419
    %v4421 = vrot.slane %v4416, %v4420
    %v4425 = vunpack.c.l.b16 %v4410
    %v4426 = vunpack.c.l.b16 %v4411
    %v4427 = vrot.slane %v4426, 7
    %vm4428 = vcmask 1041409
    %v4429 = vsel %vm4428, %v4427, %v4425
    %v4430 = vpack.c.b16 %v4429, %v4429
    %v4435 = vunpack.c.l.b16 %v4412
    %v4436 = vunpack.c.l.b16 %v4413
    %v4437 = vunpack.c.l.b16 %v4414
    %v4438 = vunpack.c.l.b16 %v4415
    %v4439 = vpack.c.b16 %v4436, %v4435
    %v4440 = vpack.c.b16 %v4438, %v4437
    %v4444 = vsel %vm77, %v4430, 0
    %4446 = vmatprep.subr.bf16.mxu0 0
    %4447 = vmatpush1.bf16.msra.mxu0 %v4439
    %4448 = vmatprep.subr.bf16.mxu0 0
    %4449 = vmatpush1.bf16.msra.mxu0 %v4440
    %4450 = vmatprep.subr.bf16.mxu0 0
    %4451 = vmatpush1.bf16.msra.mxu0 0
    %4452 = vmatprep.subr.bf16.mxu0 0
    %4453 = vmatpush1.bf16.msra.mxu0 0
    %4454 = vmatprep.subr.bf16.mxu0 0
    %4455 = vmatpush1.bf16.msra.mxu0 0
    %4456 = vmatprep.subr.bf16.mxu0 0
    %4457 = vmatpush1.bf16.msra.mxu0 0
    %4458 = vmatprep.subr.bf16.mxu0 0
    %4459 = vmatpush1.bf16.msra.mxu0 0
    %4460 = vmatprep.subr.bf16.mxu0 0
    %4461 = vmatpush1.bf16.msra.mxu0 0
    %4462 = vmatprep.subr.bf16.mxu0 0
    %4463 = vmatpush1.bf16.msra.mxu0 0
    %4464 = vmatprep.subr.bf16.mxu0 0
    %4465 = vmatpush1.bf16.msra.mxu0 0
    %4466 = vmatprep.subr.bf16.mxu0 0
    %4467 = vmatpush1.bf16.msra.mxu0 0
    %4468 = vmatprep.subr.bf16.mxu0 0
    %4469 = vmatpush1.bf16.msra.mxu0 0
    %4470 = vmatprep.subr.bf16.mxu0 0
    %4471 = vmatpush1.bf16.msra.mxu0 0
    %4472 = vmatprep.subr.bf16.mxu0 0
    %4473 = vmatpush1.bf16.msra.mxu0 0
    %4474 = vmatprep.subr.bf16.mxu0 0
    %4475 = vmatpush1.bf16.msra.mxu0 0
    %4476 = vmatprep.subr.bf16.mxu0 0
    %4477 = vmatpush1.bf16.msra.mxu0 0
    %4478 = vmatprep.mubr.bf16.mxu0 0
    %4479 = vmatmul.mubr.bf16.gmra.mrb[0].mxu0 %v4444
    %v4480 = vpop.f32.mrb[0].mxu0
    %v4481 = vadd.f32 %v4421, %v4480
    %v4482 = vpop.f32.mrb[0].mxu0
    %v4483 = vpop.f32.mrb[0].mxu0
    %v4484 = vpop.f32.mrb[0].mxu0
    %4485 = vdwg.mxu0
    %v4486 = vtanh.pop %v4481
    %vm4487 = vcmask 254976
    %4488 = vst.msk [vmem:[#allocation2] sm:$0x3] %vm4487, %v4486
    // Predicated region
    $region90: #{tpu_custom_call.1} parent=1 // pred_check
      _
    $region91: #{tpu_custom_call.1} parent=1 // pred_check_branch
      %4490 = sbr.rel (0) target = $region93
    $region92: #{tpu_custom_call.1} parent=1 // pred_region
      %s4492 = ssub.s32 32, 32
      %4493 = vsyncadd [#allocation3], %s4492
      %s4495 = sshll.u32 [#allocation2], 4
      %s4496 = int_to_ptr.vmem [resolvable:$true] %s4495
      %4498 = dma.vmem_to_hbm [thread:$0]  %s4496, 32, %s22, [#allocation3]
    $region93: #{tpu_custom_call.1} parent=1 // pred_fallthru
      _
    // Predicated region
    $region94: #{tpu_custom_call.1} parent=1 // pred_check
      _
    $region95: #{tpu_custom_call.1} parent=1 // pred_check_branch
      %4500 = sbr.rel (0) target = $region97
    $region96: #{tpu_custom_call.1} parent=1 // pred_region
      %4501 = dma.done [#allocation3], 32
    $region97: #{tpu_custom_call.1} parent=1 // pred_fallthru
      _
    %4502 = vsyncpa [#allocation3], 1

</llo_original>
